<compile_context>
chip_gen: v7x
topology: tpu7x:2x2x1
jax: 0.10.0
libtpu: 0.0.40
codegen_flags: <defaults>
</compile_context>

<pallas_src>
import math

import jax
import jax.numpy as jnp
from jax.experimental import pallas as pl
from jax.experimental.pallas import tpu as pltpu

_PREC = jax.lax.Precision.HIGHEST
_VMEM_LIMIT = 32 * 1024 * 1024  # >= v5e default (16 MiB), == v6e/v7x default (32 MiB)


def _silu(x):
    return x * jax.nn.sigmoid(x)


def _pixel_tile(P):
    """Pick a pixel-row tile: multiple of 8 (sublanes), divides P, keeps >1 grid step."""
    t = 256
    while t >= 8:
        if P % t == 0:
            return t
        t //= 2
    return P


# ---------------------------------------------------------------------------
# Kernel 1: stem — fused conv1(1x1)+BN+SiLU and conv2(1x1)+BN+SiLU from one read of x.
# ---------------------------------------------------------------------------
def _stem_kernel(x_ref, w1_ref, s1_ref, b1_ref, w2_ref, s2_ref, b2_ref,
                 o1_ref, o2_ref):
    x = x_ref[...]                                               # (TM, C_in)
    y1 = jnp.dot(x, w1_ref[...], preferred_element_type=jnp.float32, precision=_PREC)
    y1 = y1 * s1_ref[...] + b1_ref[...]
    o1_ref[...] = _silu(y1).astype(o1_ref.dtype)
    y2 = jnp.dot(x, w2_ref[...], preferred_element_type=jnp.float32, precision=_PREC)
    y2 = y2 * s2_ref[...] + b2_ref[...]
    o2_ref[...] = _silu(y2).astype(o2_ref.dtype)


def _stem_call(xf, w1, s1, b1, w2, s2, b2):
    P, c_in = xf.shape
    h = w1.shape[1]
    TM = _pixel_tile(P)
    vec = lambda i: (0, 0)
    return pl.pallas_call(
        _stem_kernel,
        out_shape=(jax.ShapeDtypeStruct((P, h), xf.dtype),
                   jax.ShapeDtypeStruct((P, h), xf.dtype)),
        grid_spec=pltpu.PrefetchScalarGridSpec(
            num_scalar_prefetch=0,
            grid=(P // TM,),
            in_specs=[
                pl.BlockSpec((TM, c_in), lambda i: (i, 0)),
                pl.BlockSpec((c_in, h), vec),
                pl.BlockSpec((1, h), vec),
                pl.BlockSpec((1, h), vec),
                pl.BlockSpec((c_in, h), vec),
                pl.BlockSpec((1, h), vec),
                pl.BlockSpec((1, h), vec),
            ],
            out_specs=(pl.BlockSpec((TM, h), lambda i: (i, 0)),
                       pl.BlockSpec((TM, h), lambda i: (i, 0))),
        ),
        compiler_params=pltpu.CompilerParams(
            dimension_semantics=("parallel",),
            vmem_limit_bytes=_VMEM_LIMIT),
    )(xf, w1, s1, b1, w2, s2, b2)


# ---------------------------------------------------------------------------
# Kernel 2: fused Bottleneck (1x1 conv+BN+SiLU -> 3x3 conv+BN+SiLU -> +residual).
# One grid step per batch element; hidden map stays resident in VMEM.
# ---------------------------------------------------------------------------
def _bottleneck_kernel_factory(H, W, Ch):
    HW = H * W

    def kernel(x_ref, w1_ref, s1_ref, b1_ref, w9_ref, s2_ref, b2_ref,
               o_ref, pad_ref):
        x = x_ref[...]                                           # (HW, Ch) native dtype
        # 1x1 conv + BN + SiLU
        t = jnp.dot(x, w1_ref[...], preferred_element_type=jnp.float32, precision=_PREC)
        t = _silu(t * s1_ref[...] + b1_ref[...])                 # (HW, Ch) f32
        # zero-padded halo buffer in VMEM scratch
        pad_ref[...] = jnp.zeros_like(pad_ref)
        pad_ref[1:H + 1, 1:W + 1, :] = t.reshape(H, W, Ch)
        # 3x3 conv as 9 shifted matmuls on the MXU
        acc = jnp.zeros((HW, Ch), jnp.float32)
        for dy in range(3):
            for dx in range(3):
                patch = pad_ref[dy:dy + H, dx:dx + W, :].reshape(HW, Ch)
                acc = acc + jnp.dot(patch, w9_ref[dy * 3 + dx],
                                    preferred_element_type=jnp.float32,
                                    precision=_PREC)
        y = _silu(acc * s2_ref[...] + b2_ref[...])
        # residual add (shortcut=True, in_channels == out_channels)
        o_ref[...] = (y + x.astype(jnp.float32)).astype(o_ref.dtype)

    return kernel


def _bottleneck_call(x1f, w1, s1, b1, w9, s2, b2, N, H, W, Ch):
    HW = H * W
    kernel = _bottleneck_kernel_factory(H, W, Ch)
    vec = lambda n: (0, 0)
    return pl.pallas_call(
        kernel,
        out_shape=jax.ShapeDtypeStruct((N * HW, Ch), x1f.dtype),
        grid_spec=pltpu.PrefetchScalarGridSpec(
            num_scalar_prefetch=0,
            grid=(N,),
            in_specs=[
                pl.BlockSpec((HW, Ch), lambda n: (n, 0)),
                pl.BlockSpec((Ch, Ch), vec),
                pl.BlockSpec((1, Ch), vec),
                pl.BlockSpec((1, Ch), vec),
                pl.BlockSpec((9, Ch, Ch), lambda n: (0, 0, 0)),
                pl.BlockSpec((1, Ch), vec),
                pl.BlockSpec((1, Ch), vec),
            ],
            out_specs=pl.BlockSpec((HW, Ch), lambda n: (n, 0)),
            scratch_shapes=[pltpu.VMEM((H + 2, W + 2, Ch), jnp.float32)],
        ),
        compiler_params=pltpu.CompilerParams(
            dimension_semantics=("parallel",),
            vmem_limit_bytes=_VMEM_LIMIT),
    )(x1f, w1, s1, b1, w9, s2, b2)


# ---------------------------------------------------------------------------
# Kernel 3: head — conv3(1x1)+BN+SiLU on cat(x1, x2) without materializing the concat.
# ---------------------------------------------------------------------------
def _head_kernel(a_ref, b_ref, wa_ref, wb_ref, s_ref, bias_ref, o_ref):
    y = jnp.dot(a_ref[...], wa_ref[...], preferred_element_type=jnp.float32, precision=_PREC)
    y = y + jnp.dot(b_ref[...], wb_ref[...], preferred_element_type=jnp.float32, precision=_PREC)
    y = y * s_ref[...] + bias_ref[...]
    o_ref[...] = _silu(y).astype(o_ref.dtype)


def _head_call(x1f, x2f, w3a, w3b, s3, b3, c_out):
    P, h = x1f.shape
    TM = _pixel_tile(P)
    vec = lambda i: (0, 0)
    return pl.pallas_call(
        _head_kernel,
        out_shape=jax.ShapeDtypeStruct((P, c_out), x1f.dtype),
        grid_spec=pltpu.PrefetchScalarGridSpec(
            num_scalar_prefetch=0,
            grid=(P // TM,),
            in_specs=[
                pl.BlockSpec((TM, h), lambda i: (i, 0)),
                pl.BlockSpec((TM, h), lambda i: (i, 0)),
                pl.BlockSpec((h, c_out), vec),
                pl.BlockSpec((h, c_out), vec),
                pl.BlockSpec((1, c_out), vec),
                pl.BlockSpec((1, c_out), vec),
            ],
            out_specs=pl.BlockSpec((TM, c_out), lambda i: (i, 0)),
        ),
        compiler_params=pltpu.CompilerParams(
            dimension_semantics=("parallel",),
            vmem_limit_bytes=_VMEM_LIMIT),
    )(x1f, x2f, w3a, w3b, s3, b3)


# ---------------------------------------------------------------------------
# Parameter folding helpers (done once, outside the kernels).
# ---------------------------------------------------------------------------
def _fold_bn(p, eps=1e-5):
    scale = p['gamma'] * jax.lax.rsqrt(p['var'] + eps)
    bias = p['beta'] - p['mean'] * scale
    return scale.reshape(1, -1), bias.reshape(1, -1)


def _mm_weight_1x1(p):
    return p['w'][:, :, 0, 0].T                                  # (C_in, C_out)


def _mm_weight_3x3(p):
    w = p['w']                                                   # (C_out, C_in, 3, 3)
    taps = [w[:, :, dy, dx].T for dy in range(3) for dx in range(3)]
    return jnp.stack(taps, axis=0)                               # (9, C_in, C_out)


# ---------------------------------------------------------------------------
# CSPLayer forward (NCHW in / NCHW out, like the PyTorch module).
# ---------------------------------------------------------------------------
def csp_layer_forward(x_nchw, params):
    N, c_in, H, W = x_nchw.shape
    assert (H * W) % 8 == 0, "H*W must be a multiple of 8 for per-batch tiling"
    h = params['conv1']['w'].shape[0]
    c_out = params['conv3']['w'].shape[0]

    # NCHW -> channels-last, flattened pixels (lane axis = channels).
    xf = jnp.transpose(x_nchw, (0, 2, 3, 1)).reshape(N * H * W, c_in)

    w1 = _mm_weight_1x1(params['conv1']); s1, b1 = _fold_bn(params['conv1'])
    w2 = _mm_weight_1x1(params['conv2']); s2, b2 = _fold_bn(params['conv2'])
    x1f, x2f = _stem_call(xf, w1, s1, b1, w2, s2, b2)

    for bp in params['m']:
        wb1 = _mm_weight_1x1(bp['conv1']); sb1, bb1 = _fold_bn(bp['conv1'])
        w9 = _mm_weight_3x3(bp['conv2']);  sb2, bb2 = _fold_bn(bp['conv2'])
        x1f = _bottleneck_call(x1f, wb1, sb1, bb1, w9, sb2, bb2, N, H, W, h)

    w3 = _mm_weight_1x1(params['conv3'])                         # (2h, C_out)
    s3, b3 = _fold_bn(params['conv3'])
    outf = _head_call(x1f, x2f, w3[:h, :], w3[h:, :], s3, b3, c_out)

    return jnp.transpose(outf.reshape(N, H, W, c_out), (0, 3, 1, 2))


# ---------------------------------------------------------------------------
# Pure-JAX reference (XLA convs, explicit eval-mode BatchNorm, SiLU).
# ---------------------------------------------------------------------------
def _base_conv_ref(x, p, eps=1e-5):
    k = p['w'].shape[2]
    pad = (k - 1) // 2
    y = jax.lax.conv_general_dilated(
        x, p['w'], window_strides=(1, 1),
        padding=((pad, pad), (pad, pad)),
        dimension_numbers=('NCHW', 'OIHW', 'NCHW'),
        precision=_PREC)
    inv = jax.lax.rsqrt(p['var'] + eps)
    y = ((y - p['mean'][None, :, None, None]) * inv[None, :, None, None]
         * p['gamma'][None, :, None, None] + p['beta'][None, :, None, None])
    return y * jax.nn.sigmoid(y)


def csp_layer_ref(x, params):
    x1 = _base_conv_ref(x, params['conv1'])
    x2 = _base_conv_ref(x, params['conv2'])
    for bp in params['m']:
        y = _base_conv_ref(x1, bp['conv1'])
        y = _base_conv_ref(y, bp['conv2'])
        x1 = y + x1                                              # shortcut, in == out
    xc = jnp.concatenate([x1, x2], axis=1)
    return _base_conv_ref(xc, params['conv3'])


def make_baseconv_params(key, c_in, c_out, ksize):
    kw, kg, kb, km, kv = jax.random.split(key, 5)
    w = jax.random.normal(kw, (c_out, c_in, ksize, ksize), jnp.float32)
    w = w * (1.0 / math.sqrt(c_in * ksize * ksize))
    return dict(
        w=w,
        gamma=jax.random.uniform(kg, (c_out,), jnp.float32, 0.5, 1.5),
        beta=jax.random.normal(kb, (c_out,), jnp.float32) * 0.1,
        mean=jax.random.normal(km, (c_out,), jnp.float32) * 0.1,
        var=jax.random.uniform(kv, (c_out,), jnp.float32, 0.5, 1.5),
    )


if __name__ == "__main__":
    key = jax.random.PRNGKey(0)
    N, C_IN, H, W = 2, 16, 16, 16
    C_OUT, N_BOTTLENECK, EXPANSION = 16, 1, 0.5
    hidden = int(C_OUT * EXPANSION)                              # 8

    keys = jax.random.split(key, 6)
    x = jax.random.normal(keys[0], (N, C_IN, H, W), jnp.float32)

    params = {
        'conv1': make_baseconv_params(keys[1], C_IN, hidden, 1),
        'conv2': make_baseconv_params(keys[2], C_IN, hidden, 1),
        'conv3': make_baseconv_params(keys[3], 2 * hidden, C_OUT, 1),
        'm': [
            {'conv1': make_baseconv_params(keys[4], hidden, hidden, 1),
             'conv2': make_baseconv_params(keys[5], hidden, hidden, 3)},
        ],
    }

    out = csp_layer_forward(x, params)
    out = jax.block_until_ready(out)

    ref = csp_layer_ref(x, params)
    assert out.shape == ref.shape == (N, C_OUT, H, W)
    max_err = float(jnp.max(jnp.abs(out - ref)))
    assert jnp.allclose(out, ref, atol=2e-3, rtol=2e-3), f"max abs err = {max_err}"

    print("KERNEL_OK")
</pallas_src>

<mosaic_0001>
module attributes {stable_mosaic.version = 11 : i64} {
  func.func @_stem_kernel(%arg0: i32, %arg1: memref<256x16xf32, #tpu.memory_space<vmem>>, %arg2: memref<16x8xf32, #tpu.memory_space<vmem>>, %arg3: memref<1x8xf32, #tpu.memory_space<vmem>>, %arg4: memref<1x8xf32, #tpu.memory_space<vmem>>, %arg5: memref<16x8xf32, #tpu.memory_space<vmem>>, %arg6: memref<1x8xf32, #tpu.memory_space<vmem>>, %arg7: memref<1x8xf32, #tpu.memory_space<vmem>>, %arg8: memref<256x8xf32, #tpu.memory_space<vmem>>, %arg9: memref<256x8xf32, #tpu.memory_space<vmem>>) attributes {dimension_semantics = [#tpu.dimension_semantics<parallel>], iteration_bounds = array<i64: 2>, scalar_prefetch = 0 : i64, scratch_operands = 0 : i64, tpu.core_type = #tpu.core_type<tc>, window_params = [{transform_indices = @transform_0, window_bounds = array<i64: 256, 16>}, {pipeline_mode = #tpu.pipeline_mode<synchronous>, transform_indices = @transform_1, window_bounds = array<i64: 16, 8>}, {pipeline_mode = #tpu.pipeline_mode<synchronous>, transform_indices = @transform_2, window_bounds = array<i64: 1, 8>}, {pipeline_mode = #tpu.pipeline_mode<synchronous>, transform_indices = @transform_3, window_bounds = array<i64: 1, 8>}, {pipeline_mode = #tpu.pipeline_mode<synchronous>, transform_indices = @transform_4, window_bounds = array<i64: 16, 8>}, {pipeline_mode = #tpu.pipeline_mode<synchronous>, transform_indices = @transform_5, window_bounds = array<i64: 1, 8>}, {pipeline_mode = #tpu.pipeline_mode<synchronous>, transform_indices = @transform_6, window_bounds = array<i64: 1, 8>}, {transform_indices = @transform_7, window_bounds = array<i64: 256, 8>}, {transform_indices = @transform_8, window_bounds = array<i64: 256, 8>}]} {
    %c0 = arith.constant 0 : index
    %c0_0 = arith.constant 0 : index
    %0 = vector.load %arg1[%c0, %c0_0] : memref<256x16xf32, #tpu.memory_space<vmem>>, vector<256x16xf32>
    %c0_1 = arith.constant 0 : index
    %c0_2 = arith.constant 0 : index
    %1 = vector.load %arg2[%c0_1, %c0_2] : memref<16x8xf32, #tpu.memory_space<vmem>>, vector<16x8xf32>
    %cst = arith.constant dense<0.000000e+00> : vector<256x8xf32>
    %2 = tpu.matmul %0, %1, %cst {dimension_numbers = #tpu.dot_dimension_numbers<[1], [0], [0], [1], [0, 0, 1, 1], [], []>, precision = #tpu.contract_precision<fp32>} : vector<256x16xf32>, vector<16x8xf32>, vector<256x8xf32> -> vector<256x8xf32>
    %c0_3 = arith.constant 0 : index
    %c0_4 = arith.constant 0 : index
    %3 = vector.load %arg3[%c0_3, %c0_4] : memref<1x8xf32, #tpu.memory_space<vmem>>, vector<1x8xf32>
    %4 = vector.broadcast %3 : vector<1x8xf32> to vector<256x8xf32>
    %5 = arith.mulf %2, %4 : vector<256x8xf32>
    %c0_5 = arith.constant 0 : index
    %c0_6 = arith.constant 0 : index
    %6 = vector.load %arg4[%c0_5, %c0_6] : memref<1x8xf32, #tpu.memory_space<vmem>>, vector<1x8xf32>
    %7 = vector.broadcast %6 : vector<1x8xf32> to vector<256x8xf32>
    %8 = arith.addf %5, %7 : vector<256x8xf32>
    %9 = arith.negf %8 : vector<256x8xf32>
    %10 = math.exp %9 : vector<256x8xf32>
    %cst_7 = arith.constant 1.000000e+00 : f32
    %11 = vector.broadcast %cst_7 : f32 to vector<256x8xf32>
    %12 = arith.addf %11, %10 : vector<256x8xf32>
    %13 = arith.divf %11, %12 : vector<256x8xf32>
    %14 = arith.mulf %8, %13 : vector<256x8xf32>
    %c0_8 = arith.constant 0 : index
    %c0_9 = arith.constant 0 : index
    %15 = vector.load %arg8[%c0_8, %c0_9] : memref<256x8xf32, #tpu.memory_space<vmem>>, vector<256x8xf32>
    tpu.vector_store %arg8[%c0_8, %c0_9], %14 {strides = array<i32>} : memref<256x8xf32, #tpu.memory_space<vmem>>, vector<256x8xf32>,
    %c0_10 = arith.constant 0 : index
    %c0_11 = arith.constant 0 : index
    %16 = vector.load %arg5[%c0_10, %c0_11] : memref<16x8xf32, #tpu.memory_space<vmem>>, vector<16x8xf32>
    %cst_12 = arith.constant dense<0.000000e+00> : vector<256x8xf32>
    %17 = tpu.matmul %0, %16, %cst_12 {dimension_numbers = #tpu.dot_dimension_numbers<[1], [0], [0], [1], [0, 0, 1, 1], [], []>, precision = #tpu.contract_precision<fp32>} : vector<256x16xf32>, vector<16x8xf32>, vector<256x8xf32> -> vector<256x8xf32>
    %c0_13 = arith.constant 0 : index
    %c0_14 = arith.constant 0 : index
    %18 = vector.load %arg6[%c0_13, %c0_14] : memref<1x8xf32, #tpu.memory_space<vmem>>, vector<1x8xf32>
    %19 = vector.broadcast %18 : vector<1x8xf32> to vector<256x8xf32>
    %20 = arith.mulf %17, %19 : vector<256x8xf32>
    %c0_15 = arith.constant 0 : index
    %c0_16 = arith.constant 0 : index
    %21 = vector.load %arg7[%c0_15, %c0_16] : memref<1x8xf32, #tpu.memory_space<vmem>>, vector<1x8xf32>
    %22 = vector.broadcast %21 : vector<1x8xf32> to vector<256x8xf32>
    %23 = arith.addf %20, %22 : vector<256x8xf32>
    %24 = arith.negf %23 : vector<256x8xf32>
    %25 = math.exp %24 : vector<256x8xf32>
    %cst_17 = arith.constant 1.000000e+00 : f32
    %26 = vector.broadcast %cst_17 : f32 to vector<256x8xf32>
    %27 = arith.addf %26, %25 : vector<256x8xf32>
    %28 = arith.divf %26, %27 : vector<256x8xf32>
    %29 = arith.mulf %23, %28 : vector<256x8xf32>
    %c0_18 = arith.constant 0 : index
    %c0_19 = arith.constant 0 : index
    %30 = vector.load %arg9[%c0_18, %c0_19] : memref<256x8xf32, #tpu.memory_space<vmem>>, vector<256x8xf32>
    tpu.vector_store %arg9[%c0_18, %c0_19], %29 {strides = array<i32>} : memref<256x8xf32, #tpu.memory_space<vmem>>, vector<256x8xf32>,
    return
  }
  func.func @transform_0(%arg0: i32) -> (i32, i32) {
    %c0_i32 = arith.constant 0 : i32
    %c0_i32_0 = arith.constant 0 : i32
    return %arg0, %c0_i32 : i32, i32
  }
  func.func @transform_1(%arg0: i32) -> (i32, i32) {
    %c0_i32 = arith.constant 0 : i32
    %c0_i32_0 = arith.constant 0 : i32
    %c0_i32_1 = arith.constant 0 : i32
    return %c0_i32, %c0_i32_0 : i32, i32
  }
  func.func @transform_2(%arg0: i32) -> (i32, i32) {
    %c0_i32 = arith.constant 0 : i32
    %c0_i32_0 = arith.constant 0 : i32
    %c0_i32_1 = arith.constant 0 : i32
    return %c0_i32, %c0_i32_0 : i32, i32
  }
  func.func @transform_3(%arg0: i32) -> (i32, i32) {
    %c0_i32 = arith.constant 0 : i32
    %c0_i32_0 = arith.constant 0 : i32
    %c0_i32_1 = arith.constant 0 : i32
    return %c0_i32, %c0_i32_0 : i32, i32
  }
  func.func @transform_4(%arg0: i32) -> (i32, i32) {
    %c0_i32 = arith.constant 0 : i32
    %c0_i32_0 = arith.constant 0 : i32
    %c0_i32_1 = arith.constant 0 : i32
    return %c0_i32, %c0_i32_0 : i32, i32
  }
  func.func @transform_5(%arg0: i32) -> (i32, i32) {
    %c0_i32 = arith.constant 0 : i32
    %c0_i32_0 = arith.constant 0 : i32
    %c0_i32_1 = arith.constant 0 : i32
    return %c0_i32, %c0_i32_0 : i32, i32
  }
  func.func @transform_6(%arg0: i32) -> (i32, i32) {
    %c0_i32 = arith.constant 0 : i32
    %c0_i32_0 = arith.constant 0 : i32
    %c0_i32_1 = arith.constant 0 : i32
    return %c0_i32, %c0_i32_0 : i32, i32
  }
  func.func @transform_7(%arg0: i32) -> (i32, i32) {
    %c0_i32 = arith.constant 0 : i32
    %c0_i32_0 = arith.constant 0 : i32
    return %arg0, %c0_i32 : i32, i32
  }
  func.func @transform_8(%arg0: i32) -> (i32, i32) {
    %c0_i32 = arith.constant 0 : i32
    %c0_i32_0 = arith.constant 0 : i32
    return %arg0, %c0_i32 : i32, i32
  }
}

</mosaic_0001>

<llo_original>
// kernel: tpu_custom_call.1
$region0: #{tpu_custom_call.1}
  #allocation0 [shape = 'u32[]', space=smem, size = 0x4, offset = 0x4, fixed_abs, tag = 'smem constant byte address 0x4 - core index']
  #allocation1 [shape = 'u32[144,128]{1,0:T(1,128)}', space=vmem, size = 0x12000, scoped, tag = 'internal scratch']
  %s0 = inlined_call_operand.vmem [shape: f32[512,16], index: 0, kind: input, shape index: {}]
  %s1 = inlined_call_operand.vmem [shape: f32[16,8], index: 1, kind: input, shape index: {}]
  %s2 = inlined_call_operand.vmem [shape: f32[1,8], index: 2, kind: input, shape index: {}]
  %s3 = inlined_call_operand.vmem [shape: f32[1,8], index: 3, kind: input, shape index: {}]
  %s4 = inlined_call_operand.vmem [shape: f32[16,8], index: 4, kind: input, shape index: {}]
  %s5 = inlined_call_operand.vmem [shape: f32[1,8], index: 5, kind: input, shape index: {}]
  %s6 = inlined_call_operand.vmem [shape: f32[1,8], index: 6, kind: input, shape index: {}]
  %s7 = inlined_call_operand.vmem [shape: f32[512,8], index: 7, kind: output, shape index: {0}]
  %s8 = inlined_call_operand.vmem [shape: f32[512,8], index: 8, kind: output, shape index: {1}]
  %9 = xla_tuple %s7, %s8
  %s10 = sld [smem:[#allocation0]]
  $region69: #{tpu_custom_call.1} parent=0
    _
  %s12 = ssub.s32 1, %s10
  %s13 = scalar_select 0, %s12, %s10
  loop: start=0, step=1, limit=4
  $region2: #{tpu_custom_call.1} parent=0 // loop_pre_header
    _
  $region3: #{tpu_custom_call.1} parent=0 // loop_header
    %s15 = sphi 0, %s19
    %p16 = scmp.ge.s32.totalorder %s15, 4
    %s25 = sphi 0, %s27
    %s28 = sphi 0, %s25
    %s29 = sphi 0, %s28
    %s45 = sphi 0, %s29
    %s49 = sphi 0, %s49
    %s51 = sphi 0, %s49
    %s52 = sphi 0, %s51
    %s66 = sphi 0, %s52
    %s70 = sphi 0, %s70
    %s72 = sphi 0, %s70
    %s73 = sphi 0, %s72
    %s87 = sphi 0, %s73
    %s91 = sphi 0, %s91
    %s93 = sphi 0, %s91
    %s94 = sphi 0, %s93
    %s108 = sphi 0, %s94
    %s112 = sphi 0, %s112
    %s114 = sphi 0, %s112
    %s115 = sphi 0, %s114
    %s129 = sphi 0, %s115
    %s133 = sphi 0, %s133
    %s135 = sphi 0, %s133
    %s136 = sphi 0, %s135
    %s150 = sphi 0, %s136
    %s154 = sphi 0, %s154
    %s156 = sphi 0, %s154
    %s157 = sphi 0, %s156
    %s171 = sphi 0, %s157
    %s177 = sphi 0, %s179
    %s180 = sphi 0, %s177
    %s181 = sphi 0, %s180
    %s197 = sphi 0, %s181
    %s203 = sphi 0, %s205
    %s206 = sphi 0, %s203
    %s207 = sphi 0, %s206
    %s223 = sphi 0, %s207
  $region4: #{tpu_custom_call.1} parent=0 // loop_header_branch
    %18 = sbr.rel (%p16) target = $region8
  $region5: #{tpu_custom_call.1} parent=0 // loop_body
    %s20 = ssub.s32 %s15, 1
    %s21 = ssub.s32 %s15, 2
    %s22 = sadd.s32 %s15, 1
    %s23 = ssub.s32 %s15, %s22
    %p24 = scmp.eq.s32.totalorder %s23, 0
    %s26 = sadd.s32 %s25, 1
    %s27 = scalar_select %p24, %s25, %s26
    %p30 = pneg %p24
    %p31 = scmp.eq.s32.totalorder %s15, 1
    %p32 = por %p30, %p31
    %p33 = scmp.ne.s32.totalorder %s25, %s28
    %p34 = scmp.eq.s32.totalorder %s15, 0
    %p35 = por %p33, %p34
    %p36 = scmp.ne.s32.totalorder %s25, %s28
    %p37 = scmp.eq.s32.totalorder %s20, 1
    %p38 = por %p36, %p37
    %p39 = scmp.ne.s32.totalorder %s28, %s29
    %p40 = scmp.eq.s32.totalorder %s20, 0
    %p41 = por %p39, %p40
    %p42 = scmp.ne.s32.totalorder %s28, %s29
    %p43 = scmp.eq.s32.totalorder %s21, 1
    %p44 = por %p42, %p43
    %p46 = scmp.ne.s32.totalorder %s29, %s45
    %p47 = scmp.eq.s32.totalorder %s21, 0
    %p48 = por %p46, %p47
    %s50 = sadd.s32 %s49, 1
    %p53 = scmp.eq.s32.totalorder %s15, 1
    %p54 = scmp.ne.s32.totalorder %s49, %s51
    %p55 = scmp.eq.s32.totalorder %s15, 0
    %p56 = por %p54, %p55
    %p57 = scmp.ne.s32.totalorder %s49, %s51
    %p58 = scmp.eq.s32.totalorder %s20, 1
    %p59 = por %p57, %p58
    %p60 = scmp.ne.s32.totalorder %s51, %s52
    %p61 = scmp.eq.s32.totalorder %s20, 0
    %p62 = por %p60, %p61
    %p63 = scmp.ne.s32.totalorder %s51, %s52
    %p64 = scmp.eq.s32.totalorder %s21, 1
    %p65 = por %p63, %p64
    %p67 = scmp.ne.s32.totalorder %s52, %s66
    %p68 = scmp.eq.s32.totalorder %s21, 0
    %p69 = por %p67, %p68
    %s71 = sadd.s32 %s70, 1
    %p74 = scmp.eq.s32.totalorder %s15, 1
    %p75 = scmp.ne.s32.totalorder %s70, %s72
    %p76 = scmp.eq.s32.totalorder %s15, 0
    %p77 = por %p75, %p76
    %p78 = scmp.ne.s32.totalorder %s70, %s72
    %p79 = scmp.eq.s32.totalorder %s20, 1
    %p80 = por %p78, %p79
    %p81 = scmp.ne.s32.totalorder %s72, %s73
    %p82 = scmp.eq.s32.totalorder %s20, 0
    %p83 = por %p81, %p82
    %p84 = scmp.ne.s32.totalorder %s72, %s73
    %p85 = scmp.eq.s32.totalorder %s21, 1
    %p86 = por %p84, %p85
    %p88 = scmp.ne.s32.totalorder %s73, %s87
    %p89 = scmp.eq.s32.totalorder %s21, 0
    %p90 = por %p88, %p89
    %s92 = sadd.s32 %s91, 1
    %p95 = scmp.eq.s32.totalorder %s15, 1
    %p96 = scmp.ne.s32.totalorder %s91, %s93
    %p97 = scmp.eq.s32.totalorder %s15, 0
    %p98 = por %p96, %p97
    %p99 = scmp.ne.s32.totalorder %s91, %s93
    %p100 = scmp.eq.s32.totalorder %s20, 1
    %p101 = por %p99, %p100
    %p102 = scmp.ne.s32.totalorder %s93, %s94
    %p103 = scmp.eq.s32.totalorder %s20, 0
    %p104 = por %p102, %p103
    %p105 = scmp.ne.s32.totalorder %s93, %s94
    %p106 = scmp.eq.s32.totalorder %s21, 1
    %p107 = por %p105, %p106
    %p109 = scmp.ne.s32.totalorder %s94, %s108
    %p110 = scmp.eq.s32.totalorder %s21, 0
    %p111 = por %p109, %p110
    %s113 = sadd.s32 %s112, 1
    %p116 = scmp.eq.s32.totalorder %s15, 1
    %p117 = scmp.ne.s32.totalorder %s112, %s114
    %p118 = scmp.eq.s32.totalorder %s15, 0
    %p119 = por %p117, %p118
    %p120 = scmp.ne.s32.totalorder %s112, %s114
    %p121 = scmp.eq.s32.totalorder %s20, 1
    %p122 = por %p120, %p121
    %p123 = scmp.ne.s32.totalorder %s114, %s115
    %p124 = scmp.eq.s32.totalorder %s20, 0
    %p125 = por %p123, %p124
    %p126 = scmp.ne.s32.totalorder %s114, %s115
    %p127 = scmp.eq.s32.totalorder %s21, 1
    %p128 = por %p126, %p127
    %p130 = scmp.ne.s32.totalorder %s115, %s129
    %p131 = scmp.eq.s32.totalorder %s21, 0
    %p132 = por %p130, %p131
    %s134 = sadd.s32 %s133, 1
    %p137 = scmp.eq.s32.totalorder %s15, 1
    %p138 = scmp.ne.s32.totalorder %s133, %s135
    %p139 = scmp.eq.s32.totalorder %s15, 0
    %p140 = por %p138, %p139
    %p141 = scmp.ne.s32.totalorder %s133, %s135
    %p142 = scmp.eq.s32.totalorder %s20, 1
    %p143 = por %p141, %p142
    %p144 = scmp.ne.s32.totalorder %s135, %s136
    %p145 = scmp.eq.s32.totalorder %s20, 0
    %p146 = por %p144, %p145
    %p147 = scmp.ne.s32.totalorder %s135, %s136
    %p148 = scmp.eq.s32.totalorder %s21, 1
    %p149 = por %p147, %p148
    %p151 = scmp.ne.s32.totalorder %s136, %s150
    %p152 = scmp.eq.s32.totalorder %s21, 0
    %p153 = por %p151, %p152
    %s155 = sadd.s32 %s154, 1
    %p158 = scmp.eq.s32.totalorder %s15, 1
    %p159 = scmp.ne.s32.totalorder %s154, %s156
    %p160 = scmp.eq.s32.totalorder %s15, 0
    %p161 = por %p159, %p160
    %p162 = scmp.ne.s32.totalorder %s154, %s156
    %p163 = scmp.eq.s32.totalorder %s20, 1
    %p164 = por %p162, %p163
    %p165 = scmp.ne.s32.totalorder %s156, %s157
    %p166 = scmp.eq.s32.totalorder %s20, 0
    %p167 = por %p165, %p166
    %p168 = scmp.ne.s32.totalorder %s156, %s157
    %p169 = scmp.eq.s32.totalorder %s21, 1
    %p170 = por %p168, %p169
    %p172 = scmp.ne.s32.totalorder %s157, %s171
    %p173 = scmp.eq.s32.totalorder %s21, 0
    %p174 = por %p172, %p173
    %s175 = ssub.s32 %s15, %s22
    %p176 = scmp.eq.s32.totalorder %s175, 0
    %s178 = sadd.s32 %s177, 1
    %s179 = scalar_select %p176, %s177, %s178
    %p182 = pneg %p176
    %p183 = scmp.eq.s32.totalorder %s15, 1
    %p184 = por %p182, %p183
    %p185 = scmp.ne.s32.totalorder %s177, %s180
    %p186 = scmp.eq.s32.totalorder %s15, 0
    %p187 = por %p185, %p186
    %p188 = scmp.ne.s32.totalorder %s177, %s180
    %p189 = scmp.eq.s32.totalorder %s20, 1
    %p190 = por %p188, %p189
    %p191 = scmp.ne.s32.totalorder %s180, %s181
    %p192 = scmp.eq.s32.totalorder %s20, 0
    %p193 = por %p191, %p192
    %p194 = scmp.ne.s32.totalorder %s180, %s181
    %p195 = scmp.eq.s32.totalorder %s21, 1
    %p196 = por %p194, %p195
    %p198 = scmp.ne.s32.totalorder %s181, %s197
    %p199 = scmp.eq.s32.totalorder %s21, 0
    %p200 = por %p198, %p199
    %s201 = ssub.s32 %s15, %s22
    %p202 = scmp.eq.s32.totalorder %s201, 0
    %s204 = sadd.s32 %s203, 1
    %s205 = scalar_select %p202, %s203, %s204
    %p208 = pneg %p202
    %p209 = scmp.eq.s32.totalorder %s15, 1
    %p210 = por %p208, %p209
    %p211 = scmp.ne.s32.totalorder %s203, %s206
    %p212 = scmp.eq.s32.totalorder %s15, 0
    %p213 = por %p211, %p212
    %p214 = scmp.ne.s32.totalorder %s203, %s206
    %p215 = scmp.eq.s32.totalorder %s20, 1
    %p216 = por %p214, %p215
    %p217 = scmp.ne.s32.totalorder %s206, %s207
    %p218 = scmp.eq.s32.totalorder %s20, 0
    %p219 = por %p217, %p218
    %p220 = scmp.ne.s32.totalorder %s206, %s207
    %p221 = scmp.eq.s32.totalorder %s21, 1
    %p222 = por %p220, %p221
    %p224 = scmp.ne.s32.totalorder %s207, %s223
    %p225 = scmp.eq.s32.totalorder %s21, 0
    %p226 = por %p224, %p225
    %p227 = scmp.le.s32.totalorder 1, %s15
    %p228 = scmp.lt.s32.totalorder %s15, 3
    %p229 = pnand %p227, %p228
    %p230 = pneg %p229
    // Predicated region
    $region9: #{tpu_custom_call.1} parent=5 // pred_check
      _
    $region10: #{tpu_custom_call.1} parent=5 // pred_check_branch
      %232 = sbr.rel (%p229) target = $region12
    $region11: #{tpu_custom_call.1} parent=5 // pred_region
      %s233 = ssub.s32 %s15, 1
      // Predicated region
      $region13: #{tpu_custom_call.1} parent=11 // pred_check
        %p234 = pneg %p62
      $region14: #{tpu_custom_call.1} parent=11 // pred_check_branch
        %236 = sbr.rel (%p234) target = $region16
      $region15: #{tpu_custom_call.1} parent=11 // pred_region
        _
      $region16: #{tpu_custom_call.1} parent=11 // pred_fallthru
        _
      // Predicated region
      $region17: #{tpu_custom_call.1} parent=11 // pred_check
        %p237 = pneg %p83
      $region18: #{tpu_custom_call.1} parent=11 // pred_check_branch
        %239 = sbr.rel (%p237) target = $region20
      $region19: #{tpu_custom_call.1} parent=11 // pred_region
        _
      $region20: #{tpu_custom_call.1} parent=11 // pred_fallthru
        _
      // Predicated region
      $region21: #{tpu_custom_call.1} parent=11 // pred_check
        %p240 = pneg %p104
      $region22: #{tpu_custom_call.1} parent=11 // pred_check_branch
        %242 = sbr.rel (%p240) target = $region24
      $region23: #{tpu_custom_call.1} parent=11 // pred_region
        _
      $region24: #{tpu_custom_call.1} parent=11 // pred_fallthru
        _
      // Predicated region
      $region25: #{tpu_custom_call.1} parent=11 // pred_check
        %p243 = pneg %p125
      $region26: #{tpu_custom_call.1} parent=11 // pred_check_branch
        %245 = sbr.rel (%p243) target = $region28
      $region27: #{tpu_custom_call.1} parent=11 // pred_region
        _
      $region28: #{tpu_custom_call.1} parent=11 // pred_fallthru
        _
      // Predicated region
      $region29: #{tpu_custom_call.1} parent=11 // pred_check
        %p246 = pneg %p146
      $region30: #{tpu_custom_call.1} parent=11 // pred_check_branch
        %248 = sbr.rel (%p246) target = $region32
      $region31: #{tpu_custom_call.1} parent=11 // pred_region
        _
      $region32: #{tpu_custom_call.1} parent=11 // pred_fallthru
        _
      // Predicated region
      $region33: #{tpu_custom_call.1} parent=11 // pred_check
        %p249 = pneg %p167
      $region34: #{tpu_custom_call.1} parent=11 // pred_check_branch
        %251 = sbr.rel (%p249) target = $region36
      $region35: #{tpu_custom_call.1} parent=11 // pred_region
        _
      $region36: #{tpu_custom_call.1} parent=11 // pred_fallthru
        _
    $region12: #{tpu_custom_call.1} parent=5 // pred_fallthru
      _
    %p252 = scmp.lt.s32.totalorder %s15, 2
    // Predicated region
    $region37: #{tpu_custom_call.1} parent=5 // pred_check
      %p253 = pneg %p252
    $region38: #{tpu_custom_call.1} parent=5 // pred_check_branch
      %255 = sbr.rel (%p253) target = $region40
    $region39: #{tpu_custom_call.1} parent=5 // pred_region
      // Predicated region
      $region41: #{tpu_custom_call.1} parent=39 // pred_check
        %p256 = pneg %p35
      $region42: #{tpu_custom_call.1} parent=39 // pred_check_branch
        %258 = sbr.rel (%p256) target = $region44
      $region43: #{tpu_custom_call.1} parent=39 // pred_region
        %s259 = smul.u32 32, %s15
        %p260 = scmp.lt.s32.totalorder %s259, 63
        %s261 = scalar_select %p260, %s259, 63
        %s262 = smul.addr %s261, 8
        %s263 = scalar_lea.vmem %s0, %s262
        %s264 = smul.u32 32, %s15
      $region44: #{tpu_custom_call.1} parent=39 // pred_fallthru
        _
    $region40: #{tpu_custom_call.1} parent=5 // pred_fallthru
      _
    %p265 = scmp.le.s32.totalorder 1, %s15
    %p266 = scmp.lt.s32.totalorder %s15, 3
    %p267 = pnand %p265, %p266
    %p268 = pneg %p267
    // Predicated region
    $region45: #{tpu_custom_call.1} parent=5 // pred_check
      _
    $region46: #{tpu_custom_call.1} parent=5 // pred_check_branch
      %270 = sbr.rel (%p267) target = $region48
    $region47: #{tpu_custom_call.1} parent=5 // pred_region
      %s271 = ssub.s32 %s15, 1
      %s272 = smul.u32 32, %s20
      %p273 = scmp.lt.s32.totalorder %s272, 63
      %s274 = scalar_select %p273, %s272, 63
      %s275 = smul.addr %s274, 8
      %s276 = scalar_lea.vmem %s0, %s275
      %p277 = pneg %p41
      %p278 = pneg %p38
      %p279 = pneg %p62
      %p280 = pneg %p59
      %p281 = pneg %p83
      %p282 = pneg %p80
      %p283 = pneg %p104
      %p284 = pneg %p101
      %p285 = pneg %p125
      %p286 = pneg %p122
      %p287 = pneg %p146
      %p288 = pneg %p143
      %p289 = pneg %p167
      %p290 = pneg %p164
      %p291 = pneg %p193
      %p292 = pneg %p190
      %s293 = smul.u32 32, %s20
      %p294 = scmp.lt.s32.totalorder %s293, 63
      %s295 = scalar_select %p294, %s293, 63
      %s296 = smul.addr %s295, 8
      %s297 = scalar_lea.vmem %s7, %s296
      %p298 = pneg %p219
      %p299 = pneg %p216
      %s300 = smul.u32 32, %s20
      %p301 = scmp.lt.s32.totalorder %s300, 63
      %s302 = scalar_select %p301, %s300, 63
      %s303 = smul.addr %s302, 8
      %s304 = scalar_lea.vmem %s8, %s303
      %s305 = smul.u32 32, %s20
      %p306 = scmp.lt.s32.totalorder %s305, 63
      %s307 = scalar_select %p306, %s305, 63
      %s308 = smul.addr %s307, 8
      %s309 = scalar_lea.vmem %s0, %s308
      %s310 = smul.u32 32, %s20
      %s311 = smul.u32 32, %s20
      %p312 = scmp.lt.s32.totalorder %s311, 63
      %s313 = scalar_select %p312, %s311, 63
      %s314 = smul.addr %s313, 8
      %s315 = scalar_lea.vmem %s7, %s314
      %s316 = smul.u32 32, %s20
      %s317 = smul.u32 32, %s20
      %p318 = scmp.lt.s32.totalorder %s317, 63
      %s319 = scalar_select %p318, %s317, 63
      %s320 = smul.addr %s319, 8
      %s321 = scalar_lea.vmem %s8, %s320
      %s322 = smul.u32 32, %s20
      %v323 = vld [vmem:[%s309] sm:$0xff]
      %v324 = vld [vmem:[%s309 + $0x8] sm:$0xff]
      %v325 = vld [vmem:[%s309 + $0x10] sm:$0xff]
      %v326 = vld [vmem:[%s309 + $0x18] sm:$0xff]
      %v327 = vld [vmem:[%s309 + $0x20] sm:$0xff]
      %v328 = vld [vmem:[%s309 + $0x28] sm:$0xff]
      %v329 = vld [vmem:[%s309 + $0x30] sm:$0xff]
      %v330 = vld [vmem:[%s309 + $0x38] sm:$0xff]
      %v331 = vld [vmem:[%s309 + $0x40] sm:$0xff]
      %v332 = vld [vmem:[%s309 + $0x48] sm:$0xff]
      %v333 = vld [vmem:[%s309 + $0x50] sm:$0xff]
      %v334 = vld [vmem:[%s309 + $0x58] sm:$0xff]
      %v335 = vld [vmem:[%s309 + $0x60] sm:$0xff]
      %v336 = vld [vmem:[%s309 + $0x68] sm:$0xff]
      %v337 = vld [vmem:[%s309 + $0x70] sm:$0xff]
      %v338 = vld [vmem:[%s309 + $0x78] sm:$0xff]
      %v339 = vld [vmem:[%s309 + $0x80] sm:$0xff]
      %v340 = vld [vmem:[%s309 + $0x88] sm:$0xff]
      %v341 = vld [vmem:[%s309 + $0x90] sm:$0xff]
      %v342 = vld [vmem:[%s309 + $0x98] sm:$0xff]
      %v343 = vld [vmem:[%s309 + $0xa0] sm:$0xff]
      %v344 = vld [vmem:[%s309 + $0xa8] sm:$0xff]
      %v345 = vld [vmem:[%s309 + $0xb0] sm:$0xff]
      %v346 = vld [vmem:[%s309 + $0xb8] sm:$0xff]
      %v347 = vld [vmem:[%s309 + $0xc0] sm:$0xff]
      %v348 = vld [vmem:[%s309 + $0xc8] sm:$0xff]
      %v349 = vld [vmem:[%s309 + $0xd0] sm:$0xff]
      %v350 = vld [vmem:[%s309 + $0xd8] sm:$0xff]
      %v351 = vld [vmem:[%s309 + $0xe0] sm:$0xff]
      %v352 = vld [vmem:[%s309 + $0xe8] sm:$0xff]
      %v353 = vld [vmem:[%s309 + $0xf0] sm:$0xff]
      %v354 = vld [vmem:[%s309 + $0xf8] sm:$0xff]
      %v355 = vld [vmem:[%s1] sm:$0xff]
      %v356 = vld [vmem:[%s1 + $0x8] sm:$0xff]
      %vm357 = vcmask 130048
      %v359 = vsel %vm357, %v323, 0
      %v362 = vsel %vm357, %v324, 0
      %v365 = vsel %vm357, %v325, 0
      %v368 = vsel %vm357, %v326, 0
      %v371 = vsel %vm357, %v327, 0
      %v374 = vsel %vm357, %v328, 0
      %v377 = vsel %vm357, %v329, 0
      %v380 = vsel %vm357, %v330, 0
      %v383 = vsel %vm357, %v331, 0
      %v386 = vsel %vm357, %v332, 0
      %v389 = vsel %vm357, %v333, 0
      %v392 = vsel %vm357, %v334, 0
      %v395 = vsel %vm357, %v335, 0
      %v398 = vsel %vm357, %v336, 0
      %v401 = vsel %vm357, %v337, 0
      %v404 = vsel %vm357, %v338, 0
      %v407 = vsel %vm357, %v339, 0
      %v410 = vsel %vm357, %v340, 0
      %v413 = vsel %vm357, %v341, 0
      %v416 = vsel %vm357, %v342, 0
      %v419 = vsel %vm357, %v343, 0
      %v422 = vsel %vm357, %v344, 0
      %v425 = vsel %vm357, %v345, 0
      %v428 = vsel %vm357, %v346, 0
      %v431 = vsel %vm357, %v347, 0
      %v434 = vsel %vm357, %v348, 0
      %v437 = vsel %vm357, %v349, 0
      %v440 = vsel %vm357, %v350, 0
      %v443 = vsel %vm357, %v351, 0
      %v446 = vsel %vm357, %v352, 0
      %v449 = vsel %vm357, %v353, 0
      %v452 = vsel %vm357, %v354, 0
      %454 = vmatprep.subr.mxu0 0.0
      %v455 = vand.u32 %v355, 4294901760
      %456 = vmatpush1.msra.mxu0 %v455
      %457 = vmatprep.subr.mxu0 0.0
      %v458 = vand.u32 %v356, 4294901760
      %459 = vmatpush1.msra.mxu0 %v458
      %460 = vmatprep.subr.mxu0 0.0
      %461 = vmatpush1.msra.mxu0 0.0
      %462 = vmatprep.subr.mxu0 0.0
      %463 = vmatpush1.msra.mxu0 0.0
      %464 = vmatprep.subr.mxu0 0.0
      %465 = vmatpush1.msra.mxu0 0.0
      %466 = vmatprep.subr.mxu0 0.0
      %467 = vmatpush1.msra.mxu0 0.0
      %468 = vmatprep.subr.mxu0 0.0
      %469 = vmatpush1.msra.mxu0 0.0
      %470 = vmatprep.subr.mxu0 0.0
      %471 = vmatpush1.msra.mxu0 0.0
      %472 = vmatprep.subr.mxu0 0.0
      %473 = vmatpush1.msra.mxu0 0.0
      %474 = vmatprep.subr.mxu0 0.0
      %475 = vmatpush1.msra.mxu0 0.0
      %476 = vmatprep.subr.mxu0 0.0
      %477 = vmatpush1.msra.mxu0 0.0
      %478 = vmatprep.subr.mxu0 0.0
      %479 = vmatpush1.msra.mxu0 0.0
      %480 = vmatprep.subr.mxu0 0.0
      %481 = vmatpush1.msra.mxu0 0.0
      %482 = vmatprep.subr.mxu0 0.0
      %483 = vmatpush1.msra.mxu0 0.0
      %484 = vmatprep.subr.mxu0 0.0
      %485 = vmatpush1.msra.mxu0 0.0
      %486 = vmatprep.subr.mxu0 0.0
      %487 = vmatpush1.msra.mxu0 0.0
      %488 = vmatprep.subr.mxu0 0.0
      %489 = vmatpush1.msra.mxu0 0.0
      %490 = vmatprep.subr.mxu0 0.0
      %491 = vmatpush1.msra.mxu0 0.0
      %492 = vmatprep.subr.mxu0 0.0
      %493 = vmatpush1.msra.mxu0 0.0
      %494 = vmatprep.subr.mxu0 0.0
      %495 = vmatpush1.msra.mxu0 0.0
      %496 = vmatprep.subr.mxu0 0.0
      %497 = vmatpush1.msra.mxu0 0.0
      %498 = vmatprep.subr.mxu0 0.0
      %499 = vmatpush1.msra.mxu0 0.0
      %500 = vmatprep.subr.mxu0 0.0
      %501 = vmatpush1.msra.mxu0 0.0
      %502 = vmatprep.subr.mxu0 0.0
      %503 = vmatpush1.msra.mxu0 0.0
      %504 = vmatprep.subr.mxu0 0.0
      %505 = vmatpush1.msra.mxu0 0.0
      %506 = vmatprep.subr.mxu0 0.0
      %507 = vmatpush1.msra.mxu0 0.0
      %508 = vmatprep.subr.mxu0 0.0
      %509 = vmatpush1.msra.mxu0 0.0
      %510 = vmatprep.subr.mxu0 0.0
      %511 = vmatpush1.msra.mxu0 0.0
      %512 = vmatprep.subr.mxu0 0.0
      %513 = vmatpush1.msra.mxu0 0.0
      %514 = vmatprep.subr.mxu0 0.0
      %515 = vmatpush1.msra.mxu0 0.0
      %516 = vmatprep.subr.mxu0 0.0
      %517 = vmatpush1.msra.mxu0 0.0
      %518 = vmatprep.subr.mxu0 0.0
      %519 = vmatpush1.msra.mxu0 0.0
      %520 = vmatprep.mubr.f32.mxu0 0.0
      %v521 = vand.u32 %v359, 4294901760
      %v522 = vsub.f32 %v359, %v521
      %v523 = vand.u32 %v522, 4294901760
      %v524 = vsub.f32 %v522, %v523
      %v525 = vand.u32 %v524, 4294901760
      %526 = vmatmul.mubr.f32.gmra.mrb[0].mxu0 %v525
      %v527 = vpop.f32.mrb[0].mxu0
      %v528 = vadd.f32 0.0, %v527
      %v529 = vpop.f32.mrb[0].mxu0
      %530 = vmatprep.mubr.f32.mxu0 0.0
      %v531 = vand.u32 %v362, 4294901760
      %v532 = vsub.f32 %v362, %v531
      %v533 = vand.u32 %v532, 4294901760
      %v534 = vsub.f32 %v532, %v533
      %v535 = vand.u32 %v534, 4294901760
      %536 = vmatmul.mubr.f32.gmra.mrb[0].mxu0 %v535
      %v537 = vpop.f32.mrb[0].mxu0
      %v538 = vadd.f32 0.0, %v537
      %v539 = vpop.f32.mrb[0].mxu0
      %540 = vmatprep.mubr.f32.mxu0 0.0
      %v541 = vand.u32 %v365, 4294901760
      %v542 = vsub.f32 %v365, %v541
      %v543 = vand.u32 %v542, 4294901760
      %v544 = vsub.f32 %v542, %v543
      %v545 = vand.u32 %v544, 4294901760
      %546 = vmatmul.mubr.f32.gmra.mrb[0].mxu0 %v545
      %v547 = vpop.f32.mrb[0].mxu0
      %v548 = vadd.f32 0.0, %v547
      %v549 = vpop.f32.mrb[0].mxu0
      %550 = vmatprep.mubr.f32.mxu0 0.0
      %v551 = vand.u32 %v368, 4294901760
      %v552 = vsub.f32 %v368, %v551
      %v553 = vand.u32 %v552, 4294901760
      %v554 = vsub.f32 %v552, %v553
      %v555 = vand.u32 %v554, 4294901760
      %556 = vmatmul.mubr.f32.gmra.mrb[0].mxu0 %v555
      %v557 = vpop.f32.mrb[0].mxu0
      %v558 = vadd.f32 0.0, %v557
      %v559 = vpop.f32.mrb[0].mxu0
      %560 = vmatprep.mubr.f32.mxu0 0.0
      %v561 = vand.u32 %v371, 4294901760
      %v562 = vsub.f32 %v371, %v561
      %v563 = vand.u32 %v562, 4294901760
      %v564 = vsub.f32 %v562, %v563
      %v565 = vand.u32 %v564, 4294901760
      %566 = vmatmul.mubr.f32.gmra.mrb[0].mxu0 %v565
      %v567 = vpop.f32.mrb[0].mxu0
      %v568 = vadd.f32 0.0, %v567
      %v569 = vpop.f32.mrb[0].mxu0
      %570 = vmatprep.mubr.f32.mxu0 0.0
      %v571 = vand.u32 %v374, 4294901760
      %v572 = vsub.f32 %v374, %v571
      %v573 = vand.u32 %v572, 4294901760
      %v574 = vsub.f32 %v572, %v573
      %v575 = vand.u32 %v574, 4294901760
      %576 = vmatmul.mubr.f32.gmra.mrb[0].mxu0 %v575
      %v577 = vpop.f32.mrb[0].mxu0
      %v578 = vadd.f32 0.0, %v577
      %v579 = vpop.f32.mrb[0].mxu0
      %580 = vmatprep.mubr.f32.mxu0 0.0
      %v581 = vand.u32 %v377, 4294901760
      %v582 = vsub.f32 %v377, %v581
      %v583 = vand.u32 %v582, 4294901760
      %v584 = vsub.f32 %v582, %v583
      %v585 = vand.u32 %v584, 4294901760
      %586 = vmatmul.mubr.f32.gmra.mrb[0].mxu0 %v585
      %v587 = vpop.f32.mrb[0].mxu0
      %v588 = vadd.f32 0.0, %v587
      %v589 = vpop.f32.mrb[0].mxu0
      %590 = vmatprep.mubr.f32.mxu0 0.0
      %v591 = vand.u32 %v380, 4294901760
      %v592 = vsub.f32 %v380, %v591
      %v593 = vand.u32 %v592, 4294901760
      %v594 = vsub.f32 %v592, %v593
      %v595 = vand.u32 %v594, 4294901760
      %596 = vmatmul.mubr.f32.gmra.mrb[0].mxu0 %v595
      %v597 = vpop.f32.mrb[0].mxu0
      %v598 = vadd.f32 0.0, %v597
      %v599 = vpop.f32.mrb[0].mxu0
      %600 = vmatprep.mubr.f32.mxu0 0.0
      %v601 = vand.u32 %v383, 4294901760
      %v602 = vsub.f32 %v383, %v601
      %v603 = vand.u32 %v602, 4294901760
      %v604 = vsub.f32 %v602, %v603
      %v605 = vand.u32 %v604, 4294901760
      %606 = vmatmul.mubr.f32.gmra.mrb[0].mxu0 %v605
      %v607 = vpop.f32.mrb[0].mxu0
      %v608 = vadd.f32 0.0, %v607
      %v609 = vpop.f32.mrb[0].mxu0
      %610 = vmatprep.mubr.f32.mxu0 0.0
      %v611 = vand.u32 %v386, 4294901760
      %v612 = vsub.f32 %v386, %v611
      %v613 = vand.u32 %v612, 4294901760
      %v614 = vsub.f32 %v612, %v613
      %v615 = vand.u32 %v614, 4294901760
      %616 = vmatmul.mubr.f32.gmra.mrb[0].mxu0 %v615
      %v617 = vpop.f32.mrb[0].mxu0
      %v618 = vadd.f32 0.0, %v617
      %v619 = vpop.f32.mrb[0].mxu0
      %620 = vmatprep.mubr.f32.mxu0 0.0
      %v621 = vand.u32 %v389, 4294901760
      %v622 = vsub.f32 %v389, %v621
      %v623 = vand.u32 %v622, 4294901760
      %v624 = vsub.f32 %v622, %v623
      %v625 = vand.u32 %v624, 4294901760
      %626 = vmatmul.mubr.f32.gmra.mrb[0].mxu0 %v625
      %v627 = vpop.f32.mrb[0].mxu0
      %v628 = vadd.f32 0.0, %v627
      %v629 = vpop.f32.mrb[0].mxu0
      %630 = vmatprep.mubr.f32.mxu0 0.0
      %v631 = vand.u32 %v392, 4294901760
      %v632 = vsub.f32 %v392, %v631
      %v633 = vand.u32 %v632, 4294901760
      %v634 = vsub.f32 %v632, %v633
      %v635 = vand.u32 %v634, 4294901760
      %636 = vmatmul.mubr.f32.gmra.mrb[0].mxu0 %v635
      %v637 = vpop.f32.mrb[0].mxu0
      %v638 = vadd.f32 0.0, %v637
      %v639 = vpop.f32.mrb[0].mxu0
      %640 = vmatprep.mubr.f32.mxu0 0.0
      %v641 = vand.u32 %v395, 4294901760
      %v642 = vsub.f32 %v395, %v641
      %v643 = vand.u32 %v642, 4294901760
      %v644 = vsub.f32 %v642, %v643
      %v645 = vand.u32 %v644, 4294901760
      %646 = vmatmul.mubr.f32.gmra.mrb[0].mxu0 %v645
      %v647 = vpop.f32.mrb[0].mxu0
      %v648 = vadd.f32 0.0, %v647
      %v649 = vpop.f32.mrb[0].mxu0
      %650 = vmatprep.mubr.f32.mxu0 0.0
      %v651 = vand.u32 %v398, 4294901760
      %v652 = vsub.f32 %v398, %v651
      %v653 = vand.u32 %v652, 4294901760
      %v654 = vsub.f32 %v652, %v653
      %v655 = vand.u32 %v654, 4294901760
      %656 = vmatmul.mubr.f32.gmra.mrb[0].mxu0 %v655
      %v657 = vpop.f32.mrb[0].mxu0
      %v658 = vadd.f32 0.0, %v657
      %v659 = vpop.f32.mrb[0].mxu0
      %660 = vmatprep.mubr.f32.mxu0 0.0
      %v661 = vand.u32 %v401, 4294901760
      %v662 = vsub.f32 %v401, %v661
      %v663 = vand.u32 %v662, 4294901760
      %v664 = vsub.f32 %v662, %v663
      %v665 = vand.u32 %v664, 4294901760
      %666 = vmatmul.mubr.f32.gmra.mrb[0].mxu0 %v665
      %v667 = vpop.f32.mrb[0].mxu0
      %v668 = vadd.f32 0.0, %v667
      %v669 = vpop.f32.mrb[0].mxu0
      %670 = vmatprep.mubr.f32.mxu0 0.0
      %v671 = vand.u32 %v404, 4294901760
      %v672 = vsub.f32 %v404, %v671
      %v673 = vand.u32 %v672, 4294901760
      %v674 = vsub.f32 %v672, %v673
      %v675 = vand.u32 %v674, 4294901760
      %676 = vmatmul.mubr.f32.gmra.mrb[0].mxu0 %v675
      %v677 = vpop.f32.mrb[0].mxu0
      %v678 = vadd.f32 0.0, %v677
      %v679 = vpop.f32.mrb[0].mxu0
      %680 = vmatprep.mubr.f32.mxu0 0.0
      %v681 = vand.u32 %v407, 4294901760
      %v682 = vsub.f32 %v407, %v681
      %v683 = vand.u32 %v682, 4294901760
      %v684 = vsub.f32 %v682, %v683
      %v685 = vand.u32 %v684, 4294901760
      %686 = vmatmul.mubr.f32.gmra.mrb[0].mxu0 %v685
      %v687 = vpop.f32.mrb[0].mxu0
      %v688 = vadd.f32 0.0, %v687
      %v689 = vpop.f32.mrb[0].mxu0
      %690 = vmatprep.mubr.f32.mxu0 0.0
      %v691 = vand.u32 %v410, 4294901760
      %v692 = vsub.f32 %v410, %v691
      %v693 = vand.u32 %v692, 4294901760
      %v694 = vsub.f32 %v692, %v693
      %v695 = vand.u32 %v694, 4294901760
      %696 = vmatmul.mubr.f32.gmra.mrb[0].mxu0 %v695
      %v697 = vpop.f32.mrb[0].mxu0
      %v698 = vadd.f32 0.0, %v697
      %v699 = vpop.f32.mrb[0].mxu0
      %700 = vmatprep.mubr.f32.mxu0 0.0
      %v701 = vand.u32 %v413, 4294901760
      %v702 = vsub.f32 %v413, %v701
      %v703 = vand.u32 %v702, 4294901760
      %v704 = vsub.f32 %v702, %v703
      %v705 = vand.u32 %v704, 4294901760
      %706 = vmatmul.mubr.f32.gmra.mrb[0].mxu0 %v705
      %v707 = vpop.f32.mrb[0].mxu0
      %v708 = vadd.f32 0.0, %v707
      %v709 = vpop.f32.mrb[0].mxu0
      %710 = vmatprep.mubr.f32.mxu0 0.0
      %v711 = vand.u32 %v416, 4294901760
      %v712 = vsub.f32 %v416, %v711
      %v713 = vand.u32 %v712, 4294901760
      %v714 = vsub.f32 %v712, %v713
      %v715 = vand.u32 %v714, 4294901760
      %716 = vmatmul.mubr.f32.gmra.mrb[0].mxu0 %v715
      %v717 = vpop.f32.mrb[0].mxu0
      %v718 = vadd.f32 0.0, %v717
      %v719 = vpop.f32.mrb[0].mxu0
      %720 = vmatprep.mubr.f32.mxu0 0.0
      %v721 = vand.u32 %v419, 4294901760
      %v722 = vsub.f32 %v419, %v721
      %v723 = vand.u32 %v722, 4294901760
      %v724 = vsub.f32 %v722, %v723
      %v725 = vand.u32 %v724, 4294901760
      %726 = vmatmul.mubr.f32.gmra.mrb[0].mxu0 %v725
      %v727 = vpop.f32.mrb[0].mxu0
      %v728 = vadd.f32 0.0, %v727
      %v729 = vpop.f32.mrb[0].mxu0
      %730 = vmatprep.mubr.f32.mxu0 0.0
      %v731 = vand.u32 %v422, 4294901760
      %v732 = vsub.f32 %v422, %v731
      %v733 = vand.u32 %v732, 4294901760
      %v734 = vsub.f32 %v732, %v733
      %v735 = vand.u32 %v734, 4294901760
      %736 = vmatmul.mubr.f32.gmra.mrb[0].mxu0 %v735
      %v737 = vpop.f32.mrb[0].mxu0
      %v738 = vadd.f32 0.0, %v737
      %v739 = vpop.f32.mrb[0].mxu0
      %740 = vmatprep.mubr.f32.mxu0 0.0
      %v741 = vand.u32 %v425, 4294901760
      %v742 = vsub.f32 %v425, %v741
      %v743 = vand.u32 %v742, 4294901760
      %v744 = vsub.f32 %v742, %v743
      %v745 = vand.u32 %v744, 4294901760
      %746 = vmatmul.mubr.f32.gmra.mrb[0].mxu0 %v745
      %v747 = vpop.f32.mrb[0].mxu0
      %v748 = vadd.f32 0.0, %v747
      %v749 = vpop.f32.mrb[0].mxu0
      %750 = vmatprep.mubr.f32.mxu0 0.0
      %v751 = vand.u32 %v428, 4294901760
      %v752 = vsub.f32 %v428, %v751
      %v753 = vand.u32 %v752, 4294901760
      %v754 = vsub.f32 %v752, %v753
      %v755 = vand.u32 %v754, 4294901760
      %756 = vmatmul.mubr.f32.gmra.mrb[0].mxu0 %v755
      %v757 = vpop.f32.mrb[0].mxu0
      %v758 = vadd.f32 0.0, %v757
      %v759 = vpop.f32.mrb[0].mxu0
      %760 = vmatprep.mubr.f32.mxu0 0.0
      %v761 = vand.u32 %v431, 4294901760
      %v762 = vsub.f32 %v431, %v761
      %v763 = vand.u32 %v762, 4294901760
      %v764 = vsub.f32 %v762, %v763
      %v765 = vand.u32 %v764, 4294901760
      %766 = vmatmul.mubr.f32.gmra.mrb[0].mxu0 %v765
      %v767 = vpop.f32.mrb[0].mxu0
      %v768 = vadd.f32 0.0, %v767
      %v769 = vpop.f32.mrb[0].mxu0
      %770 = vmatprep.mubr.f32.mxu0 0.0
      %v771 = vand.u32 %v434, 4294901760
      %v772 = vsub.f32 %v434, %v771
      %v773 = vand.u32 %v772, 4294901760
      %v774 = vsub.f32 %v772, %v773
      %v775 = vand.u32 %v774, 4294901760
      %776 = vmatmul.mubr.f32.gmra.mrb[0].mxu0 %v775
      %v777 = vpop.f32.mrb[0].mxu0
      %v778 = vadd.f32 0.0, %v777
      %v779 = vpop.f32.mrb[0].mxu0
      %780 = vmatprep.mubr.f32.mxu0 0.0
      %v781 = vand.u32 %v437, 4294901760
      %v782 = vsub.f32 %v437, %v781
      %v783 = vand.u32 %v782, 4294901760
      %v784 = vsub.f32 %v782, %v783
      %v785 = vand.u32 %v784, 4294901760
      %786 = vmatmul.mubr.f32.gmra.mrb[0].mxu0 %v785
      %v787 = vpop.f32.mrb[0].mxu0
      %v788 = vadd.f32 0.0, %v787
      %v789 = vpop.f32.mrb[0].mxu0
      %790 = vmatprep.mubr.f32.mxu0 0.0
      %v791 = vand.u32 %v440, 4294901760
      %v792 = vsub.f32 %v440, %v791
      %v793 = vand.u32 %v792, 4294901760
      %v794 = vsub.f32 %v792, %v793
      %v795 = vand.u32 %v794, 4294901760
      %796 = vmatmul.mubr.f32.gmra.mrb[0].mxu0 %v795
      %v797 = vpop.f32.mrb[0].mxu0
      %v798 = vadd.f32 0.0, %v797
      %v799 = vpop.f32.mrb[0].mxu0
      %800 = vmatprep.mubr.f32.mxu0 0.0
      %v801 = vand.u32 %v443, 4294901760
      %v802 = vsub.f32 %v443, %v801
      %v803 = vand.u32 %v802, 4294901760
      %v804 = vsub.f32 %v802, %v803
      %v805 = vand.u32 %v804, 4294901760
      %806 = vmatmul.mubr.f32.gmra.mrb[0].mxu0 %v805
      %v807 = vpop.f32.mrb[0].mxu0
      %v808 = vadd.f32 0.0, %v807
      %v809 = vpop.f32.mrb[0].mxu0
      %810 = vmatprep.mubr.f32.mxu0 0.0
      %v811 = vand.u32 %v446, 4294901760
      %v812 = vsub.f32 %v446, %v811
      %v813 = vand.u32 %v812, 4294901760
      %v814 = vsub.f32 %v812, %v813
      %v815 = vand.u32 %v814, 4294901760
      %816 = vmatmul.mubr.f32.gmra.mrb[0].mxu0 %v815
      %v817 = vpop.f32.mrb[0].mxu0
      %v818 = vadd.f32 0.0, %v817
      %v819 = vpop.f32.mrb[0].mxu0
      %820 = vmatprep.mubr.f32.mxu0 0.0
      %v821 = vand.u32 %v449, 4294901760
      %v822 = vsub.f32 %v449, %v821
      %v823 = vand.u32 %v822, 4294901760
      %v824 = vsub.f32 %v822, %v823
      %v825 = vand.u32 %v824, 4294901760
      %826 = vmatmul.mubr.f32.gmra.mrb[0].mxu0 %v825
      %v827 = vpop.f32.mrb[0].mxu0
      %v828 = vadd.f32 0.0, %v827
      %v829 = vpop.f32.mrb[0].mxu0
      %830 = vmatprep.mubr.f32.mxu0 0.0
      %v831 = vand.u32 %v452, 4294901760
      %v832 = vsub.f32 %v452, %v831
      %v833 = vand.u32 %v832, 4294901760
      %v834 = vsub.f32 %v832, %v833
      %v835 = vand.u32 %v834, 4294901760
      %836 = vmatmul.mubr.f32.gmra.mrb[0].mxu0 %v835
      %v837 = vpop.f32.mrb[0].mxu0
      %v838 = vadd.f32 0.0, %v837
      %v839 = vpop.f32.mrb[0].mxu0
      %840 = vdwg.mxu0
      %841 = vmatprep.subr.mxu0 0.0
      %v842 = vand.u32 %v355, 4294901760
      %v843 = vsub.f32 %v355, %v842
      %v844 = vand.u32 %v843, 4294901760
      %v845 = vsub.f32 %v843, %v844
      %v846 = vand.u32 %v845, 4294901760
      %847 = vmatpush1.msra.mxu0 %v846
      %848 = vmatprep.subr.mxu0 0.0
      %v849 = vand.u32 %v356, 4294901760
      %v850 = vsub.f32 %v356, %v849
      %v851 = vand.u32 %v850, 4294901760
      %v852 = vsub.f32 %v850, %v851
      %v853 = vand.u32 %v852, 4294901760
      %854 = vmatpush1.msra.mxu0 %v853
      %855 = vmatprep.subr.mxu0 0.0
      %856 = vmatpush1.msra.mxu0 0.0
      %857 = vmatprep.subr.mxu0 0.0
      %858 = vmatpush1.msra.mxu0 0.0
      %859 = vmatprep.subr.mxu0 0.0
      %860 = vmatpush1.msra.mxu0 0.0
      %861 = vmatprep.subr.mxu0 0.0
      %862 = vmatpush1.msra.mxu0 0.0
      %863 = vmatprep.subr.mxu0 0.0
      %864 = vmatpush1.msra.mxu0 0.0
      %865 = vmatprep.subr.mxu0 0.0
      %866 = vmatpush1.msra.mxu0 0.0
      %867 = vmatprep.subr.mxu0 0.0
      %868 = vmatpush1.msra.mxu0 0.0
      %869 = vmatprep.subr.mxu0 0.0
      %870 = vmatpush1.msra.mxu0 0.0
      %871 = vmatprep.subr.mxu0 0.0
      %872 = vmatpush1.msra.mxu0 0.0
      %873 = vmatprep.subr.mxu0 0.0
      %874 = vmatpush1.msra.mxu0 0.0
      %875 = vmatprep.subr.mxu0 0.0
      %876 = vmatpush1.msra.mxu0 0.0
      %877 = vmatprep.subr.mxu0 0.0
      %878 = vmatpush1.msra.mxu0 0.0
      %879 = vmatprep.subr.mxu0 0.0
      %880 = vmatpush1.msra.mxu0 0.0
      %881 = vmatprep.subr.mxu0 0.0
      %882 = vmatpush1.msra.mxu0 0.0
      %883 = vmatprep.subr.mxu0 0.0
      %884 = vmatpush1.msra.mxu0 0.0
      %885 = vmatprep.subr.mxu0 0.0
      %886 = vmatpush1.msra.mxu0 0.0
      %887 = vmatprep.subr.mxu0 0.0
      %888 = vmatpush1.msra.mxu0 0.0
      %889 = vmatprep.subr.mxu0 0.0
      %890 = vmatpush1.msra.mxu0 0.0
      %891 = vmatprep.subr.mxu0 0.0
      %892 = vmatpush1.msra.mxu0 0.0
      %893 = vmatprep.subr.mxu0 0.0
      %894 = vmatpush1.msra.mxu0 0.0
      %895 = vmatprep.subr.mxu0 0.0
      %896 = vmatpush1.msra.mxu0 0.0
      %897 = vmatprep.subr.mxu0 0.0
      %898 = vmatpush1.msra.mxu0 0.0
      %899 = vmatprep.subr.mxu0 0.0
      %900 = vmatpush1.msra.mxu0 0.0
      %901 = vmatprep.subr.mxu0 0.0
      %902 = vmatpush1.msra.mxu0 0.0
      %903 = vmatprep.subr.mxu0 0.0
      %904 = vmatpush1.msra.mxu0 0.0
      %905 = vmatprep.subr.mxu0 0.0
      %906 = vmatpush1.msra.mxu0 0.0
      %907 = vmatprep.subr.mxu0 0.0
      %908 = vmatpush1.msra.mxu0 0.0
      %909 = vmatprep.subr.mxu0 0.0
      %910 = vmatpush1.msra.mxu0 0.0
      %911 = vmatprep.subr.mxu0 0.0
      %912 = vmatpush1.msra.mxu0 0.0
      %913 = vmatprep.subr.mxu0 0.0
      %914 = vmatpush1.msra.mxu0 0.0
      %915 = vmatprep.mubr.f32.mxu0 0.0
      %v916 = vand.u32 %v359, 4294901760
      %917 = vmatmul.mubr.f32.gmra.mrb[0].mxu0 %v916
      %v918 = vpop.f32.mrb[0].mxu0
      %v919 = vadd.f32 %v528, %v918
      %v920 = vpop.f32.mrb[0].mxu0
      %921 = vmatprep.mubr.f32.mxu0 0.0
      %v922 = vand.u32 %v362, 4294901760
      %923 = vmatmul.mubr.f32.gmra.mrb[0].mxu0 %v922
      %v924 = vpop.f32.mrb[0].mxu0
      %v925 = vadd.f32 %v538, %v924
      %v926 = vpop.f32.mrb[0].mxu0
      %927 = vmatprep.mubr.f32.mxu0 0.0
      %v928 = vand.u32 %v365, 4294901760
      %929 = vmatmul.mubr.f32.gmra.mrb[0].mxu0 %v928
      %v930 = vpop.f32.mrb[0].mxu0
      %v931 = vadd.f32 %v548, %v930
      %v932 = vpop.f32.mrb[0].mxu0
      %933 = vmatprep.mubr.f32.mxu0 0.0
      %v934 = vand.u32 %v368, 4294901760
      %935 = vmatmul.mubr.f32.gmra.mrb[0].mxu0 %v934
      %v936 = vpop.f32.mrb[0].mxu0
      %v937 = vadd.f32 %v558, %v936
      %v938 = vpop.f32.mrb[0].mxu0
      %939 = vmatprep.mubr.f32.mxu0 0.0
      %v940 = vand.u32 %v371, 4294901760
      %941 = vmatmul.mubr.f32.gmra.mrb[0].mxu0 %v940
      %v942 = vpop.f32.mrb[0].mxu0
      %v943 = vadd.f32 %v568, %v942
      %v944 = vpop.f32.mrb[0].mxu0
      %945 = vmatprep.mubr.f32.mxu0 0.0
      %v946 = vand.u32 %v374, 4294901760
      %947 = vmatmul.mubr.f32.gmra.mrb[0].mxu0 %v946
      %v948 = vpop.f32.mrb[0].mxu0
      %v949 = vadd.f32 %v578, %v948
      %v950 = vpop.f32.mrb[0].mxu0
      %951 = vmatprep.mubr.f32.mxu0 0.0
      %v952 = vand.u32 %v377, 4294901760
      %953 = vmatmul.mubr.f32.gmra.mrb[0].mxu0 %v952
      %v954 = vpop.f32.mrb[0].mxu0
      %v955 = vadd.f32 %v588, %v954
      %v956 = vpop.f32.mrb[0].mxu0
      %957 = vmatprep.mubr.f32.mxu0 0.0
      %v958 = vand.u32 %v380, 4294901760
      %959 = vmatmul.mubr.f32.gmra.mrb[0].mxu0 %v958
      %v960 = vpop.f32.mrb[0].mxu0
      %v961 = vadd.f32 %v598, %v960
      %v962 = vpop.f32.mrb[0].mxu0
      %963 = vmatprep.mubr.f32.mxu0 0.0
      %v964 = vand.u32 %v383, 4294901760
      %965 = vmatmul.mubr.f32.gmra.mrb[0].mxu0 %v964
      %v966 = vpop.f32.mrb[0].mxu0
      %v967 = vadd.f32 %v608, %v966
      %v968 = vpop.f32.mrb[0].mxu0
      %969 = vmatprep.mubr.f32.mxu0 0.0
      %v970 = vand.u32 %v386, 4294901760
      %971 = vmatmul.mubr.f32.gmra.mrb[0].mxu0 %v970
      %v972 = vpop.f32.mrb[0].mxu0
      %v973 = vadd.f32 %v618, %v972
      %v974 = vpop.f32.mrb[0].mxu0
      %975 = vmatprep.mubr.f32.mxu0 0.0
      %v976 = vand.u32 %v389, 4294901760
      %977 = vmatmul.mubr.f32.gmra.mrb[0].mxu0 %v976
      %v978 = vpop.f32.mrb[0].mxu0
      %v979 = vadd.f32 %v628, %v978
      %v980 = vpop.f32.mrb[0].mxu0
      %981 = vmatprep.mubr.f32.mxu0 0.0
      %v982 = vand.u32 %v392, 4294901760
      %983 = vmatmul.mubr.f32.gmra.mrb[0].mxu0 %v982
      %v984 = vpop.f32.mrb[0].mxu0
      %v985 = vadd.f32 %v638, %v984
      %v986 = vpop.f32.mrb[0].mxu0
      %987 = vmatprep.mubr.f32.mxu0 0.0
      %v988 = vand.u32 %v395, 4294901760
      %989 = vmatmul.mubr.f32.gmra.mrb[0].mxu0 %v988
      %v990 = vpop.f32.mrb[0].mxu0
      %v991 = vadd.f32 %v648, %v990
      %v992 = vpop.f32.mrb[0].mxu0
      %993 = vmatprep.mubr.f32.mxu0 0.0
      %v994 = vand.u32 %v398, 4294901760
      %995 = vmatmul.mubr.f32.gmra.mrb[0].mxu0 %v994
      %v996 = vpop.f32.mrb[0].mxu0
      %v997 = vadd.f32 %v658, %v996
      %v998 = vpop.f32.mrb[0].mxu0
      %999 = vmatprep.mubr.f32.mxu0 0.0
      %v1000 = vand.u32 %v401, 4294901760
      %1001 = vmatmul.mubr.f32.gmra.mrb[0].mxu0 %v1000
      %v1002 = vpop.f32.mrb[0].mxu0
      %v1003 = vadd.f32 %v668, %v1002
      %v1004 = vpop.f32.mrb[0].mxu0
      %1005 = vmatprep.mubr.f32.mxu0 0.0
      %v1006 = vand.u32 %v404, 4294901760
      %1007 = vmatmul.mubr.f32.gmra.mrb[0].mxu0 %v1006
      %v1008 = vpop.f32.mrb[0].mxu0
      %v1009 = vadd.f32 %v678, %v1008
      %v1010 = vpop.f32.mrb[0].mxu0
      %1011 = vmatprep.mubr.f32.mxu0 0.0
      %v1012 = vand.u32 %v407, 4294901760
      %1013 = vmatmul.mubr.f32.gmra.mrb[0].mxu0 %v1012
      %v1014 = vpop.f32.mrb[0].mxu0
      %v1015 = vadd.f32 %v688, %v1014
      %v1016 = vpop.f32.mrb[0].mxu0
      %1017 = vmatprep.mubr.f32.mxu0 0.0
      %v1018 = vand.u32 %v410, 4294901760
      %1019 = vmatmul.mubr.f32.gmra.mrb[0].mxu0 %v1018
      %v1020 = vpop.f32.mrb[0].mxu0
      %v1021 = vadd.f32 %v698, %v1020
      %v1022 = vpop.f32.mrb[0].mxu0
      %1023 = vmatprep.mubr.f32.mxu0 0.0
      %v1024 = vand.u32 %v413, 4294901760
      %1025 = vmatmul.mubr.f32.gmra.mrb[0].mxu0 %v1024
      %v1026 = vpop.f32.mrb[0].mxu0
      %v1027 = vadd.f32 %v708, %v1026
      %v1028 = vpop.f32.mrb[0].mxu0
      %1029 = vmatprep.mubr.f32.mxu0 0.0
      %v1030 = vand.u32 %v416, 4294901760
      %1031 = vmatmul.mubr.f32.gmra.mrb[0].mxu0 %v1030
      %v1032 = vpop.f32.mrb[0].mxu0
      %v1033 = vadd.f32 %v718, %v1032
      %v1034 = vpop.f32.mrb[0].mxu0
      %1035 = vmatprep.mubr.f32.mxu0 0.0
      %v1036 = vand.u32 %v419, 4294901760
      %1037 = vmatmul.mubr.f32.gmra.mrb[0].mxu0 %v1036
      %v1038 = vpop.f32.mrb[0].mxu0
      %v1039 = vadd.f32 %v728, %v1038
      %v1040 = vpop.f32.mrb[0].mxu0
      %1041 = vmatprep.mubr.f32.mxu0 0.0
      %v1042 = vand.u32 %v422, 4294901760
      %1043 = vmatmul.mubr.f32.gmra.mrb[0].mxu0 %v1042
      %v1044 = vpop.f32.mrb[0].mxu0
      %v1045 = vadd.f32 %v738, %v1044
      %v1046 = vpop.f32.mrb[0].mxu0
      %1047 = vmatprep.mubr.f32.mxu0 0.0
      %v1048 = vand.u32 %v425, 4294901760
      %1049 = vmatmul.mubr.f32.gmra.mrb[0].mxu0 %v1048
      %v1050 = vpop.f32.mrb[0].mxu0
      %v1051 = vadd.f32 %v748, %v1050
      %v1052 = vpop.f32.mrb[0].mxu0
      %1053 = vmatprep.mubr.f32.mxu0 0.0
      %v1054 = vand.u32 %v428, 4294901760
      %1055 = vmatmul.mubr.f32.gmra.mrb[0].mxu0 %v1054
      %v1056 = vpop.f32.mrb[0].mxu0
      %v1057 = vadd.f32 %v758, %v1056
      %v1058 = vpop.f32.mrb[0].mxu0
      %1059 = vmatprep.mubr.f32.mxu0 0.0
      %v1060 = vand.u32 %v431, 4294901760
      %1061 = vmatmul.mubr.f32.gmra.mrb[0].mxu0 %v1060
      %v1062 = vpop.f32.mrb[0].mxu0
      %v1063 = vadd.f32 %v768, %v1062
      %v1064 = vpop.f32.mrb[0].mxu0
      %1065 = vmatprep.mubr.f32.mxu0 0.0
      %v1066 = vand.u32 %v434, 4294901760
      %1067 = vmatmul.mubr.f32.gmra.mrb[0].mxu0 %v1066
      %v1068 = vpop.f32.mrb[0].mxu0
      %v1069 = vadd.f32 %v778, %v1068
      %v1070 = vpop.f32.mrb[0].mxu0
      %1071 = vmatprep.mubr.f32.mxu0 0.0
      %v1072 = vand.u32 %v437, 4294901760
      %1073 = vmatmul.mubr.f32.gmra.mrb[0].mxu0 %v1072
      %v1074 = vpop.f32.mrb[0].mxu0
      %v1075 = vadd.f32 %v788, %v1074
      %v1076 = vpop.f32.mrb[0].mxu0
      %1077 = vmatprep.mubr.f32.mxu0 0.0
      %v1078 = vand.u32 %v440, 4294901760
      %1079 = vmatmul.mubr.f32.gmra.mrb[0].mxu0 %v1078
      %v1080 = vpop.f32.mrb[0].mxu0
      %v1081 = vadd.f32 %v798, %v1080
      %v1082 = vpop.f32.mrb[0].mxu0
      %1083 = vmatprep.mubr.f32.mxu0 0.0
      %v1084 = vand.u32 %v443, 4294901760
      %1085 = vmatmul.mubr.f32.gmra.mrb[0].mxu0 %v1084
      %v1086 = vpop.f32.mrb[0].mxu0
      %v1087 = vadd.f32 %v808, %v1086
      %v1088 = vpop.f32.mrb[0].mxu0
      %1089 = vmatprep.mubr.f32.mxu0 0.0
      %v1090 = vand.u32 %v446, 4294901760
      %1091 = vmatmul.mubr.f32.gmra.mrb[0].mxu0 %v1090
      %v1092 = vpop.f32.mrb[0].mxu0
      %v1093 = vadd.f32 %v818, %v1092
      %v1094 = vpop.f32.mrb[0].mxu0
      %1095 = vmatprep.mubr.f32.mxu0 0.0
      %v1096 = vand.u32 %v449, 4294901760
      %1097 = vmatmul.mubr.f32.gmra.mrb[0].mxu0 %v1096
      %v1098 = vpop.f32.mrb[0].mxu0
      %v1099 = vadd.f32 %v828, %v1098
      %v1100 = vpop.f32.mrb[0].mxu0
      %1101 = vmatprep.mubr.f32.mxu0 0.0
      %v1102 = vand.u32 %v452, 4294901760
      %1103 = vmatmul.mubr.f32.gmra.mrb[0].mxu0 %v1102
      %v1104 = vpop.f32.mrb[0].mxu0
      %v1105 = vadd.f32 %v838, %v1104
      %v1106 = vpop.f32.mrb[0].mxu0
      %1107 = vdwg.mxu0
      %1108 = vmatprep.subr.mxu0 0.0
      %v1109 = vand.u32 %v355, 4294901760
      %v1110 = vsub.f32 %v355, %v1109
      %1111 = vmatpush1.msra.mxu0 %v1110
      %1112 = vmatprep.subr.mxu0 0.0
      %v1113 = vand.u32 %v356, 4294901760
      %v1114 = vsub.f32 %v356, %v1113
      %1115 = vmatpush1.msra.mxu0 %v1114
      %1116 = vmatprep.subr.mxu0 0.0
      %1117 = vmatpush1.msra.mxu0 0.0
      %1118 = vmatprep.subr.mxu0 0.0
      %1119 = vmatpush1.msra.mxu0 0.0
      %1120 = vmatprep.subr.mxu0 0.0
      %1121 = vmatpush1.msra.mxu0 0.0
      %1122 = vmatprep.subr.mxu0 0.0
      %1123 = vmatpush1.msra.mxu0 0.0
      %1124 = vmatprep.subr.mxu0 0.0
      %1125 = vmatpush1.msra.mxu0 0.0
      %1126 = vmatprep.subr.mxu0 0.0
      %1127 = vmatpush1.msra.mxu0 0.0
      %1128 = vmatprep.subr.mxu0 0.0
      %1129 = vmatpush1.msra.mxu0 0.0
      %1130 = vmatprep.subr.mxu0 0.0
      %1131 = vmatpush1.msra.mxu0 0.0
      %1132 = vmatprep.subr.mxu0 0.0
      %1133 = vmatpush1.msra.mxu0 0.0
      %1134 = vmatprep.subr.mxu0 0.0
      %1135 = vmatpush1.msra.mxu0 0.0
      %1136 = vmatprep.subr.mxu0 0.0
      %1137 = vmatpush1.msra.mxu0 0.0
      %1138 = vmatprep.subr.mxu0 0.0
      %1139 = vmatpush1.msra.mxu0 0.0
      %1140 = vmatprep.subr.mxu0 0.0
      %1141 = vmatpush1.msra.mxu0 0.0
      %1142 = vmatprep.subr.mxu0 0.0
      %1143 = vmatpush1.msra.mxu0 0.0
      %1144 = vmatprep.subr.mxu0 0.0
      %1145 = vmatpush1.msra.mxu0 0.0
      %1146 = vmatprep.subr.mxu0 0.0
      %1147 = vmatpush1.msra.mxu0 0.0
      %1148 = vmatprep.subr.mxu0 0.0
      %1149 = vmatpush1.msra.mxu0 0.0
      %1150 = vmatprep.subr.mxu0 0.0
      %1151 = vmatpush1.msra.mxu0 0.0
      %1152 = vmatprep.subr.mxu0 0.0
      %1153 = vmatpush1.msra.mxu0 0.0
      %1154 = vmatprep.subr.mxu0 0.0
      %1155 = vmatpush1.msra.mxu0 0.0
      %1156 = vmatprep.subr.mxu0 0.0
      %1157 = vmatpush1.msra.mxu0 0.0
      %1158 = vmatprep.subr.mxu0 0.0
      %1159 = vmatpush1.msra.mxu0 0.0
      %1160 = vmatprep.subr.mxu0 0.0
      %1161 = vmatpush1.msra.mxu0 0.0
      %1162 = vmatprep.subr.mxu0 0.0
      %1163 = vmatpush1.msra.mxu0 0.0
      %1164 = vmatprep.subr.mxu0 0.0
      %1165 = vmatpush1.msra.mxu0 0.0
      %1166 = vmatprep.subr.mxu0 0.0
      %1167 = vmatpush1.msra.mxu0 0.0
      %1168 = vmatprep.subr.mxu0 0.0
      %1169 = vmatpush1.msra.mxu0 0.0
      %1170 = vmatprep.subr.mxu0 0.0
      %1171 = vmatpush1.msra.mxu0 0.0
      %1172 = vmatprep.subr.mxu0 0.0
      %1173 = vmatpush1.msra.mxu0 0.0
      %1174 = vmatprep.subr.mxu0 0.0
      %1175 = vmatpush1.msra.mxu0 0.0
      %1176 = vmatprep.mubr.f32.mxu0 0.0
      %v1177 = vand.u32 %v359, 4294901760
      %v1178 = vsub.f32 %v359, %v1177
      %1179 = vmatmul.mubr.f32.gmra.mrb[0].mxu0 %v1178
      %v1180 = vpop.f32.mrb[0].mxu0
      %v1181 = vadd.f32 %v919, %v1180
      %v1182 = vpop.f32.mrb[0].mxu0
      %1183 = vmatprep.mubr.f32.mxu0 0.0
      %v1184 = vand.u32 %v362, 4294901760
      %v1185 = vsub.f32 %v362, %v1184
      %1186 = vmatmul.mubr.f32.gmra.mrb[0].mxu0 %v1185
      %v1187 = vpop.f32.mrb[0].mxu0
      %v1188 = vadd.f32 %v925, %v1187
      %v1189 = vpop.f32.mrb[0].mxu0
      %1190 = vmatprep.mubr.f32.mxu0 0.0
      %v1191 = vand.u32 %v365, 4294901760
      %v1192 = vsub.f32 %v365, %v1191
      %1193 = vmatmul.mubr.f32.gmra.mrb[0].mxu0 %v1192
      %v1194 = vpop.f32.mrb[0].mxu0
      %v1195 = vadd.f32 %v931, %v1194
      %v1196 = vpop.f32.mrb[0].mxu0
      %1197 = vmatprep.mubr.f32.mxu0 0.0
      %v1198 = vand.u32 %v368, 4294901760
      %v1199 = vsub.f32 %v368, %v1198
      %1200 = vmatmul.mubr.f32.gmra.mrb[0].mxu0 %v1199
      %v1201 = vpop.f32.mrb[0].mxu0
      %v1202 = vadd.f32 %v937, %v1201
      %v1203 = vpop.f32.mrb[0].mxu0
      %1204 = vmatprep.mubr.f32.mxu0 0.0
      %v1205 = vand.u32 %v371, 4294901760
      %v1206 = vsub.f32 %v371, %v1205
      %1207 = vmatmul.mubr.f32.gmra.mrb[0].mxu0 %v1206
      %v1208 = vpop.f32.mrb[0].mxu0
      %v1209 = vadd.f32 %v943, %v1208
      %v1210 = vpop.f32.mrb[0].mxu0
      %1211 = vmatprep.mubr.f32.mxu0 0.0
      %v1212 = vand.u32 %v374, 4294901760
      %v1213 = vsub.f32 %v374, %v1212
      %1214 = vmatmul.mubr.f32.gmra.mrb[0].mxu0 %v1213
      %v1215 = vpop.f32.mrb[0].mxu0
      %v1216 = vadd.f32 %v949, %v1215
      %v1217 = vpop.f32.mrb[0].mxu0
      %1218 = vmatprep.mubr.f32.mxu0 0.0
      %v1219 = vand.u32 %v377, 4294901760
      %v1220 = vsub.f32 %v377, %v1219
      %1221 = vmatmul.mubr.f32.gmra.mrb[0].mxu0 %v1220
      %v1222 = vpop.f32.mrb[0].mxu0
      %v1223 = vadd.f32 %v955, %v1222
      %v1224 = vpop.f32.mrb[0].mxu0
      %1225 = vmatprep.mubr.f32.mxu0 0.0
      %v1226 = vand.u32 %v380, 4294901760
      %v1227 = vsub.f32 %v380, %v1226
      %1228 = vmatmul.mubr.f32.gmra.mrb[0].mxu0 %v1227
      %v1229 = vpop.f32.mrb[0].mxu0
      %v1230 = vadd.f32 %v961, %v1229
      %v1231 = vpop.f32.mrb[0].mxu0
      %1232 = vmatprep.mubr.f32.mxu0 0.0
      %v1233 = vand.u32 %v383, 4294901760
      %v1234 = vsub.f32 %v383, %v1233
      %1235 = vmatmul.mubr.f32.gmra.mrb[0].mxu0 %v1234
      %v1236 = vpop.f32.mrb[0].mxu0
      %v1237 = vadd.f32 %v967, %v1236
      %v1238 = vpop.f32.mrb[0].mxu0
      %1239 = vmatprep.mubr.f32.mxu0 0.0
      %v1240 = vand.u32 %v386, 4294901760
      %v1241 = vsub.f32 %v386, %v1240
      %1242 = vmatmul.mubr.f32.gmra.mrb[0].mxu0 %v1241
      %v1243 = vpop.f32.mrb[0].mxu0
      %v1244 = vadd.f32 %v973, %v1243
      %v1245 = vpop.f32.mrb[0].mxu0
      %1246 = vmatprep.mubr.f32.mxu0 0.0
      %v1247 = vand.u32 %v389, 4294901760
      %v1248 = vsub.f32 %v389, %v1247
      %1249 = vmatmul.mubr.f32.gmra.mrb[0].mxu0 %v1248
      %v1250 = vpop.f32.mrb[0].mxu0
      %v1251 = vadd.f32 %v979, %v1250
      %v1252 = vpop.f32.mrb[0].mxu0
      %1253 = vmatprep.mubr.f32.mxu0 0.0
      %v1254 = vand.u32 %v392, 4294901760
      %v1255 = vsub.f32 %v392, %v1254
      %1256 = vmatmul.mubr.f32.gmra.mrb[0].mxu0 %v1255
      %v1257 = vpop.f32.mrb[0].mxu0
      %v1258 = vadd.f32 %v985, %v1257
      %v1259 = vpop.f32.mrb[0].mxu0
      %1260 = vmatprep.mubr.f32.mxu0 0.0
      %v1261 = vand.u32 %v395, 4294901760
      %v1262 = vsub.f32 %v395, %v1261
      %1263 = vmatmul.mubr.f32.gmra.mrb[0].mxu0 %v1262
      %v1264 = vpop.f32.mrb[0].mxu0
      %v1265 = vadd.f32 %v991, %v1264
      %v1266 = vpop.f32.mrb[0].mxu0
      %1267 = vmatprep.mubr.f32.mxu0 0.0
      %v1268 = vand.u32 %v398, 4294901760
      %v1269 = vsub.f32 %v398, %v1268
      %1270 = vmatmul.mubr.f32.gmra.mrb[0].mxu0 %v1269
      %v1271 = vpop.f32.mrb[0].mxu0
      %v1272 = vadd.f32 %v997, %v1271
      %v1273 = vpop.f32.mrb[0].mxu0
      %1274 = vmatprep.mubr.f32.mxu0 0.0
      %v1275 = vand.u32 %v401, 4294901760
      %v1276 = vsub.f32 %v401, %v1275
      %1277 = vmatmul.mubr.f32.gmra.mrb[0].mxu0 %v1276
      %v1278 = vpop.f32.mrb[0].mxu0
      %v1279 = vadd.f32 %v1003, %v1278
      %v1280 = vpop.f32.mrb[0].mxu0
      %1281 = vmatprep.mubr.f32.mxu0 0.0
      %v1282 = vand.u32 %v404, 4294901760
      %v1283 = vsub.f32 %v404, %v1282
      %1284 = vmatmul.mubr.f32.gmra.mrb[0].mxu0 %v1283
      %v1285 = vpop.f32.mrb[0].mxu0
      %v1286 = vadd.f32 %v1009, %v1285
      %v1287 = vpop.f32.mrb[0].mxu0
      %1288 = vmatprep.mubr.f32.mxu0 0.0
      %v1289 = vand.u32 %v407, 4294901760
      %v1290 = vsub.f32 %v407, %v1289
      %1291 = vmatmul.mubr.f32.gmra.mrb[0].mxu0 %v1290
      %v1292 = vpop.f32.mrb[0].mxu0
      %v1293 = vadd.f32 %v1015, %v1292
      %v1294 = vpop.f32.mrb[0].mxu0
      %1295 = vmatprep.mubr.f32.mxu0 0.0
      %v1296 = vand.u32 %v410, 4294901760
      %v1297 = vsub.f32 %v410, %v1296
      %1298 = vmatmul.mubr.f32.gmra.mrb[0].mxu0 %v1297
      %v1299 = vpop.f32.mrb[0].mxu0
      %v1300 = vadd.f32 %v1021, %v1299
      %v1301 = vpop.f32.mrb[0].mxu0
      %1302 = vmatprep.mubr.f32.mxu0 0.0
      %v1303 = vand.u32 %v413, 4294901760
      %v1304 = vsub.f32 %v413, %v1303
      %1305 = vmatmul.mubr.f32.gmra.mrb[0].mxu0 %v1304
      %v1306 = vpop.f32.mrb[0].mxu0
      %v1307 = vadd.f32 %v1027, %v1306
      %v1308 = vpop.f32.mrb[0].mxu0
      %1309 = vmatprep.mubr.f32.mxu0 0.0
      %v1310 = vand.u32 %v416, 4294901760
      %v1311 = vsub.f32 %v416, %v1310
      %1312 = vmatmul.mubr.f32.gmra.mrb[0].mxu0 %v1311
      %v1313 = vpop.f32.mrb[0].mxu0
      %v1314 = vadd.f32 %v1033, %v1313
      %v1315 = vpop.f32.mrb[0].mxu0
      %1316 = vmatprep.mubr.f32.mxu0 0.0
      %v1317 = vand.u32 %v419, 4294901760
      %v1318 = vsub.f32 %v419, %v1317
      %1319 = vmatmul.mubr.f32.gmra.mrb[0].mxu0 %v1318
      %v1320 = vpop.f32.mrb[0].mxu0
      %v1321 = vadd.f32 %v1039, %v1320
      %v1322 = vpop.f32.mrb[0].mxu0
      %1323 = vmatprep.mubr.f32.mxu0 0.0
      %v1324 = vand.u32 %v422, 4294901760
      %v1325 = vsub.f32 %v422, %v1324
      %1326 = vmatmul.mubr.f32.gmra.mrb[0].mxu0 %v1325
      %v1327 = vpop.f32.mrb[0].mxu0
      %v1328 = vadd.f32 %v1045, %v1327
      %v1329 = vpop.f32.mrb[0].mxu0
      %1330 = vmatprep.mubr.f32.mxu0 0.0
      %v1331 = vand.u32 %v425, 4294901760
      %v1332 = vsub.f32 %v425, %v1331
      %1333 = vmatmul.mubr.f32.gmra.mrb[0].mxu0 %v1332
      %v1334 = vpop.f32.mrb[0].mxu0
      %v1335 = vadd.f32 %v1051, %v1334
      %v1336 = vpop.f32.mrb[0].mxu0
      %1337 = vmatprep.mubr.f32.mxu0 0.0
      %v1338 = vand.u32 %v428, 4294901760
      %v1339 = vsub.f32 %v428, %v1338
      %1340 = vmatmul.mubr.f32.gmra.mrb[0].mxu0 %v1339
      %v1341 = vpop.f32.mrb[0].mxu0
      %v1342 = vadd.f32 %v1057, %v1341
      %v1343 = vpop.f32.mrb[0].mxu0
      %1344 = vmatprep.mubr.f32.mxu0 0.0
      %v1345 = vand.u32 %v431, 4294901760
      %v1346 = vsub.f32 %v431, %v1345
      %1347 = vmatmul.mubr.f32.gmra.mrb[0].mxu0 %v1346
      %v1348 = vpop.f32.mrb[0].mxu0
      %v1349 = vadd.f32 %v1063, %v1348
      %v1350 = vpop.f32.mrb[0].mxu0
      %1351 = vmatprep.mubr.f32.mxu0 0.0
      %v1352 = vand.u32 %v434, 4294901760
      %v1353 = vsub.f32 %v434, %v1352
      %1354 = vmatmul.mubr.f32.gmra.mrb[0].mxu0 %v1353
      %v1355 = vpop.f32.mrb[0].mxu0
      %v1356 = vadd.f32 %v1069, %v1355
      %v1357 = vpop.f32.mrb[0].mxu0
      %1358 = vmatprep.mubr.f32.mxu0 0.0
      %v1359 = vand.u32 %v437, 4294901760
      %v1360 = vsub.f32 %v437, %v1359
      %1361 = vmatmul.mubr.f32.gmra.mrb[0].mxu0 %v1360
      %v1362 = vpop.f32.mrb[0].mxu0
      %v1363 = vadd.f32 %v1075, %v1362
      %v1364 = vpop.f32.mrb[0].mxu0
      %1365 = vmatprep.mubr.f32.mxu0 0.0
      %v1366 = vand.u32 %v440, 4294901760
      %v1367 = vsub.f32 %v440, %v1366
      %1368 = vmatmul.mubr.f32.gmra.mrb[0].mxu0 %v1367
      %v1369 = vpop.f32.mrb[0].mxu0
      %v1370 = vadd.f32 %v1081, %v1369
      %v1371 = vpop.f32.mrb[0].mxu0
      %1372 = vmatprep.mubr.f32.mxu0 0.0
      %v1373 = vand.u32 %v443, 4294901760
      %v1374 = vsub.f32 %v443, %v1373
      %1375 = vmatmul.mubr.f32.gmra.mrb[0].mxu0 %v1374
      %v1376 = vpop.f32.mrb[0].mxu0
      %v1377 = vadd.f32 %v1087, %v1376
      %v1378 = vpop.f32.mrb[0].mxu0
      %1379 = vmatprep.mubr.f32.mxu0 0.0
      %v1380 = vand.u32 %v446, 4294901760
      %v1381 = vsub.f32 %v446, %v1380
      %1382 = vmatmul.mubr.f32.gmra.mrb[0].mxu0 %v1381
      %v1383 = vpop.f32.mrb[0].mxu0
      %v1384 = vadd.f32 %v1093, %v1383
      %v1385 = vpop.f32.mrb[0].mxu0
      %1386 = vmatprep.mubr.f32.mxu0 0.0
      %v1387 = vand.u32 %v449, 4294901760
      %v1388 = vsub.f32 %v449, %v1387
      %1389 = vmatmul.mubr.f32.gmra.mrb[0].mxu0 %v1388
      %v1390 = vpop.f32.mrb[0].mxu0
      %v1391 = vadd.f32 %v1099, %v1390
      %v1392 = vpop.f32.mrb[0].mxu0
      %1393 = vmatprep.mubr.f32.mxu0 0.0
      %v1394 = vand.u32 %v452, 4294901760
      %v1395 = vsub.f32 %v452, %v1394
      %1396 = vmatmul.mubr.f32.gmra.mrb[0].mxu0 %v1395
      %v1397 = vpop.f32.mrb[0].mxu0
      %v1398 = vadd.f32 %v1105, %v1397
      %v1399 = vpop.f32.mrb[0].mxu0
      %1400 = vdwg.mxu0
      %1401 = vmatprep.subr.mxu0 0.0
      %v1402 = vand.u32 %v355, 4294901760
      %1403 = vmatpush1.msra.mxu0 %v1402
      %1404 = vmatprep.subr.mxu0 0.0
      %v1405 = vand.u32 %v356, 4294901760
      %1406 = vmatpush1.msra.mxu0 %v1405
      %1407 = vmatprep.subr.mxu0 0.0
      %1408 = vmatpush1.msra.mxu0 0.0
      %1409 = vmatprep.subr.mxu0 0.0
      %1410 = vmatpush1.msra.mxu0 0.0
      %1411 = vmatprep.subr.mxu0 0.0
      %1412 = vmatpush1.msra.mxu0 0.0
      %1413 = vmatprep.subr.mxu0 0.0
      %1414 = vmatpush1.msra.mxu0 0.0
      %1415 = vmatprep.subr.mxu0 0.0
      %1416 = vmatpush1.msra.mxu0 0.0
      %1417 = vmatprep.subr.mxu0 0.0
      %1418 = vmatpush1.msra.mxu0 0.0
      %1419 = vmatprep.subr.mxu0 0.0
      %1420 = vmatpush1.msra.mxu0 0.0
      %1421 = vmatprep.subr.mxu0 0.0
      %1422 = vmatpush1.msra.mxu0 0.0
      %1423 = vmatprep.subr.mxu0 0.0
      %1424 = vmatpush1.msra.mxu0 0.0
      %1425 = vmatprep.subr.mxu0 0.0
      %1426 = vmatpush1.msra.mxu0 0.0
      %1427 = vmatprep.subr.mxu0 0.0
      %1428 = vmatpush1.msra.mxu0 0.0
      %1429 = vmatprep.subr.mxu0 0.0
      %1430 = vmatpush1.msra.mxu0 0.0
      %1431 = vmatprep.subr.mxu0 0.0
      %1432 = vmatpush1.msra.mxu0 0.0
      %1433 = vmatprep.subr.mxu0 0.0
      %1434 = vmatpush1.msra.mxu0 0.0
      %1435 = vmatprep.subr.mxu0 0.0
      %1436 = vmatpush1.msra.mxu0 0.0
      %1437 = vmatprep.subr.mxu0 0.0
      %1438 = vmatpush1.msra.mxu0 0.0
      %1439 = vmatprep.subr.mxu0 0.0
      %1440 = vmatpush1.msra.mxu0 0.0
      %1441 = vmatprep.subr.mxu0 0.0
      %1442 = vmatpush1.msra.mxu0 0.0
      %1443 = vmatprep.subr.mxu0 0.0
      %1444 = vmatpush1.msra.mxu0 0.0
      %1445 = vmatprep.subr.mxu0 0.0
      %1446 = vmatpush1.msra.mxu0 0.0
      %1447 = vmatprep.subr.mxu0 0.0
      %1448 = vmatpush1.msra.mxu0 0.0
      %1449 = vmatprep.subr.mxu0 0.0
      %1450 = vmatpush1.msra.mxu0 0.0
      %1451 = vmatprep.subr.mxu0 0.0
      %1452 = vmatpush1.msra.mxu0 0.0
      %1453 = vmatprep.subr.mxu0 0.0
      %1454 = vmatpush1.msra.mxu0 0.0
      %1455 = vmatprep.subr.mxu0 0.0
      %1456 = vmatpush1.msra.mxu0 0.0
      %1457 = vmatprep.subr.mxu0 0.0
      %1458 = vmatpush1.msra.mxu0 0.0
      %1459 = vmatprep.subr.mxu0 0.0
      %1460 = vmatpush1.msra.mxu0 0.0
      %1461 = vmatprep.subr.mxu0 0.0
      %1462 = vmatpush1.msra.mxu0 0.0
      %1463 = vmatprep.subr.mxu0 0.0
      %1464 = vmatpush1.msra.mxu0 0.0
      %1465 = vmatprep.subr.mxu0 0.0
      %1466 = vmatpush1.msra.mxu0 0.0
      %1467 = vmatprep.mubr.f32.mxu0 0.0
      %v1468 = vand.u32 %v359, 4294901760
      %v1469 = vsub.f32 %v359, %v1468
      %v1470 = vand.u32 %v1469, 4294901760
      %1471 = vmatmul.mubr.f32.gmra.mrb[0].mxu0 %v1470
      %v1472 = vpop.f32.mrb[0].mxu0
      %v1473 = vadd.f32 %v1181, %v1472
      %v1474 = vpop.f32.mrb[0].mxu0
      %1475 = vmatprep.mubr.f32.mxu0 0.0
      %v1476 = vand.u32 %v362, 4294901760
      %v1477 = vsub.f32 %v362, %v1476
      %v1478 = vand.u32 %v1477, 4294901760
      %1479 = vmatmul.mubr.f32.gmra.mrb[0].mxu0 %v1478
      %v1480 = vpop.f32.mrb[0].mxu0
      %v1481 = vadd.f32 %v1188, %v1480
      %v1482 = vpop.f32.mrb[0].mxu0
      %1483 = vmatprep.mubr.f32.mxu0 0.0
      %v1484 = vand.u32 %v365, 4294901760
      %v1485 = vsub.f32 %v365, %v1484
      %v1486 = vand.u32 %v1485, 4294901760
      %1487 = vmatmul.mubr.f32.gmra.mrb[0].mxu0 %v1486
      %v1488 = vpop.f32.mrb[0].mxu0
      %v1489 = vadd.f32 %v1195, %v1488
      %v1490 = vpop.f32.mrb[0].mxu0
      %1491 = vmatprep.mubr.f32.mxu0 0.0
      %v1492 = vand.u32 %v368, 4294901760
      %v1493 = vsub.f32 %v368, %v1492
      %v1494 = vand.u32 %v1493, 4294901760
      %1495 = vmatmul.mubr.f32.gmra.mrb[0].mxu0 %v1494
      %v1496 = vpop.f32.mrb[0].mxu0
      %v1497 = vadd.f32 %v1202, %v1496
      %v1498 = vpop.f32.mrb[0].mxu0
      %1499 = vmatprep.mubr.f32.mxu0 0.0
      %v1500 = vand.u32 %v371, 4294901760
      %v1501 = vsub.f32 %v371, %v1500
      %v1502 = vand.u32 %v1501, 4294901760
      %1503 = vmatmul.mubr.f32.gmra.mrb[0].mxu0 %v1502
      %v1504 = vpop.f32.mrb[0].mxu0
      %v1505 = vadd.f32 %v1209, %v1504
      %v1506 = vpop.f32.mrb[0].mxu0
      %1507 = vmatprep.mubr.f32.mxu0 0.0
      %v1508 = vand.u32 %v374, 4294901760
      %v1509 = vsub.f32 %v374, %v1508
      %v1510 = vand.u32 %v1509, 4294901760
      %1511 = vmatmul.mubr.f32.gmra.mrb[0].mxu0 %v1510
      %v1512 = vpop.f32.mrb[0].mxu0
      %v1513 = vadd.f32 %v1216, %v1512
      %v1514 = vpop.f32.mrb[0].mxu0
      %1515 = vmatprep.mubr.f32.mxu0 0.0
      %v1516 = vand.u32 %v377, 4294901760
      %v1517 = vsub.f32 %v377, %v1516
      %v1518 = vand.u32 %v1517, 4294901760
      %1519 = vmatmul.mubr.f32.gmra.mrb[0].mxu0 %v1518
      %v1520 = vpop.f32.mrb[0].mxu0
      %v1521 = vadd.f32 %v1223, %v1520
      %v1522 = vpop.f32.mrb[0].mxu0
      %1523 = vmatprep.mubr.f32.mxu0 0.0
      %v1524 = vand.u32 %v380, 4294901760
      %v1525 = vsub.f32 %v380, %v1524
      %v1526 = vand.u32 %v1525, 4294901760
      %1527 = vmatmul.mubr.f32.gmra.mrb[0].mxu0 %v1526
      %v1528 = vpop.f32.mrb[0].mxu0
      %v1529 = vadd.f32 %v1230, %v1528
      %v1530 = vpop.f32.mrb[0].mxu0
      %1531 = vmatprep.mubr.f32.mxu0 0.0
      %v1532 = vand.u32 %v383, 4294901760
      %v1533 = vsub.f32 %v383, %v1532
      %v1534 = vand.u32 %v1533, 4294901760
      %1535 = vmatmul.mubr.f32.gmra.mrb[0].mxu0 %v1534
      %v1536 = vpop.f32.mrb[0].mxu0
      %v1537 = vadd.f32 %v1237, %v1536
      %v1538 = vpop.f32.mrb[0].mxu0
      %1539 = vmatprep.mubr.f32.mxu0 0.0
      %v1540 = vand.u32 %v386, 4294901760
      %v1541 = vsub.f32 %v386, %v1540
      %v1542 = vand.u32 %v1541, 4294901760
      %1543 = vmatmul.mubr.f32.gmra.mrb[0].mxu0 %v1542
      %v1544 = vpop.f32.mrb[0].mxu0
      %v1545 = vadd.f32 %v1244, %v1544
      %v1546 = vpop.f32.mrb[0].mxu0
      %1547 = vmatprep.mubr.f32.mxu0 0.0
      %v1548 = vand.u32 %v389, 4294901760
      %v1549 = vsub.f32 %v389, %v1548
      %v1550 = vand.u32 %v1549, 4294901760
      %1551 = vmatmul.mubr.f32.gmra.mrb[0].mxu0 %v1550
      %v1552 = vpop.f32.mrb[0].mxu0
      %v1553 = vadd.f32 %v1251, %v1552
      %v1554 = vpop.f32.mrb[0].mxu0
      %1555 = vmatprep.mubr.f32.mxu0 0.0
      %v1556 = vand.u32 %v392, 4294901760
      %v1557 = vsub.f32 %v392, %v1556
      %v1558 = vand.u32 %v1557, 4294901760
      %1559 = vmatmul.mubr.f32.gmra.mrb[0].mxu0 %v1558
      %v1560 = vpop.f32.mrb[0].mxu0
      %v1561 = vadd.f32 %v1258, %v1560
      %v1562 = vpop.f32.mrb[0].mxu0
      %1563 = vmatprep.mubr.f32.mxu0 0.0
      %v1564 = vand.u32 %v395, 4294901760
      %v1565 = vsub.f32 %v395, %v1564
      %v1566 = vand.u32 %v1565, 4294901760
      %1567 = vmatmul.mubr.f32.gmra.mrb[0].mxu0 %v1566
      %v1568 = vpop.f32.mrb[0].mxu0
      %v1569 = vadd.f32 %v1265, %v1568
      %v1570 = vpop.f32.mrb[0].mxu0
      %1571 = vmatprep.mubr.f32.mxu0 0.0
      %v1572 = vand.u32 %v398, 4294901760
      %v1573 = vsub.f32 %v398, %v1572
      %v1574 = vand.u32 %v1573, 4294901760
      %1575 = vmatmul.mubr.f32.gmra.mrb[0].mxu0 %v1574
      %v1576 = vpop.f32.mrb[0].mxu0
      %v1577 = vadd.f32 %v1272, %v1576
      %v1578 = vpop.f32.mrb[0].mxu0
      %1579 = vmatprep.mubr.f32.mxu0 0.0
      %v1580 = vand.u32 %v401, 4294901760
      %v1581 = vsub.f32 %v401, %v1580
      %v1582 = vand.u32 %v1581, 4294901760
      %1583 = vmatmul.mubr.f32.gmra.mrb[0].mxu0 %v1582
      %v1584 = vpop.f32.mrb[0].mxu0
      %v1585 = vadd.f32 %v1279, %v1584
      %v1586 = vpop.f32.mrb[0].mxu0
      %1587 = vmatprep.mubr.f32.mxu0 0.0
      %v1588 = vand.u32 %v404, 4294901760
      %v1589 = vsub.f32 %v404, %v1588
      %v1590 = vand.u32 %v1589, 4294901760
      %1591 = vmatmul.mubr.f32.gmra.mrb[0].mxu0 %v1590
      %v1592 = vpop.f32.mrb[0].mxu0
      %v1593 = vadd.f32 %v1286, %v1592
      %v1594 = vpop.f32.mrb[0].mxu0
      %1595 = vmatprep.mubr.f32.mxu0 0.0
      %v1596 = vand.u32 %v407, 4294901760
      %v1597 = vsub.f32 %v407, %v1596
      %v1598 = vand.u32 %v1597, 4294901760
      %1599 = vmatmul.mubr.f32.gmra.mrb[0].mxu0 %v1598
      %v1600 = vpop.f32.mrb[0].mxu0
      %v1601 = vadd.f32 %v1293, %v1600
      %v1602 = vpop.f32.mrb[0].mxu0
      %1603 = vmatprep.mubr.f32.mxu0 0.0
      %v1604 = vand.u32 %v410, 4294901760
      %v1605 = vsub.f32 %v410, %v1604
      %v1606 = vand.u32 %v1605, 4294901760
      %1607 = vmatmul.mubr.f32.gmra.mrb[0].mxu0 %v1606
      %v1608 = vpop.f32.mrb[0].mxu0
      %v1609 = vadd.f32 %v1300, %v1608
      %v1610 = vpop.f32.mrb[0].mxu0
      %1611 = vmatprep.mubr.f32.mxu0 0.0
      %v1612 = vand.u32 %v413, 4294901760
      %v1613 = vsub.f32 %v413, %v1612
      %v1614 = vand.u32 %v1613, 4294901760
      %1615 = vmatmul.mubr.f32.gmra.mrb[0].mxu0 %v1614
      %v1616 = vpop.f32.mrb[0].mxu0
      %v1617 = vadd.f32 %v1307, %v1616
      %v1618 = vpop.f32.mrb[0].mxu0
      %1619 = vmatprep.mubr.f32.mxu0 0.0
      %v1620 = vand.u32 %v416, 4294901760
      %v1621 = vsub.f32 %v416, %v1620
      %v1622 = vand.u32 %v1621, 4294901760
      %1623 = vmatmul.mubr.f32.gmra.mrb[0].mxu0 %v1622
      %v1624 = vpop.f32.mrb[0].mxu0
      %v1625 = vadd.f32 %v1314, %v1624
      %v1626 = vpop.f32.mrb[0].mxu0
      %1627 = vmatprep.mubr.f32.mxu0 0.0
      %v1628 = vand.u32 %v419, 4294901760
      %v1629 = vsub.f32 %v419, %v1628
      %v1630 = vand.u32 %v1629, 4294901760
      %1631 = vmatmul.mubr.f32.gmra.mrb[0].mxu0 %v1630
      %v1632 = vpop.f32.mrb[0].mxu0
      %v1633 = vadd.f32 %v1321, %v1632
      %v1634 = vpop.f32.mrb[0].mxu0
      %1635 = vmatprep.mubr.f32.mxu0 0.0
      %v1636 = vand.u32 %v422, 4294901760
      %v1637 = vsub.f32 %v422, %v1636
      %v1638 = vand.u32 %v1637, 4294901760
      %1639 = vmatmul.mubr.f32.gmra.mrb[0].mxu0 %v1638
      %v1640 = vpop.f32.mrb[0].mxu0
      %v1641 = vadd.f32 %v1328, %v1640
      %v1642 = vpop.f32.mrb[0].mxu0
      %1643 = vmatprep.mubr.f32.mxu0 0.0
      %v1644 = vand.u32 %v425, 4294901760
      %v1645 = vsub.f32 %v425, %v1644
      %v1646 = vand.u32 %v1645, 4294901760
      %1647 = vmatmul.mubr.f32.gmra.mrb[0].mxu0 %v1646
      %v1648 = vpop.f32.mrb[0].mxu0
      %v1649 = vadd.f32 %v1335, %v1648
      %v1650 = vpop.f32.mrb[0].mxu0
      %1651 = vmatprep.mubr.f32.mxu0 0.0
      %v1652 = vand.u32 %v428, 4294901760
      %v1653 = vsub.f32 %v428, %v1652
      %v1654 = vand.u32 %v1653, 4294901760
      %1655 = vmatmul.mubr.f32.gmra.mrb[0].mxu0 %v1654
      %v1656 = vpop.f32.mrb[0].mxu0
      %v1657 = vadd.f32 %v1342, %v1656
      %v1658 = vpop.f32.mrb[0].mxu0
      %1659 = vmatprep.mubr.f32.mxu0 0.0
      %v1660 = vand.u32 %v431, 4294901760
      %v1661 = vsub.f32 %v431, %v1660
      %v1662 = vand.u32 %v1661, 4294901760
      %1663 = vmatmul.mubr.f32.gmra.mrb[0].mxu0 %v1662
      %v1664 = vpop.f32.mrb[0].mxu0
      %v1665 = vadd.f32 %v1349, %v1664
      %v1666 = vpop.f32.mrb[0].mxu0
      %1667 = vmatprep.mubr.f32.mxu0 0.0
      %v1668 = vand.u32 %v434, 4294901760
      %v1669 = vsub.f32 %v434, %v1668
      %v1670 = vand.u32 %v1669, 4294901760
      %1671 = vmatmul.mubr.f32.gmra.mrb[0].mxu0 %v1670
      %v1672 = vpop.f32.mrb[0].mxu0
      %v1673 = vadd.f32 %v1356, %v1672
      %v1674 = vpop.f32.mrb[0].mxu0
      %1675 = vmatprep.mubr.f32.mxu0 0.0
      %v1676 = vand.u32 %v437, 4294901760
      %v1677 = vsub.f32 %v437, %v1676
      %v1678 = vand.u32 %v1677, 4294901760
      %1679 = vmatmul.mubr.f32.gmra.mrb[0].mxu0 %v1678
      %v1680 = vpop.f32.mrb[0].mxu0
      %v1681 = vadd.f32 %v1363, %v1680
      %v1682 = vpop.f32.mrb[0].mxu0
      %1683 = vmatprep.mubr.f32.mxu0 0.0
      %v1684 = vand.u32 %v440, 4294901760
      %v1685 = vsub.f32 %v440, %v1684
      %v1686 = vand.u32 %v1685, 4294901760
      %1687 = vmatmul.mubr.f32.gmra.mrb[0].mxu0 %v1686
      %v1688 = vpop.f32.mrb[0].mxu0
      %v1689 = vadd.f32 %v1370, %v1688
      %v1690 = vpop.f32.mrb[0].mxu0
      %1691 = vmatprep.mubr.f32.mxu0 0.0
      %v1692 = vand.u32 %v443, 4294901760
      %v1693 = vsub.f32 %v443, %v1692
      %v1694 = vand.u32 %v1693, 4294901760
      %1695 = vmatmul.mubr.f32.gmra.mrb[0].mxu0 %v1694
      %v1696 = vpop.f32.mrb[0].mxu0
      %v1697 = vadd.f32 %v1377, %v1696
      %v1698 = vpop.f32.mrb[0].mxu0
      %1699 = vmatprep.mubr.f32.mxu0 0.0
      %v1700 = vand.u32 %v446, 4294901760
      %v1701 = vsub.f32 %v446, %v1700
      %v1702 = vand.u32 %v1701, 4294901760
      %1703 = vmatmul.mubr.f32.gmra.mrb[0].mxu0 %v1702
      %v1704 = vpop.f32.mrb[0].mxu0
      %v1705 = vadd.f32 %v1384, %v1704
      %v1706 = vpop.f32.mrb[0].mxu0
      %1707 = vmatprep.mubr.f32.mxu0 0.0
      %v1708 = vand.u32 %v449, 4294901760
      %v1709 = vsub.f32 %v449, %v1708
      %v1710 = vand.u32 %v1709, 4294901760
      %1711 = vmatmul.mubr.f32.gmra.mrb[0].mxu0 %v1710
      %v1712 = vpop.f32.mrb[0].mxu0
      %v1713 = vadd.f32 %v1391, %v1712
      %v1714 = vpop.f32.mrb[0].mxu0
      %1715 = vmatprep.mubr.f32.mxu0 0.0
      %v1716 = vand.u32 %v452, 4294901760
      %v1717 = vsub.f32 %v452, %v1716
      %v1718 = vand.u32 %v1717, 4294901760
      %1719 = vmatmul.mubr.f32.gmra.mrb[0].mxu0 %v1718
      %v1720 = vpop.f32.mrb[0].mxu0
      %v1721 = vadd.f32 %v1398, %v1720
      %v1722 = vpop.f32.mrb[0].mxu0
      %1723 = vdwg.mxu0
      %1724 = vmatprep.subr.mxu0 0.0
      %v1725 = vand.u32 %v355, 4294901760
      %v1726 = vsub.f32 %v355, %v1725
      %v1727 = vand.u32 %v1726, 4294901760
      %1728 = vmatpush1.msra.mxu0 %v1727
      %1729 = vmatprep.subr.mxu0 0.0
      %v1730 = vand.u32 %v356, 4294901760
      %v1731 = vsub.f32 %v356, %v1730
      %v1732 = vand.u32 %v1731, 4294901760
      %1733 = vmatpush1.msra.mxu0 %v1732
      %1734 = vmatprep.subr.mxu0 0.0
      %1735 = vmatpush1.msra.mxu0 0.0
      %1736 = vmatprep.subr.mxu0 0.0
      %1737 = vmatpush1.msra.mxu0 0.0
      %1738 = vmatprep.subr.mxu0 0.0
      %1739 = vmatpush1.msra.mxu0 0.0
      %1740 = vmatprep.subr.mxu0 0.0
      %1741 = vmatpush1.msra.mxu0 0.0
      %1742 = vmatprep.subr.mxu0 0.0
      %1743 = vmatpush1.msra.mxu0 0.0
      %1744 = vmatprep.subr.mxu0 0.0
      %1745 = vmatpush1.msra.mxu0 0.0
      %1746 = vmatprep.subr.mxu0 0.0
      %1747 = vmatpush1.msra.mxu0 0.0
      %1748 = vmatprep.subr.mxu0 0.0
      %1749 = vmatpush1.msra.mxu0 0.0
      %1750 = vmatprep.subr.mxu0 0.0
      %1751 = vmatpush1.msra.mxu0 0.0
      %1752 = vmatprep.subr.mxu0 0.0
      %1753 = vmatpush1.msra.mxu0 0.0
      %1754 = vmatprep.subr.mxu0 0.0
      %1755 = vmatpush1.msra.mxu0 0.0
      %1756 = vmatprep.subr.mxu0 0.0
      %1757 = vmatpush1.msra.mxu0 0.0
      %1758 = vmatprep.subr.mxu0 0.0
      %1759 = vmatpush1.msra.mxu0 0.0
      %1760 = vmatprep.subr.mxu0 0.0
      %1761 = vmatpush1.msra.mxu0 0.0
      %1762 = vmatprep.subr.mxu0 0.0
      %1763 = vmatpush1.msra.mxu0 0.0
      %1764 = vmatprep.subr.mxu0 0.0
      %1765 = vmatpush1.msra.mxu0 0.0
      %1766 = vmatprep.subr.mxu0 0.0
      %1767 = vmatpush1.msra.mxu0 0.0
      %1768 = vmatprep.subr.mxu0 0.0
      %1769 = vmatpush1.msra.mxu0 0.0
      %1770 = vmatprep.subr.mxu0 0.0
      %1771 = vmatpush1.msra.mxu0 0.0
      %1772 = vmatprep.subr.mxu0 0.0
      %1773 = vmatpush1.msra.mxu0 0.0
      %1774 = vmatprep.subr.mxu0 0.0
      %1775 = vmatpush1.msra.mxu0 0.0
      %1776 = vmatprep.subr.mxu0 0.0
      %1777 = vmatpush1.msra.mxu0 0.0
      %1778 = vmatprep.subr.mxu0 0.0
      %1779 = vmatpush1.msra.mxu0 0.0
      %1780 = vmatprep.subr.mxu0 0.0
      %1781 = vmatpush1.msra.mxu0 0.0
      %1782 = vmatprep.subr.mxu0 0.0
      %1783 = vmatpush1.msra.mxu0 0.0
      %1784 = vmatprep.subr.mxu0 0.0
      %1785 = vmatpush1.msra.mxu0 0.0
      %1786 = vmatprep.subr.mxu0 0.0
      %1787 = vmatpush1.msra.mxu0 0.0
      %1788 = vmatprep.subr.mxu0 0.0
      %1789 = vmatpush1.msra.mxu0 0.0
      %1790 = vmatprep.subr.mxu0 0.0
      %1791 = vmatpush1.msra.mxu0 0.0
      %1792 = vmatprep.subr.mxu0 0.0
      %1793 = vmatpush1.msra.mxu0 0.0
      %1794 = vmatprep.mubr.f32.mxu0 0.0
      %v1795 = vand.u32 %v359, 4294901760
      %1796 = vmatmul.mubr.f32.gmra.mrb[0].mxu0 %v1795
      %v1797 = vpop.f32.mrb[0].mxu0
      %v1798 = vadd.f32 %v1473, %v1797
      %v1799 = vpop.f32.mrb[0].mxu0
      %1800 = vmatprep.mubr.f32.mxu0 0.0
      %v1801 = vand.u32 %v362, 4294901760
      %1802 = vmatmul.mubr.f32.gmra.mrb[0].mxu0 %v1801
      %v1803 = vpop.f32.mrb[0].mxu0
      %v1804 = vadd.f32 %v1481, %v1803
      %v1805 = vpop.f32.mrb[0].mxu0
      %1806 = vmatprep.mubr.f32.mxu0 0.0
      %v1807 = vand.u32 %v365, 4294901760
      %1808 = vmatmul.mubr.f32.gmra.mrb[0].mxu0 %v1807
      %v1809 = vpop.f32.mrb[0].mxu0
      %v1810 = vadd.f32 %v1489, %v1809
      %v1811 = vpop.f32.mrb[0].mxu0
      %1812 = vmatprep.mubr.f32.mxu0 0.0
      %v1813 = vand.u32 %v368, 4294901760
      %1814 = vmatmul.mubr.f32.gmra.mrb[0].mxu0 %v1813
      %v1815 = vpop.f32.mrb[0].mxu0
      %v1816 = vadd.f32 %v1497, %v1815
      %v1817 = vpop.f32.mrb[0].mxu0
      %1818 = vmatprep.mubr.f32.mxu0 0.0
      %v1819 = vand.u32 %v371, 4294901760
      %1820 = vmatmul.mubr.f32.gmra.mrb[0].mxu0 %v1819
      %v1821 = vpop.f32.mrb[0].mxu0
      %v1822 = vadd.f32 %v1505, %v1821
      %v1823 = vpop.f32.mrb[0].mxu0
      %1824 = vmatprep.mubr.f32.mxu0 0.0
      %v1825 = vand.u32 %v374, 4294901760
      %1826 = vmatmul.mubr.f32.gmra.mrb[0].mxu0 %v1825
      %v1827 = vpop.f32.mrb[0].mxu0
      %v1828 = vadd.f32 %v1513, %v1827
      %v1829 = vpop.f32.mrb[0].mxu0
      %1830 = vmatprep.mubr.f32.mxu0 0.0
      %v1831 = vand.u32 %v377, 4294901760
      %1832 = vmatmul.mubr.f32.gmra.mrb[0].mxu0 %v1831
      %v1833 = vpop.f32.mrb[0].mxu0
      %v1834 = vadd.f32 %v1521, %v1833
      %v1835 = vpop.f32.mrb[0].mxu0
      %1836 = vmatprep.mubr.f32.mxu0 0.0
      %v1837 = vand.u32 %v380, 4294901760
      %1838 = vmatmul.mubr.f32.gmra.mrb[0].mxu0 %v1837
      %v1839 = vpop.f32.mrb[0].mxu0
      %v1840 = vadd.f32 %v1529, %v1839
      %v1841 = vpop.f32.mrb[0].mxu0
      %1842 = vmatprep.mubr.f32.mxu0 0.0
      %v1843 = vand.u32 %v383, 4294901760
      %1844 = vmatmul.mubr.f32.gmra.mrb[0].mxu0 %v1843
      %v1845 = vpop.f32.mrb[0].mxu0
      %v1846 = vadd.f32 %v1537, %v1845
      %v1847 = vpop.f32.mrb[0].mxu0
      %1848 = vmatprep.mubr.f32.mxu0 0.0
      %v1849 = vand.u32 %v386, 4294901760
      %1850 = vmatmul.mubr.f32.gmra.mrb[0].mxu0 %v1849
      %v1851 = vpop.f32.mrb[0].mxu0
      %v1852 = vadd.f32 %v1545, %v1851
      %v1853 = vpop.f32.mrb[0].mxu0
      %1854 = vmatprep.mubr.f32.mxu0 0.0
      %v1855 = vand.u32 %v389, 4294901760
      %1856 = vmatmul.mubr.f32.gmra.mrb[0].mxu0 %v1855
      %v1857 = vpop.f32.mrb[0].mxu0
      %v1858 = vadd.f32 %v1553, %v1857
      %v1859 = vpop.f32.mrb[0].mxu0
      %1860 = vmatprep.mubr.f32.mxu0 0.0
      %v1861 = vand.u32 %v392, 4294901760
      %1862 = vmatmul.mubr.f32.gmra.mrb[0].mxu0 %v1861
      %v1863 = vpop.f32.mrb[0].mxu0
      %v1864 = vadd.f32 %v1561, %v1863
      %v1865 = vpop.f32.mrb[0].mxu0
      %1866 = vmatprep.mubr.f32.mxu0 0.0
      %v1867 = vand.u32 %v395, 4294901760
      %1868 = vmatmul.mubr.f32.gmra.mrb[0].mxu0 %v1867
      %v1869 = vpop.f32.mrb[0].mxu0
      %v1870 = vadd.f32 %v1569, %v1869
      %v1871 = vpop.f32.mrb[0].mxu0
      %1872 = vmatprep.mubr.f32.mxu0 0.0
      %v1873 = vand.u32 %v398, 4294901760
      %1874 = vmatmul.mubr.f32.gmra.mrb[0].mxu0 %v1873
      %v1875 = vpop.f32.mrb[0].mxu0
      %v1876 = vadd.f32 %v1577, %v1875
      %v1877 = vpop.f32.mrb[0].mxu0
      %1878 = vmatprep.mubr.f32.mxu0 0.0
      %v1879 = vand.u32 %v401, 4294901760
      %1880 = vmatmul.mubr.f32.gmra.mrb[0].mxu0 %v1879
      %v1881 = vpop.f32.mrb[0].mxu0
      %v1882 = vadd.f32 %v1585, %v1881
      %v1883 = vpop.f32.mrb[0].mxu0
      %1884 = vmatprep.mubr.f32.mxu0 0.0
      %v1885 = vand.u32 %v404, 4294901760
      %1886 = vmatmul.mubr.f32.gmra.mrb[0].mxu0 %v1885
      %v1887 = vpop.f32.mrb[0].mxu0
      %v1888 = vadd.f32 %v1593, %v1887
      %v1889 = vpop.f32.mrb[0].mxu0
      %1890 = vmatprep.mubr.f32.mxu0 0.0
      %v1891 = vand.u32 %v407, 4294901760
      %1892 = vmatmul.mubr.f32.gmra.mrb[0].mxu0 %v1891
      %v1893 = vpop.f32.mrb[0].mxu0
      %v1894 = vadd.f32 %v1601, %v1893
      %v1895 = vpop.f32.mrb[0].mxu0
      %1896 = vmatprep.mubr.f32.mxu0 0.0
      %v1897 = vand.u32 %v410, 4294901760
      %1898 = vmatmul.mubr.f32.gmra.mrb[0].mxu0 %v1897
      %v1899 = vpop.f32.mrb[0].mxu0
      %v1900 = vadd.f32 %v1609, %v1899
      %v1901 = vpop.f32.mrb[0].mxu0
      %1902 = vmatprep.mubr.f32.mxu0 0.0
      %v1903 = vand.u32 %v413, 4294901760
      %1904 = vmatmul.mubr.f32.gmra.mrb[0].mxu0 %v1903
      %v1905 = vpop.f32.mrb[0].mxu0
      %v1906 = vadd.f32 %v1617, %v1905
      %v1907 = vpop.f32.mrb[0].mxu0
      %1908 = vmatprep.mubr.f32.mxu0 0.0
      %v1909 = vand.u32 %v416, 4294901760
      %1910 = vmatmul.mubr.f32.gmra.mrb[0].mxu0 %v1909
      %v1911 = vpop.f32.mrb[0].mxu0
      %v1912 = vadd.f32 %v1625, %v1911
      %v1913 = vpop.f32.mrb[0].mxu0
      %1914 = vmatprep.mubr.f32.mxu0 0.0
      %v1915 = vand.u32 %v419, 4294901760
      %1916 = vmatmul.mubr.f32.gmra.mrb[0].mxu0 %v1915
      %v1917 = vpop.f32.mrb[0].mxu0
      %v1918 = vadd.f32 %v1633, %v1917
      %v1919 = vpop.f32.mrb[0].mxu0
      %1920 = vmatprep.mubr.f32.mxu0 0.0
      %v1921 = vand.u32 %v422, 4294901760
      %1922 = vmatmul.mubr.f32.gmra.mrb[0].mxu0 %v1921
      %v1923 = vpop.f32.mrb[0].mxu0
      %v1924 = vadd.f32 %v1641, %v1923
      %v1925 = vpop.f32.mrb[0].mxu0
      %1926 = vmatprep.mubr.f32.mxu0 0.0
      %v1927 = vand.u32 %v425, 4294901760
      %1928 = vmatmul.mubr.f32.gmra.mrb[0].mxu0 %v1927
      %v1929 = vpop.f32.mrb[0].mxu0
      %v1930 = vadd.f32 %v1649, %v1929
      %v1931 = vpop.f32.mrb[0].mxu0
      %1932 = vmatprep.mubr.f32.mxu0 0.0
      %v1933 = vand.u32 %v428, 4294901760
      %1934 = vmatmul.mubr.f32.gmra.mrb[0].mxu0 %v1933
      %v1935 = vpop.f32.mrb[0].mxu0
      %v1936 = vadd.f32 %v1657, %v1935
      %v1937 = vpop.f32.mrb[0].mxu0
      %1938 = vmatprep.mubr.f32.mxu0 0.0
      %v1939 = vand.u32 %v431, 4294901760
      %1940 = vmatmul.mubr.f32.gmra.mrb[0].mxu0 %v1939
      %v1941 = vpop.f32.mrb[0].mxu0
      %v1942 = vadd.f32 %v1665, %v1941
      %v1943 = vpop.f32.mrb[0].mxu0
      %1944 = vmatprep.mubr.f32.mxu0 0.0
      %v1945 = vand.u32 %v434, 4294901760
      %1946 = vmatmul.mubr.f32.gmra.mrb[0].mxu0 %v1945
      %v1947 = vpop.f32.mrb[0].mxu0
      %v1948 = vadd.f32 %v1673, %v1947
      %v1949 = vpop.f32.mrb[0].mxu0
      %1950 = vmatprep.mubr.f32.mxu0 0.0
      %v1951 = vand.u32 %v437, 4294901760
      %1952 = vmatmul.mubr.f32.gmra.mrb[0].mxu0 %v1951
      %v1953 = vpop.f32.mrb[0].mxu0
      %v1954 = vadd.f32 %v1681, %v1953
      %v1955 = vpop.f32.mrb[0].mxu0
      %1956 = vmatprep.mubr.f32.mxu0 0.0
      %v1957 = vand.u32 %v440, 4294901760
      %1958 = vmatmul.mubr.f32.gmra.mrb[0].mxu0 %v1957
      %v1959 = vpop.f32.mrb[0].mxu0
      %v1960 = vadd.f32 %v1689, %v1959
      %v1961 = vpop.f32.mrb[0].mxu0
      %1962 = vmatprep.mubr.f32.mxu0 0.0
      %v1963 = vand.u32 %v443, 4294901760
      %1964 = vmatmul.mubr.f32.gmra.mrb[0].mxu0 %v1963
      %v1965 = vpop.f32.mrb[0].mxu0
      %v1966 = vadd.f32 %v1697, %v1965
      %v1967 = vpop.f32.mrb[0].mxu0
      %1968 = vmatprep.mubr.f32.mxu0 0.0
      %v1969 = vand.u32 %v446, 4294901760
      %1970 = vmatmul.mubr.f32.gmra.mrb[0].mxu0 %v1969
      %v1971 = vpop.f32.mrb[0].mxu0
      %v1972 = vadd.f32 %v1705, %v1971
      %v1973 = vpop.f32.mrb[0].mxu0
      %1974 = vmatprep.mubr.f32.mxu0 0.0
      %v1975 = vand.u32 %v449, 4294901760
      %1976 = vmatmul.mubr.f32.gmra.mrb[0].mxu0 %v1975
      %v1977 = vpop.f32.mrb[0].mxu0
      %v1978 = vadd.f32 %v1713, %v1977
      %v1979 = vpop.f32.mrb[0].mxu0
      %1980 = vmatprep.mubr.f32.mxu0 0.0
      %v1981 = vand.u32 %v452, 4294901760
      %1982 = vmatmul.mubr.f32.gmra.mrb[0].mxu0 %v1981
      %v1983 = vpop.f32.mrb[0].mxu0
      %v1984 = vadd.f32 %v1721, %v1983
      %v1985 = vpop.f32.mrb[0].mxu0
      %1986 = vdwg.mxu0
      %1987 = vmatprep.subr.mxu0 0.0
      %v1988 = vand.u32 %v355, 4294901760
      %1989 = vmatpush1.msra.mxu0 %v1988
      %1990 = vmatprep.subr.mxu0 0.0
      %v1991 = vand.u32 %v356, 4294901760
      %1992 = vmatpush1.msra.mxu0 %v1991
      %1993 = vmatprep.subr.mxu0 0.0
      %1994 = vmatpush1.msra.mxu0 0.0
      %1995 = vmatprep.subr.mxu0 0.0
      %1996 = vmatpush1.msra.mxu0 0.0
      %1997 = vmatprep.subr.mxu0 0.0
      %1998 = vmatpush1.msra.mxu0 0.0
      %1999 = vmatprep.subr.mxu0 0.0
      %2000 = vmatpush1.msra.mxu0 0.0
      %2001 = vmatprep.subr.mxu0 0.0
      %2002 = vmatpush1.msra.mxu0 0.0
      %2003 = vmatprep.subr.mxu0 0.0
      %2004 = vmatpush1.msra.mxu0 0.0
      %2005 = vmatprep.subr.mxu0 0.0
      %2006 = vmatpush1.msra.mxu0 0.0
      %2007 = vmatprep.subr.mxu0 0.0
      %2008 = vmatpush1.msra.mxu0 0.0
      %2009 = vmatprep.subr.mxu0 0.0
      %2010 = vmatpush1.msra.mxu0 0.0
      %2011 = vmatprep.subr.mxu0 0.0
      %2012 = vmatpush1.msra.mxu0 0.0
      %2013 = vmatprep.subr.mxu0 0.0
      %2014 = vmatpush1.msra.mxu0 0.0
      %2015 = vmatprep.subr.mxu0 0.0
      %2016 = vmatpush1.msra.mxu0 0.0
      %2017 = vmatprep.subr.mxu0 0.0
      %2018 = vmatpush1.msra.mxu0 0.0
      %2019 = vmatprep.subr.mxu0 0.0
      %2020 = vmatpush1.msra.mxu0 0.0
      %2021 = vmatprep.subr.mxu0 0.0
      %2022 = vmatpush1.msra.mxu0 0.0
      %2023 = vmatprep.subr.mxu0 0.0
      %2024 = vmatpush1.msra.mxu0 0.0
      %2025 = vmatprep.subr.mxu0 0.0
      %2026 = vmatpush1.msra.mxu0 0.0
      %2027 = vmatprep.subr.mxu0 0.0
      %2028 = vmatpush1.msra.mxu0 0.0
      %2029 = vmatprep.subr.mxu0 0.0
      %2030 = vmatpush1.msra.mxu0 0.0
      %2031 = vmatprep.subr.mxu0 0.0
      %2032 = vmatpush1.msra.mxu0 0.0
      %2033 = vmatprep.subr.mxu0 0.0
      %2034 = vmatpush1.msra.mxu0 0.0
      %2035 = vmatprep.subr.mxu0 0.0
      %2036 = vmatpush1.msra.mxu0 0.0
      %2037 = vmatprep.subr.mxu0 0.0
      %2038 = vmatpush1.msra.mxu0 0.0
      %2039 = vmatprep.subr.mxu0 0.0
      %2040 = vmatpush1.msra.mxu0 0.0
      %2041 = vmatprep.subr.mxu0 0.0
      %2042 = vmatpush1.msra.mxu0 0.0
      %2043 = vmatprep.subr.mxu0 0.0
      %2044 = vmatpush1.msra.mxu0 0.0
      %2045 = vmatprep.subr.mxu0 0.0
      %2046 = vmatpush1.msra.mxu0 0.0
      %2047 = vmatprep.subr.mxu0 0.0
      %2048 = vmatpush1.msra.mxu0 0.0
      %2049 = vmatprep.subr.mxu0 0.0
      %2050 = vmatpush1.msra.mxu0 0.0
      %2051 = vmatprep.subr.mxu0 0.0
      %2052 = vmatpush1.msra.mxu0 0.0
      %2053 = vmatprep.mubr.f32.mxu0 0.0
      %v2054 = vand.u32 %v359, 4294901760
      %2055 = vmatmul.mubr.f32.gmra.mrb[0].mxu0 %v2054
      %v2056 = vpop.f32.mrb[0].mxu0
      %v2057 = vadd.f32 %v1798, %v2056
      %v2058 = vpop.f32.mrb[0].mxu0
      %2059 = vmatprep.mubr.f32.mxu0 0.0
      %v2060 = vand.u32 %v362, 4294901760
      %2061 = vmatmul.mubr.f32.gmra.mrb[0].mxu0 %v2060
      %v2062 = vpop.f32.mrb[0].mxu0
      %v2063 = vadd.f32 %v1804, %v2062
      %v2064 = vpop.f32.mrb[0].mxu0
      %2065 = vmatprep.mubr.f32.mxu0 0.0
      %v2066 = vand.u32 %v365, 4294901760
      %2067 = vmatmul.mubr.f32.gmra.mrb[0].mxu0 %v2066
      %v2068 = vpop.f32.mrb[0].mxu0
      %v2069 = vadd.f32 %v1810, %v2068
      %v2070 = vpop.f32.mrb[0].mxu0
      %2071 = vmatprep.mubr.f32.mxu0 0.0
      %v2072 = vand.u32 %v368, 4294901760
      %2073 = vmatmul.mubr.f32.gmra.mrb[0].mxu0 %v2072
      %v2074 = vpop.f32.mrb[0].mxu0
      %v2075 = vadd.f32 %v1816, %v2074
      %v2076 = vpop.f32.mrb[0].mxu0
      %2077 = vmatprep.mubr.f32.mxu0 0.0
      %v2078 = vand.u32 %v371, 4294901760
      %2079 = vmatmul.mubr.f32.gmra.mrb[0].mxu0 %v2078
      %v2080 = vpop.f32.mrb[0].mxu0
      %v2081 = vadd.f32 %v1822, %v2080
      %v2082 = vpop.f32.mrb[0].mxu0
      %2083 = vmatprep.mubr.f32.mxu0 0.0
      %v2084 = vand.u32 %v374, 4294901760
      %2085 = vmatmul.mubr.f32.gmra.mrb[0].mxu0 %v2084
      %v2086 = vpop.f32.mrb[0].mxu0
      %v2087 = vadd.f32 %v1828, %v2086
      %v2088 = vpop.f32.mrb[0].mxu0
      %2089 = vmatprep.mubr.f32.mxu0 0.0
      %v2090 = vand.u32 %v377, 4294901760
      %2091 = vmatmul.mubr.f32.gmra.mrb[0].mxu0 %v2090
      %v2092 = vpop.f32.mrb[0].mxu0
      %v2093 = vadd.f32 %v1834, %v2092
      %v2094 = vpop.f32.mrb[0].mxu0
      %2095 = vmatprep.mubr.f32.mxu0 0.0
      %v2096 = vand.u32 %v380, 4294901760
      %2097 = vmatmul.mubr.f32.gmra.mrb[0].mxu0 %v2096
      %v2098 = vpop.f32.mrb[0].mxu0
      %v2099 = vadd.f32 %v1840, %v2098
      %v2100 = vpop.f32.mrb[0].mxu0
      %2101 = vmatprep.mubr.f32.mxu0 0.0
      %v2102 = vand.u32 %v383, 4294901760
      %2103 = vmatmul.mubr.f32.gmra.mrb[0].mxu0 %v2102
      %v2104 = vpop.f32.mrb[0].mxu0
      %v2105 = vadd.f32 %v1846, %v2104
      %v2106 = vpop.f32.mrb[0].mxu0
      %2107 = vmatprep.mubr.f32.mxu0 0.0
      %v2108 = vand.u32 %v386, 4294901760
      %2109 = vmatmul.mubr.f32.gmra.mrb[0].mxu0 %v2108
      %v2110 = vpop.f32.mrb[0].mxu0
      %v2111 = vadd.f32 %v1852, %v2110
      %v2112 = vpop.f32.mrb[0].mxu0
      %2113 = vmatprep.mubr.f32.mxu0 0.0
      %v2114 = vand.u32 %v389, 4294901760
      %2115 = vmatmul.mubr.f32.gmra.mrb[0].mxu0 %v2114
      %v2116 = vpop.f32.mrb[0].mxu0
      %v2117 = vadd.f32 %v1858, %v2116
      %v2118 = vpop.f32.mrb[0].mxu0
      %2119 = vmatprep.mubr.f32.mxu0 0.0
      %v2120 = vand.u32 %v392, 4294901760
      %2121 = vmatmul.mubr.f32.gmra.mrb[0].mxu0 %v2120
      %v2122 = vpop.f32.mrb[0].mxu0
      %v2123 = vadd.f32 %v1864, %v2122
      %v2124 = vpop.f32.mrb[0].mxu0
      %2125 = vmatprep.mubr.f32.mxu0 0.0
      %v2126 = vand.u32 %v395, 4294901760
      %2127 = vmatmul.mubr.f32.gmra.mrb[0].mxu0 %v2126
      %v2128 = vpop.f32.mrb[0].mxu0
      %v2129 = vadd.f32 %v1870, %v2128
      %v2130 = vpop.f32.mrb[0].mxu0
      %2131 = vmatprep.mubr.f32.mxu0 0.0
      %v2132 = vand.u32 %v398, 4294901760
      %2133 = vmatmul.mubr.f32.gmra.mrb[0].mxu0 %v2132
      %v2134 = vpop.f32.mrb[0].mxu0
      %v2135 = vadd.f32 %v1876, %v2134
      %v2136 = vpop.f32.mrb[0].mxu0
      %2137 = vmatprep.mubr.f32.mxu0 0.0
      %v2138 = vand.u32 %v401, 4294901760
      %2139 = vmatmul.mubr.f32.gmra.mrb[0].mxu0 %v2138
      %v2140 = vpop.f32.mrb[0].mxu0
      %v2141 = vadd.f32 %v1882, %v2140
      %v2142 = vpop.f32.mrb[0].mxu0
      %2143 = vmatprep.mubr.f32.mxu0 0.0
      %v2144 = vand.u32 %v404, 4294901760
      %2145 = vmatmul.mubr.f32.gmra.mrb[0].mxu0 %v2144
      %v2146 = vpop.f32.mrb[0].mxu0
      %v2147 = vadd.f32 %v1888, %v2146
      %v2148 = vpop.f32.mrb[0].mxu0
      %2149 = vmatprep.mubr.f32.mxu0 0.0
      %v2150 = vand.u32 %v407, 4294901760
      %2151 = vmatmul.mubr.f32.gmra.mrb[0].mxu0 %v2150
      %v2152 = vpop.f32.mrb[0].mxu0
      %v2153 = vadd.f32 %v1894, %v2152
      %v2154 = vpop.f32.mrb[0].mxu0
      %2155 = vmatprep.mubr.f32.mxu0 0.0
      %v2156 = vand.u32 %v410, 4294901760
      %2157 = vmatmul.mubr.f32.gmra.mrb[0].mxu0 %v2156
      %v2158 = vpop.f32.mrb[0].mxu0
      %v2159 = vadd.f32 %v1900, %v2158
      %v2160 = vpop.f32.mrb[0].mxu0
      %2161 = vmatprep.mubr.f32.mxu0 0.0
      %v2162 = vand.u32 %v413, 4294901760
      %2163 = vmatmul.mubr.f32.gmra.mrb[0].mxu0 %v2162
      %v2164 = vpop.f32.mrb[0].mxu0
      %v2165 = vadd.f32 %v1906, %v2164
      %v2166 = vpop.f32.mrb[0].mxu0
      %2167 = vmatprep.mubr.f32.mxu0 0.0
      %v2168 = vand.u32 %v416, 4294901760
      %2169 = vmatmul.mubr.f32.gmra.mrb[0].mxu0 %v2168
      %v2170 = vpop.f32.mrb[0].mxu0
      %v2171 = vadd.f32 %v1912, %v2170
      %v2172 = vpop.f32.mrb[0].mxu0
      %2173 = vmatprep.mubr.f32.mxu0 0.0
      %v2174 = vand.u32 %v419, 4294901760
      %2175 = vmatmul.mubr.f32.gmra.mrb[0].mxu0 %v2174
      %v2176 = vpop.f32.mrb[0].mxu0
      %v2177 = vadd.f32 %v1918, %v2176
      %v2178 = vpop.f32.mrb[0].mxu0
      %2179 = vmatprep.mubr.f32.mxu0 0.0
      %v2180 = vand.u32 %v422, 4294901760
      %2181 = vmatmul.mubr.f32.gmra.mrb[0].mxu0 %v2180
      %v2182 = vpop.f32.mrb[0].mxu0
      %v2183 = vadd.f32 %v1924, %v2182
      %v2184 = vpop.f32.mrb[0].mxu0
      %2185 = vmatprep.mubr.f32.mxu0 0.0
      %v2186 = vand.u32 %v425, 4294901760
      %2187 = vmatmul.mubr.f32.gmra.mrb[0].mxu0 %v2186
      %v2188 = vpop.f32.mrb[0].mxu0
      %v2189 = vadd.f32 %v1930, %v2188
      %v2190 = vpop.f32.mrb[0].mxu0
      %2191 = vmatprep.mubr.f32.mxu0 0.0
      %v2192 = vand.u32 %v428, 4294901760
      %2193 = vmatmul.mubr.f32.gmra.mrb[0].mxu0 %v2192
      %v2194 = vpop.f32.mrb[0].mxu0
      %v2195 = vadd.f32 %v1936, %v2194
      %v2196 = vpop.f32.mrb[0].mxu0
      %2197 = vmatprep.mubr.f32.mxu0 0.0
      %v2198 = vand.u32 %v431, 4294901760
      %2199 = vmatmul.mubr.f32.gmra.mrb[0].mxu0 %v2198
      %v2200 = vpop.f32.mrb[0].mxu0
      %v2201 = vadd.f32 %v1942, %v2200
      %v2202 = vpop.f32.mrb[0].mxu0
      %2203 = vmatprep.mubr.f32.mxu0 0.0
      %v2204 = vand.u32 %v434, 4294901760
      %2205 = vmatmul.mubr.f32.gmra.mrb[0].mxu0 %v2204
      %v2206 = vpop.f32.mrb[0].mxu0
      %v2207 = vadd.f32 %v1948, %v2206
      %v2208 = vpop.f32.mrb[0].mxu0
      %2209 = vmatprep.mubr.f32.mxu0 0.0
      %v2210 = vand.u32 %v437, 4294901760
      %2211 = vmatmul.mubr.f32.gmra.mrb[0].mxu0 %v2210
      %v2212 = vpop.f32.mrb[0].mxu0
      %v2213 = vadd.f32 %v1954, %v2212
      %v2214 = vpop.f32.mrb[0].mxu0
      %2215 = vmatprep.mubr.f32.mxu0 0.0
      %v2216 = vand.u32 %v440, 4294901760
      %2217 = vmatmul.mubr.f32.gmra.mrb[0].mxu0 %v2216
      %v2218 = vpop.f32.mrb[0].mxu0
      %v2219 = vadd.f32 %v1960, %v2218
      %v2220 = vpop.f32.mrb[0].mxu0
      %2221 = vmatprep.mubr.f32.mxu0 0.0
      %v2222 = vand.u32 %v443, 4294901760
      %2223 = vmatmul.mubr.f32.gmra.mrb[0].mxu0 %v2222
      %v2224 = vpop.f32.mrb[0].mxu0
      %v2225 = vadd.f32 %v1966, %v2224
      %v2226 = vpop.f32.mrb[0].mxu0
      %2227 = vmatprep.mubr.f32.mxu0 0.0
      %v2228 = vand.u32 %v446, 4294901760
      %2229 = vmatmul.mubr.f32.gmra.mrb[0].mxu0 %v2228
      %v2230 = vpop.f32.mrb[0].mxu0
      %v2231 = vadd.f32 %v1972, %v2230
      %v2232 = vpop.f32.mrb[0].mxu0
      %2233 = vmatprep.mubr.f32.mxu0 0.0
      %v2234 = vand.u32 %v449, 4294901760
      %2235 = vmatmul.mubr.f32.gmra.mrb[0].mxu0 %v2234
      %v2236 = vpop.f32.mrb[0].mxu0
      %v2237 = vadd.f32 %v1978, %v2236
      %v2238 = vpop.f32.mrb[0].mxu0
      %2239 = vmatprep.mubr.f32.mxu0 0.0
      %v2240 = vand.u32 %v452, 4294901760
      %2241 = vmatmul.mubr.f32.gmra.mrb[0].mxu0 %v2240
      %v2242 = vpop.f32.mrb[0].mxu0
      %v2243 = vadd.f32 %v1984, %v2242
      %v2244 = vpop.f32.mrb[0].mxu0
      %2245 = vdwg.mxu0
      %v2246 = vld [vmem:[%s2] sm:$0x1]
      %v2248 = vlaneseq
      %v2249 = vshrl.u32 %v2248, 7
      %v2250 = vsub.s32 0, %v2249
      %v2251 = vrot.slane %v2246, %v2250
      %v2253 = vmul.f32 %v2057, %v2251
      %v2254 = vmul.f32 %v2063, %v2251
      %v2255 = vmul.f32 %v2069, %v2251
      %v2256 = vmul.f32 %v2075, %v2251
      %v2257 = vmul.f32 %v2081, %v2251
      %v2258 = vmul.f32 %v2087, %v2251
      %v2259 = vmul.f32 %v2093, %v2251
      %v2260 = vmul.f32 %v2099, %v2251
      %v2261 = vmul.f32 %v2105, %v2251
      %v2262 = vmul.f32 %v2111, %v2251
      %v2263 = vmul.f32 %v2117, %v2251
      %v2264 = vmul.f32 %v2123, %v2251
      %v2265 = vmul.f32 %v2129, %v2251
      %v2266 = vmul.f32 %v2135, %v2251
      %v2267 = vmul.f32 %v2141, %v2251
      %v2268 = vmul.f32 %v2147, %v2251
      %v2269 = vmul.f32 %v2153, %v2251
      %v2270 = vmul.f32 %v2159, %v2251
      %v2271 = vmul.f32 %v2165, %v2251
      %v2272 = vmul.f32 %v2171, %v2251
      %v2273 = vmul.f32 %v2177, %v2251
      %v2274 = vmul.f32 %v2183, %v2251
      %v2275 = vmul.f32 %v2189, %v2251
      %v2276 = vmul.f32 %v2195, %v2251
      %v2277 = vmul.f32 %v2201, %v2251
      %v2278 = vmul.f32 %v2207, %v2251
      %v2279 = vmul.f32 %v2213, %v2251
      %v2280 = vmul.f32 %v2219, %v2251
      %v2281 = vmul.f32 %v2225, %v2251
      %v2282 = vmul.f32 %v2231, %v2251
      %v2283 = vmul.f32 %v2237, %v2251
      %v2284 = vmul.f32 %v2243, %v2251
      %v2285 = vld [vmem:[%s3] sm:$0x1]
      %v2287 = vlaneseq
      %v2288 = vshrl.u32 %v2287, 7
      %v2289 = vsub.s32 0, %v2288
      %v2290 = vrot.slane %v2285, %v2289
      %v2292 = vadd.f32 %v2253, %v2290
      %v2293 = vadd.f32 %v2254, %v2290
      %v2294 = vadd.f32 %v2255, %v2290
      %v2295 = vadd.f32 %v2256, %v2290
      %v2296 = vadd.f32 %v2257, %v2290
      %v2297 = vadd.f32 %v2258, %v2290
      %v2298 = vadd.f32 %v2259, %v2290
      %v2299 = vadd.f32 %v2260, %v2290
      %v2300 = vadd.f32 %v2261, %v2290
      %v2301 = vadd.f32 %v2262, %v2290
      %v2302 = vadd.f32 %v2263, %v2290
      %v2303 = vadd.f32 %v2264, %v2290
      %v2304 = vadd.f32 %v2265, %v2290
      %v2305 = vadd.f32 %v2266, %v2290
      %v2306 = vadd.f32 %v2267, %v2290
      %v2307 = vadd.f32 %v2268, %v2290
      %v2308 = vadd.f32 %v2269, %v2290
      %v2309 = vadd.f32 %v2270, %v2290
      %v2310 = vadd.f32 %v2271, %v2290
      %v2311 = vadd.f32 %v2272, %v2290
      %v2312 = vadd.f32 %v2273, %v2290
      %v2313 = vadd.f32 %v2274, %v2290
      %v2314 = vadd.f32 %v2275, %v2290
      %v2315 = vadd.f32 %v2276, %v2290
      %v2316 = vadd.f32 %v2277, %v2290
      %v2317 = vadd.f32 %v2278, %v2290
      %v2318 = vadd.f32 %v2279, %v2290
      %v2319 = vadd.f32 %v2280, %v2290
      %v2320 = vadd.f32 %v2281, %v2290
      %v2321 = vadd.f32 %v2282, %v2290
      %v2322 = vadd.f32 %v2283, %v2290
      %v2323 = vadd.f32 %v2284, %v2290
      %v2324 = vxor.u32 %v2292, 2147483648
      %v2325 = vxor.u32 %v2293, 2147483648
      %v2326 = vxor.u32 %v2294, 2147483648
      %v2327 = vxor.u32 %v2295, 2147483648
      %v2328 = vxor.u32 %v2296, 2147483648
      %v2329 = vxor.u32 %v2297, 2147483648
      %v2330 = vxor.u32 %v2298, 2147483648
      %v2331 = vxor.u32 %v2299, 2147483648
      %v2332 = vxor.u32 %v2300, 2147483648
      %v2333 = vxor.u32 %v2301, 2147483648
      %v2334 = vxor.u32 %v2302, 2147483648
      %v2335 = vxor.u32 %v2303, 2147483648
      %v2336 = vxor.u32 %v2304, 2147483648
      %v2337 = vxor.u32 %v2305, 2147483648
      %v2338 = vxor.u32 %v2306, 2147483648
      %v2339 = vxor.u32 %v2307, 2147483648
      %v2340 = vxor.u32 %v2308, 2147483648
      %v2341 = vxor.u32 %v2309, 2147483648
      %v2342 = vxor.u32 %v2310, 2147483648
      %v2343 = vxor.u32 %v2311, 2147483648
      %v2344 = vxor.u32 %v2312, 2147483648
      %v2345 = vxor.u32 %v2313, 2147483648
      %v2346 = vxor.u32 %v2314, 2147483648
      %v2347 = vxor.u32 %v2315, 2147483648
      %v2348 = vxor.u32 %v2316, 2147483648
      %v2349 = vxor.u32 %v2317, 2147483648
      %v2350 = vxor.u32 %v2318, 2147483648
      %v2351 = vxor.u32 %v2319, 2147483648
      %v2352 = vxor.u32 %v2320, 2147483648
      %v2353 = vxor.u32 %v2321, 2147483648
      %v2354 = vxor.u32 %v2322, 2147483648
      %v2355 = vxor.u32 %v2323, 2147483648
      %v2356 = vmul.f32 %v2324, 1.442695
      %v2357 = vpow.pop %v2356
      %v2358 = vmul.f32 %v2325, 1.442695
      %v2359 = vpow.pop %v2358
      %v2360 = vmul.f32 %v2326, 1.442695
      %v2361 = vpow.pop %v2360
      %v2362 = vmul.f32 %v2327, 1.442695
      %v2363 = vpow.pop %v2362
      %v2364 = vmul.f32 %v2328, 1.442695
      %v2365 = vpow.pop %v2364
      %v2366 = vmul.f32 %v2329, 1.442695
      %v2367 = vpow.pop %v2366
      %v2368 = vmul.f32 %v2330, 1.442695
      %v2369 = vpow.pop %v2368
      %v2370 = vmul.f32 %v2331, 1.442695
      %v2371 = vpow.pop %v2370
      %v2372 = vmul.f32 %v2332, 1.442695
      %v2373 = vpow.pop %v2372
      %v2374 = vmul.f32 %v2333, 1.442695
      %v2375 = vpow.pop %v2374
      %v2376 = vmul.f32 %v2334, 1.442695
      %v2377 = vpow.pop %v2376
      %v2378 = vmul.f32 %v2335, 1.442695
      %v2379 = vpow.pop %v2378
      %v2380 = vmul.f32 %v2336, 1.442695
      %v2381 = vpow.pop %v2380
      %v2382 = vmul.f32 %v2337, 1.442695
      %v2383 = vpow.pop %v2382
      %v2384 = vmul.f32 %v2338, 1.442695
      %v2385 = vpow.pop %v2384
      %v2386 = vmul.f32 %v2339, 1.442695
      %v2387 = vpow.pop %v2386
      %v2388 = vmul.f32 %v2340, 1.442695
      %v2389 = vpow.pop %v2388
      %v2390 = vmul.f32 %v2341, 1.442695
      %v2391 = vpow.pop %v2390
      %v2392 = vmul.f32 %v2342, 1.442695
      %v2393 = vpow.pop %v2392
      %v2394 = vmul.f32 %v2343, 1.442695
      %v2395 = vpow.pop %v2394
      %v2396 = vmul.f32 %v2344, 1.442695
      %v2397 = vpow.pop %v2396
      %v2398 = vmul.f32 %v2345, 1.442695
      %v2399 = vpow.pop %v2398
      %v2400 = vmul.f32 %v2346, 1.442695
      %v2401 = vpow.pop %v2400
      %v2402 = vmul.f32 %v2347, 1.442695
      %v2403 = vpow.pop %v2402
      %v2404 = vmul.f32 %v2348, 1.442695
      %v2405 = vpow.pop %v2404
      %v2406 = vmul.f32 %v2349, 1.442695
      %v2407 = vpow.pop %v2406
      %v2408 = vmul.f32 %v2350, 1.442695
      %v2409 = vpow.pop %v2408
      %v2410 = vmul.f32 %v2351, 1.442695
      %v2411 = vpow.pop %v2410
      %v2412 = vmul.f32 %v2352, 1.442695
      %v2413 = vpow.pop %v2412
      %v2414 = vmul.f32 %v2353, 1.442695
      %v2415 = vpow.pop %v2414
      %v2416 = vmul.f32 %v2354, 1.442695
      %v2417 = vpow.pop %v2416
      %v2418 = vmul.f32 %v2355, 1.442695
      %v2419 = vpow.pop %v2418
      %v2420 = vadd.f32 %v2357, 1.0
      %v2421 = vadd.f32 %v2359, 1.0
      %v2422 = vadd.f32 %v2361, 1.0
      %v2423 = vadd.f32 %v2363, 1.0
      %v2424 = vadd.f32 %v2365, 1.0
      %v2425 = vadd.f32 %v2367, 1.0
      %v2426 = vadd.f32 %v2369, 1.0
      %v2427 = vadd.f32 %v2371, 1.0
      %v2428 = vadd.f32 %v2373, 1.0
      %v2429 = vadd.f32 %v2375, 1.0
      %v2430 = vadd.f32 %v2377, 1.0
      %v2431 = vadd.f32 %v2379, 1.0
      %v2432 = vadd.f32 %v2381, 1.0
      %v2433 = vadd.f32 %v2383, 1.0
      %v2434 = vadd.f32 %v2385, 1.0
      %v2435 = vadd.f32 %v2387, 1.0
      %v2436 = vadd.f32 %v2389, 1.0
      %v2437 = vadd.f32 %v2391, 1.0
      %v2438 = vadd.f32 %v2393, 1.0
      %v2439 = vadd.f32 %v2395, 1.0
      %v2440 = vadd.f32 %v2397, 1.0
      %v2441 = vadd.f32 %v2399, 1.0
      %v2442 = vadd.f32 %v2401, 1.0
      %v2443 = vadd.f32 %v2403, 1.0
      %v2444 = vadd.f32 %v2405, 1.0
      %v2445 = vadd.f32 %v2407, 1.0
      %v2446 = vadd.f32 %v2409, 1.0
      %v2447 = vadd.f32 %v2411, 1.0
      %v2448 = vadd.f32 %v2413, 1.0
      %v2449 = vadd.f32 %v2415, 1.0
      %v2450 = vadd.f32 %v2417, 1.0
      %v2451 = vadd.f32 %v2419, 1.0
      %v2452 = vrcp.pop %v2420
      %v2453 = vmul.f32 1.0, %v2452
      %v2454 = vrcp.pop %v2421
      %v2455 = vmul.f32 1.0, %v2454
      %v2456 = vrcp.pop %v2422
      %v2457 = vmul.f32 1.0, %v2456
      %v2458 = vrcp.pop %v2423
      %v2459 = vmul.f32 1.0, %v2458
      %v2460 = vrcp.pop %v2424
      %v2461 = vmul.f32 1.0, %v2460
      %v2462 = vrcp.pop %v2425
      %v2463 = vmul.f32 1.0, %v2462
      %v2464 = vrcp.pop %v2426
      %v2465 = vmul.f32 1.0, %v2464
      %v2466 = vrcp.pop %v2427
      %v2467 = vmul.f32 1.0, %v2466
      %v2468 = vrcp.pop %v2428
      %v2469 = vmul.f32 1.0, %v2468
      %v2470 = vrcp.pop %v2429
      %v2471 = vmul.f32 1.0, %v2470
      %v2472 = vrcp.pop %v2430
      %v2473 = vmul.f32 1.0, %v2472
      %v2474 = vrcp.pop %v2431
      %v2475 = vmul.f32 1.0, %v2474
      %v2476 = vrcp.pop %v2432
      %v2477 = vmul.f32 1.0, %v2476
      %v2478 = vrcp.pop %v2433
      %v2479 = vmul.f32 1.0, %v2478
      %v2480 = vrcp.pop %v2434
      %v2481 = vmul.f32 1.0, %v2480
      %v2482 = vrcp.pop %v2435
      %v2483 = vmul.f32 1.0, %v2482
      %v2484 = vrcp.pop %v2436
      %v2485 = vmul.f32 1.0, %v2484
      %v2486 = vrcp.pop %v2437
      %v2487 = vmul.f32 1.0, %v2486
      %v2488 = vrcp.pop %v2438
      %v2489 = vmul.f32 1.0, %v2488
      %v2490 = vrcp.pop %v2439
      %v2491 = vmul.f32 1.0, %v2490
      %v2492 = vrcp.pop %v2440
      %v2493 = vmul.f32 1.0, %v2492
      %v2494 = vrcp.pop %v2441
      %v2495 = vmul.f32 1.0, %v2494
      %v2496 = vrcp.pop %v2442
      %v2497 = vmul.f32 1.0, %v2496
      %v2498 = vrcp.pop %v2443
      %v2499 = vmul.f32 1.0, %v2498
      %v2500 = vrcp.pop %v2444
      %v2501 = vmul.f32 1.0, %v2500
      %v2502 = vrcp.pop %v2445
      %v2503 = vmul.f32 1.0, %v2502
      %v2504 = vrcp.pop %v2446
      %v2505 = vmul.f32 1.0, %v2504
      %v2506 = vrcp.pop %v2447
      %v2507 = vmul.f32 1.0, %v2506
      %v2508 = vrcp.pop %v2448
      %v2509 = vmul.f32 1.0, %v2508
      %v2510 = vrcp.pop %v2449
      %v2511 = vmul.f32 1.0, %v2510
      %v2512 = vrcp.pop %v2450
      %v2513 = vmul.f32 1.0, %v2512
      %v2514 = vrcp.pop %v2451
      %v2515 = vmul.f32 1.0, %v2514
      %v2516 = vmul.f32 %v2292, %v2453
      %v2517 = vmul.f32 %v2293, %v2455
      %v2518 = vmul.f32 %v2294, %v2457
      %v2519 = vmul.f32 %v2295, %v2459
      %v2520 = vmul.f32 %v2296, %v2461
      %v2521 = vmul.f32 %v2297, %v2463
      %v2522 = vmul.f32 %v2298, %v2465
      %v2523 = vmul.f32 %v2299, %v2467
      %v2524 = vmul.f32 %v2300, %v2469
      %v2525 = vmul.f32 %v2301, %v2471
      %v2526 = vmul.f32 %v2302, %v2473
      %v2527 = vmul.f32 %v2303, %v2475
      %v2528 = vmul.f32 %v2304, %v2477
      %v2529 = vmul.f32 %v2305, %v2479
      %v2530 = vmul.f32 %v2306, %v2481
      %v2531 = vmul.f32 %v2307, %v2483
      %v2532 = vmul.f32 %v2308, %v2485
      %v2533 = vmul.f32 %v2309, %v2487
      %v2534 = vmul.f32 %v2310, %v2489
      %v2535 = vmul.f32 %v2311, %v2491
      %v2536 = vmul.f32 %v2312, %v2493
      %v2537 = vmul.f32 %v2313, %v2495
      %v2538 = vmul.f32 %v2314, %v2497
      %v2539 = vmul.f32 %v2315, %v2499
      %v2540 = vmul.f32 %v2316, %v2501
      %v2541 = vmul.f32 %v2317, %v2503
      %v2542 = vmul.f32 %v2318, %v2505
      %v2543 = vmul.f32 %v2319, %v2507
      %v2544 = vmul.f32 %v2320, %v2509
      %v2545 = vmul.f32 %v2321, %v2511
      %v2546 = vmul.f32 %v2322, %v2513
      %v2547 = vmul.f32 %v2323, %v2515
      %vm2548 = vcmask 64512
      %2549 = vst.msk [vmem:[%s315] sm:$0xff] %vm2548, %v2516
      %2550 = vst.msk [vmem:[%s315 + $0x8] sm:$0xff] %vm2548, %v2517
      %2551 = vst.msk [vmem:[%s315 + $0x10] sm:$0xff] %vm2548, %v2518
      %2552 = vst.msk [vmem:[%s315 + $0x18] sm:$0xff] %vm2548, %v2519
      %2553 = vst.msk [vmem:[%s315 + $0x20] sm:$0xff] %vm2548, %v2520
      %2554 = vst.msk [vmem:[%s315 + $0x28] sm:$0xff] %vm2548, %v2521
      %2555 = vst.msk [vmem:[%s315 + $0x30] sm:$0xff] %vm2548, %v2522
      %2556 = vst.msk [vmem:[%s315 + $0x38] sm:$0xff] %vm2548, %v2523
      %2557 = vst.msk [vmem:[%s315 + $0x40] sm:$0xff] %vm2548, %v2524
      %2558 = vst.msk [vmem:[%s315 + $0x48] sm:$0xff] %vm2548, %v2525
      %2559 = vst.msk [vmem:[%s315 + $0x50] sm:$0xff] %vm2548, %v2526
      %2560 = vst.msk [vmem:[%s315 + $0x58] sm:$0xff] %vm2548, %v2527
      %2561 = vst.msk [vmem:[%s315 + $0x60] sm:$0xff] %vm2548, %v2528
      %2562 = vst.msk [vmem:[%s315 + $0x68] sm:$0xff] %vm2548, %v2529
      %2563 = vst.msk [vmem:[%s315 + $0x70] sm:$0xff] %vm2548, %v2530
      %2564 = vst.msk [vmem:[%s315 + $0x78] sm:$0xff] %vm2548, %v2531
      %2565 = vst.msk [vmem:[%s315 + $0x80] sm:$0xff] %vm2548, %v2532
      %2566 = vst.msk [vmem:[%s315 + $0x88] sm:$0xff] %vm2548, %v2533
      %2567 = vst.msk [vmem:[%s315 + $0x90] sm:$0xff] %vm2548, %v2534
      %2568 = vst.msk [vmem:[%s315 + $0x98] sm:$0xff] %vm2548, %v2535
      %2569 = vst.msk [vmem:[%s315 + $0xa0] sm:$0xff] %vm2548, %v2536
      %2570 = vst.msk [vmem:[%s315 + $0xa8] sm:$0xff] %vm2548, %v2537
      %2571 = vst.msk [vmem:[%s315 + $0xb0] sm:$0xff] %vm2548, %v2538
      %2572 = vst.msk [vmem:[%s315 + $0xb8] sm:$0xff] %vm2548, %v2539
      %2573 = vst.msk [vmem:[%s315 + $0xc0] sm:$0xff] %vm2548, %v2540
      %2574 = vst.msk [vmem:[%s315 + $0xc8] sm:$0xff] %vm2548, %v2541
      %2575 = vst.msk [vmem:[%s315 + $0xd0] sm:$0xff] %vm2548, %v2542
      %2576 = vst.msk [vmem:[%s315 + $0xd8] sm:$0xff] %vm2548, %v2543
      %2577 = vst.msk [vmem:[%s315 + $0xe0] sm:$0xff] %vm2548, %v2544
      %2578 = vst.msk [vmem:[%s315 + $0xe8] sm:$0xff] %vm2548, %v2545
      %2579 = vst.msk [vmem:[%s315 + $0xf0] sm:$0xff] %vm2548, %v2546
      %2580 = vst.msk [vmem:[%s315 + $0xf8] sm:$0xff] %vm2548, %v2547
      %v2581 = vld [vmem:[%s4] sm:$0xff]
      %v2582 = vld [vmem:[%s4 + $0x8] sm:$0xff]
      %2583 = vmatprep.subr.mxu0 0.0
      %v2584 = vand.u32 %v2581, 4294901760
      %2585 = vmatpush1.msra.mxu0 %v2584
      %2586 = vmatprep.subr.mxu0 0.0
      %v2587 = vand.u32 %v2582, 4294901760
      %2588 = vmatpush1.msra.mxu0 %v2587
      %2589 = vmatprep.subr.mxu0 0.0
      %2590 = vmatpush1.msra.mxu0 0.0
      %2591 = vmatprep.subr.mxu0 0.0
      %2592 = vmatpush1.msra.mxu0 0.0
      %2593 = vmatprep.subr.mxu0 0.0
      %2594 = vmatpush1.msra.mxu0 0.0
      %2595 = vmatprep.subr.mxu0 0.0
      %2596 = vmatpush1.msra.mxu0 0.0
      %2597 = vmatprep.subr.mxu0 0.0
      %2598 = vmatpush1.msra.mxu0 0.0
      %2599 = vmatprep.subr.mxu0 0.0
      %2600 = vmatpush1.msra.mxu0 0.0
      %2601 = vmatprep.subr.mxu0 0.0
      %2602 = vmatpush1.msra.mxu0 0.0
      %2603 = vmatprep.subr.mxu0 0.0
      %2604 = vmatpush1.msra.mxu0 0.0
      %2605 = vmatprep.subr.mxu0 0.0
      %2606 = vmatpush1.msra.mxu0 0.0
      %2607 = vmatprep.subr.mxu0 0.0
      %2608 = vmatpush1.msra.mxu0 0.0
      %2609 = vmatprep.subr.mxu0 0.0
      %2610 = vmatpush1.msra.mxu0 0.0
      %2611 = vmatprep.subr.mxu0 0.0
      %2612 = vmatpush1.msra.mxu0 0.0
      %2613 = vmatprep.subr.mxu0 0.0
      %2614 = vmatpush1.msra.mxu0 0.0
      %2615 = vmatprep.subr.mxu0 0.0
      %2616 = vmatpush1.msra.mxu0 0.0
      %2617 = vmatprep.subr.mxu0 0.0
      %2618 = vmatpush1.msra.mxu0 0.0
      %2619 = vmatprep.subr.mxu0 0.0
      %2620 = vmatpush1.msra.mxu0 0.0
      %2621 = vmatprep.subr.mxu0 0.0
      %2622 = vmatpush1.msra.mxu0 0.0
      %2623 = vmatprep.subr.mxu0 0.0
      %2624 = vmatpush1.msra.mxu0 0.0
      %2625 = vmatprep.subr.mxu0 0.0
      %2626 = vmatpush1.msra.mxu0 0.0
      %2627 = vmatprep.subr.mxu0 0.0
      %2628 = vmatpush1.msra.mxu0 0.0
      %2629 = vmatprep.subr.mxu0 0.0
      %2630 = vmatpush1.msra.mxu0 0.0
      %2631 = vmatprep.subr.mxu0 0.0
      %2632 = vmatpush1.msra.mxu0 0.0
      %2633 = vmatprep.subr.mxu0 0.0
      %2634 = vmatpush1.msra.mxu0 0.0
      %2635 = vmatprep.subr.mxu0 0.0
      %2636 = vmatpush1.msra.mxu0 0.0
      %2637 = vmatprep.subr.mxu0 0.0
      %2638 = vmatpush1.msra.mxu0 0.0
      %2639 = vmatprep.subr.mxu0 0.0
      %2640 = vmatpush1.msra.mxu0 0.0
      %2641 = vmatprep.subr.mxu0 0.0
      %2642 = vmatpush1.msra.mxu0 0.0
      %2643 = vmatprep.subr.mxu0 0.0
      %2644 = vmatpush1.msra.mxu0 0.0
      %2645 = vmatprep.subr.mxu0 0.0
      %2646 = vmatpush1.msra.mxu0 0.0
      %2647 = vmatprep.subr.mxu0 0.0
      %2648 = vmatpush1.msra.mxu0 0.0
      %2649 = vmatprep.mubr.f32.mxu0 0.0
      %v2650 = vand.u32 %v359, 4294901760
      %v2651 = vsub.f32 %v359, %v2650
      %v2652 = vand.u32 %v2651, 4294901760
      %v2653 = vsub.f32 %v2651, %v2652
      %v2654 = vand.u32 %v2653, 4294901760
      %2655 = vmatmul.mubr.f32.gmra.mrb[0].mxu0 %v2654
      %v2656 = vpop.f32.mrb[0].mxu0
      %v2657 = vadd.f32 0.0, %v2656
      %v2658 = vpop.f32.mrb[0].mxu0
      %2659 = vmatprep.mubr.f32.mxu0 0.0
      %v2660 = vand.u32 %v362, 4294901760
      %v2661 = vsub.f32 %v362, %v2660
      %v2662 = vand.u32 %v2661, 4294901760
      %v2663 = vsub.f32 %v2661, %v2662
      %v2664 = vand.u32 %v2663, 4294901760
      %2665 = vmatmul.mubr.f32.gmra.mrb[0].mxu0 %v2664
      %v2666 = vpop.f32.mrb[0].mxu0
      %v2667 = vadd.f32 0.0, %v2666
      %v2668 = vpop.f32.mrb[0].mxu0
      %2669 = vmatprep.mubr.f32.mxu0 0.0
      %v2670 = vand.u32 %v365, 4294901760
      %v2671 = vsub.f32 %v365, %v2670
      %v2672 = vand.u32 %v2671, 4294901760
      %v2673 = vsub.f32 %v2671, %v2672
      %v2674 = vand.u32 %v2673, 4294901760
      %2675 = vmatmul.mubr.f32.gmra.mrb[0].mxu0 %v2674
      %v2676 = vpop.f32.mrb[0].mxu0
      %v2677 = vadd.f32 0.0, %v2676
      %v2678 = vpop.f32.mrb[0].mxu0
      %2679 = vmatprep.mubr.f32.mxu0 0.0
      %v2680 = vand.u32 %v368, 4294901760
      %v2681 = vsub.f32 %v368, %v2680
      %v2682 = vand.u32 %v2681, 4294901760
      %v2683 = vsub.f32 %v2681, %v2682
      %v2684 = vand.u32 %v2683, 4294901760
      %2685 = vmatmul.mubr.f32.gmra.mrb[0].mxu0 %v2684
      %v2686 = vpop.f32.mrb[0].mxu0
      %v2687 = vadd.f32 0.0, %v2686
      %v2688 = vpop.f32.mrb[0].mxu0
      %2689 = vmatprep.mubr.f32.mxu0 0.0
      %v2690 = vand.u32 %v371, 4294901760
      %v2691 = vsub.f32 %v371, %v2690
      %v2692 = vand.u32 %v2691, 4294901760
      %v2693 = vsub.f32 %v2691, %v2692
      %v2694 = vand.u32 %v2693, 4294901760
      %2695 = vmatmul.mubr.f32.gmra.mrb[0].mxu0 %v2694
      %v2696 = vpop.f32.mrb[0].mxu0
      %v2697 = vadd.f32 0.0, %v2696
      %v2698 = vpop.f32.mrb[0].mxu0
      %2699 = vmatprep.mubr.f32.mxu0 0.0
      %v2700 = vand.u32 %v374, 4294901760
      %v2701 = vsub.f32 %v374, %v2700
      %v2702 = vand.u32 %v2701, 4294901760
      %v2703 = vsub.f32 %v2701, %v2702
      %v2704 = vand.u32 %v2703, 4294901760
      %2705 = vmatmul.mubr.f32.gmra.mrb[0].mxu0 %v2704
      %v2706 = vpop.f32.mrb[0].mxu0
      %v2707 = vadd.f32 0.0, %v2706
      %v2708 = vpop.f32.mrb[0].mxu0
      %2709 = vmatprep.mubr.f32.mxu0 0.0
      %v2710 = vand.u32 %v377, 4294901760
      %v2711 = vsub.f32 %v377, %v2710
      %v2712 = vand.u32 %v2711, 4294901760
      %v2713 = vsub.f32 %v2711, %v2712
      %v2714 = vand.u32 %v2713, 4294901760
      %2715 = vmatmul.mubr.f32.gmra.mrb[0].mxu0 %v2714
      %v2716 = vpop.f32.mrb[0].mxu0
      %v2717 = vadd.f32 0.0, %v2716
      %v2718 = vpop.f32.mrb[0].mxu0
      %2719 = vmatprep.mubr.f32.mxu0 0.0
      %v2720 = vand.u32 %v380, 4294901760
      %v2721 = vsub.f32 %v380, %v2720
      %v2722 = vand.u32 %v2721, 4294901760
      %v2723 = vsub.f32 %v2721, %v2722
      %v2724 = vand.u32 %v2723, 4294901760
      %2725 = vmatmul.mubr.f32.gmra.mrb[0].mxu0 %v2724
      %v2726 = vpop.f32.mrb[0].mxu0
      %v2727 = vadd.f32 0.0, %v2726
      %v2728 = vpop.f32.mrb[0].mxu0
      %2729 = vmatprep.mubr.f32.mxu0 0.0
      %v2730 = vand.u32 %v383, 4294901760
      %v2731 = vsub.f32 %v383, %v2730
      %v2732 = vand.u32 %v2731, 4294901760
      %v2733 = vsub.f32 %v2731, %v2732
      %v2734 = vand.u32 %v2733, 4294901760
      %2735 = vmatmul.mubr.f32.gmra.mrb[0].mxu0 %v2734
      %v2736 = vpop.f32.mrb[0].mxu0
      %v2737 = vadd.f32 0.0, %v2736
      %v2738 = vpop.f32.mrb[0].mxu0
      %2739 = vmatprep.mubr.f32.mxu0 0.0
      %v2740 = vand.u32 %v386, 4294901760
      %v2741 = vsub.f32 %v386, %v2740
      %v2742 = vand.u32 %v2741, 4294901760
      %v2743 = vsub.f32 %v2741, %v2742
      %v2744 = vand.u32 %v2743, 4294901760
      %2745 = vmatmul.mubr.f32.gmra.mrb[0].mxu0 %v2744
      %v2746 = vpop.f32.mrb[0].mxu0
      %v2747 = vadd.f32 0.0, %v2746
      %v2748 = vpop.f32.mrb[0].mxu0
      %2749 = vmatprep.mubr.f32.mxu0 0.0
      %v2750 = vand.u32 %v389, 4294901760
      %v2751 = vsub.f32 %v389, %v2750
      %v2752 = vand.u32 %v2751, 4294901760
      %v2753 = vsub.f32 %v2751, %v2752
      %v2754 = vand.u32 %v2753, 4294901760
      %2755 = vmatmul.mubr.f32.gmra.mrb[0].mxu0 %v2754
      %v2756 = vpop.f32.mrb[0].mxu0
      %v2757 = vadd.f32 0.0, %v2756
      %v2758 = vpop.f32.mrb[0].mxu0
      %2759 = vmatprep.mubr.f32.mxu0 0.0
      %v2760 = vand.u32 %v392, 4294901760
      %v2761 = vsub.f32 %v392, %v2760
      %v2762 = vand.u32 %v2761, 4294901760
      %v2763 = vsub.f32 %v2761, %v2762
      %v2764 = vand.u32 %v2763, 4294901760
      %2765 = vmatmul.mubr.f32.gmra.mrb[0].mxu0 %v2764
      %v2766 = vpop.f32.mrb[0].mxu0
      %v2767 = vadd.f32 0.0, %v2766
      %v2768 = vpop.f32.mrb[0].mxu0
      %2769 = vmatprep.mubr.f32.mxu0 0.0
      %v2770 = vand.u32 %v395, 4294901760
      %v2771 = vsub.f32 %v395, %v2770
      %v2772 = vand.u32 %v2771, 4294901760
      %v2773 = vsub.f32 %v2771, %v2772
      %v2774 = vand.u32 %v2773, 4294901760
      %2775 = vmatmul.mubr.f32.gmra.mrb[0].mxu0 %v2774
      %v2776 = vpop.f32.mrb[0].mxu0
      %v2777 = vadd.f32 0.0, %v2776
      %v2778 = vpop.f32.mrb[0].mxu0
      %2779 = vmatprep.mubr.f32.mxu0 0.0
      %v2780 = vand.u32 %v398, 4294901760
      %v2781 = vsub.f32 %v398, %v2780
      %v2782 = vand.u32 %v2781, 4294901760
      %v2783 = vsub.f32 %v2781, %v2782
      %v2784 = vand.u32 %v2783, 4294901760
      %2785 = vmatmul.mubr.f32.gmra.mrb[0].mxu0 %v2784
      %v2786 = vpop.f32.mrb[0].mxu0
      %v2787 = vadd.f32 0.0, %v2786
      %v2788 = vpop.f32.mrb[0].mxu0
      %2789 = vmatprep.mubr.f32.mxu0 0.0
      %v2790 = vand.u32 %v401, 4294901760
      %v2791 = vsub.f32 %v401, %v2790
      %v2792 = vand.u32 %v2791, 4294901760
      %v2793 = vsub.f32 %v2791, %v2792
      %v2794 = vand.u32 %v2793, 4294901760
      %2795 = vmatmul.mubr.f32.gmra.mrb[0].mxu0 %v2794
      %v2796 = vpop.f32.mrb[0].mxu0
      %v2797 = vadd.f32 0.0, %v2796
      %v2798 = vpop.f32.mrb[0].mxu0
      %2799 = vmatprep.mubr.f32.mxu0 0.0
      %v2800 = vand.u32 %v404, 4294901760
      %v2801 = vsub.f32 %v404, %v2800
      %v2802 = vand.u32 %v2801, 4294901760
      %v2803 = vsub.f32 %v2801, %v2802
      %v2804 = vand.u32 %v2803, 4294901760
      %2805 = vmatmul.mubr.f32.gmra.mrb[0].mxu0 %v2804
      %v2806 = vpop.f32.mrb[0].mxu0
      %v2807 = vadd.f32 0.0, %v2806
      %v2808 = vpop.f32.mrb[0].mxu0
      %2809 = vmatprep.mubr.f32.mxu0 0.0
      %v2810 = vand.u32 %v407, 4294901760
      %v2811 = vsub.f32 %v407, %v2810
      %v2812 = vand.u32 %v2811, 4294901760
      %v2813 = vsub.f32 %v2811, %v2812
      %v2814 = vand.u32 %v2813, 4294901760
      %2815 = vmatmul.mubr.f32.gmra.mrb[0].mxu0 %v2814
      %v2816 = vpop.f32.mrb[0].mxu0
      %v2817 = vadd.f32 0.0, %v2816
      %v2818 = vpop.f32.mrb[0].mxu0
      %2819 = vmatprep.mubr.f32.mxu0 0.0
      %v2820 = vand.u32 %v410, 4294901760
      %v2821 = vsub.f32 %v410, %v2820
      %v2822 = vand.u32 %v2821, 4294901760
      %v2823 = vsub.f32 %v2821, %v2822
      %v2824 = vand.u32 %v2823, 4294901760
      %2825 = vmatmul.mubr.f32.gmra.mrb[0].mxu0 %v2824
      %v2826 = vpop.f32.mrb[0].mxu0
      %v2827 = vadd.f32 0.0, %v2826
      %v2828 = vpop.f32.mrb[0].mxu0
      %2829 = vmatprep.mubr.f32.mxu0 0.0
      %v2830 = vand.u32 %v413, 4294901760
      %v2831 = vsub.f32 %v413, %v2830
      %v2832 = vand.u32 %v2831, 4294901760
      %v2833 = vsub.f32 %v2831, %v2832
      %v2834 = vand.u32 %v2833, 4294901760
      %2835 = vmatmul.mubr.f32.gmra.mrb[0].mxu0 %v2834
      %v2836 = vpop.f32.mrb[0].mxu0
      %v2837 = vadd.f32 0.0, %v2836
      %v2838 = vpop.f32.mrb[0].mxu0
      %2839 = vmatprep.mubr.f32.mxu0 0.0
      %v2840 = vand.u32 %v416, 4294901760
      %v2841 = vsub.f32 %v416, %v2840
      %v2842 = vand.u32 %v2841, 4294901760
      %v2843 = vsub.f32 %v2841, %v2842
      %v2844 = vand.u32 %v2843, 4294901760
      %2845 = vmatmul.mubr.f32.gmra.mrb[0].mxu0 %v2844
      %v2846 = vpop.f32.mrb[0].mxu0
      %v2847 = vadd.f32 0.0, %v2846
      %v2848 = vpop.f32.mrb[0].mxu0
      %2849 = vmatprep.mubr.f32.mxu0 0.0
      %v2850 = vand.u32 %v419, 4294901760
      %v2851 = vsub.f32 %v419, %v2850
      %v2852 = vand.u32 %v2851, 4294901760
      %v2853 = vsub.f32 %v2851, %v2852
      %v2854 = vand.u32 %v2853, 4294901760
      %2855 = vmatmul.mubr.f32.gmra.mrb[0].mxu0 %v2854
      %v2856 = vpop.f32.mrb[0].mxu0
      %v2857 = vadd.f32 0.0, %v2856
      %v2858 = vpop.f32.mrb[0].mxu0
      %2859 = vmatprep.mubr.f32.mxu0 0.0
      %v2860 = vand.u32 %v422, 4294901760
      %v2861 = vsub.f32 %v422, %v2860
      %v2862 = vand.u32 %v2861, 4294901760
      %v2863 = vsub.f32 %v2861, %v2862
      %v2864 = vand.u32 %v2863, 4294901760
      %2865 = vmatmul.mubr.f32.gmra.mrb[0].mxu0 %v2864
      %v2866 = vpop.f32.mrb[0].mxu0
      %v2867 = vadd.f32 0.0, %v2866
      %v2868 = vpop.f32.mrb[0].mxu0
      %2869 = vmatprep.mubr.f32.mxu0 0.0
      %v2870 = vand.u32 %v425, 4294901760
      %v2871 = vsub.f32 %v425, %v2870
      %v2872 = vand.u32 %v2871, 4294901760
      %v2873 = vsub.f32 %v2871, %v2872
      %v2874 = vand.u32 %v2873, 4294901760
      %2875 = vmatmul.mubr.f32.gmra.mrb[0].mxu0 %v2874
      %v2876 = vpop.f32.mrb[0].mxu0
      %v2877 = vadd.f32 0.0, %v2876
      %v2878 = vpop.f32.mrb[0].mxu0
      %2879 = vmatprep.mubr.f32.mxu0 0.0
      %v2880 = vand.u32 %v428, 4294901760
      %v2881 = vsub.f32 %v428, %v2880
      %v2882 = vand.u32 %v2881, 4294901760
      %v2883 = vsub.f32 %v2881, %v2882
      %v2884 = vand.u32 %v2883, 4294901760
      %2885 = vmatmul.mubr.f32.gmra.mrb[0].mxu0 %v2884
      %v2886 = vpop.f32.mrb[0].mxu0
      %v2887 = vadd.f32 0.0, %v2886
      %v2888 = vpop.f32.mrb[0].mxu0
      %2889 = vmatprep.mubr.f32.mxu0 0.0
      %v2890 = vand.u32 %v431, 4294901760
      %v2891 = vsub.f32 %v431, %v2890
      %v2892 = vand.u32 %v2891, 4294901760
      %v2893 = vsub.f32 %v2891, %v2892
      %v2894 = vand.u32 %v2893, 4294901760
      %2895 = vmatmul.mubr.f32.gmra.mrb[0].mxu0 %v2894
      %v2896 = vpop.f32.mrb[0].mxu0
      %v2897 = vadd.f32 0.0, %v2896
      %v2898 = vpop.f32.mrb[0].mxu0
      %2899 = vmatprep.mubr.f32.mxu0 0.0
      %v2900 = vand.u32 %v434, 4294901760
      %v2901 = vsub.f32 %v434, %v2900
      %v2902 = vand.u32 %v2901, 4294901760
      %v2903 = vsub.f32 %v2901, %v2902
      %v2904 = vand.u32 %v2903, 4294901760
      %2905 = vmatmul.mubr.f32.gmra.mrb[0].mxu0 %v2904
      %v2906 = vpop.f32.mrb[0].mxu0
      %v2907 = vadd.f32 0.0, %v2906
      %v2908 = vpop.f32.mrb[0].mxu0
      %2909 = vmatprep.mubr.f32.mxu0 0.0
      %v2910 = vand.u32 %v437, 4294901760
      %v2911 = vsub.f32 %v437, %v2910
      %v2912 = vand.u32 %v2911, 4294901760
      %v2913 = vsub.f32 %v2911, %v2912
      %v2914 = vand.u32 %v2913, 4294901760
      %2915 = vmatmul.mubr.f32.gmra.mrb[0].mxu0 %v2914
      %v2916 = vpop.f32.mrb[0].mxu0
      %v2917 = vadd.f32 0.0, %v2916
      %v2918 = vpop.f32.mrb[0].mxu0
      %2919 = vmatprep.mubr.f32.mxu0 0.0
      %v2920 = vand.u32 %v440, 4294901760
      %v2921 = vsub.f32 %v440, %v2920
      %v2922 = vand.u32 %v2921, 4294901760
      %v2923 = vsub.f32 %v2921, %v2922
      %v2924 = vand.u32 %v2923, 4294901760
      %2925 = vmatmul.mubr.f32.gmra.mrb[0].mxu0 %v2924
      %v2926 = vpop.f32.mrb[0].mxu0
      %v2927 = vadd.f32 0.0, %v2926
      %v2928 = vpop.f32.mrb[0].mxu0
      %2929 = vmatprep.mubr.f32.mxu0 0.0
      %v2930 = vand.u32 %v443, 4294901760
      %v2931 = vsub.f32 %v443, %v2930
      %v2932 = vand.u32 %v2931, 4294901760
      %v2933 = vsub.f32 %v2931, %v2932
      %v2934 = vand.u32 %v2933, 4294901760
      %2935 = vmatmul.mubr.f32.gmra.mrb[0].mxu0 %v2934
      %v2936 = vpop.f32.mrb[0].mxu0
      %v2937 = vadd.f32 0.0, %v2936
      %v2938 = vpop.f32.mrb[0].mxu0
      %2939 = vmatprep.mubr.f32.mxu0 0.0
      %v2940 = vand.u32 %v446, 4294901760
      %v2941 = vsub.f32 %v446, %v2940
      %v2942 = vand.u32 %v2941, 4294901760
      %v2943 = vsub.f32 %v2941, %v2942
      %v2944 = vand.u32 %v2943, 4294901760
      %2945 = vmatmul.mubr.f32.gmra.mrb[0].mxu0 %v2944
      %v2946 = vpop.f32.mrb[0].mxu0
      %v2947 = vadd.f32 0.0, %v2946
      %v2948 = vpop.f32.mrb[0].mxu0
      %2949 = vmatprep.mubr.f32.mxu0 0.0
      %v2950 = vand.u32 %v449, 4294901760
      %v2951 = vsub.f32 %v449, %v2950
      %v2952 = vand.u32 %v2951, 4294901760
      %v2953 = vsub.f32 %v2951, %v2952
      %v2954 = vand.u32 %v2953, 4294901760
      %2955 = vmatmul.mubr.f32.gmra.mrb[0].mxu0 %v2954
      %v2956 = vpop.f32.mrb[0].mxu0
      %v2957 = vadd.f32 0.0, %v2956
      %v2958 = vpop.f32.mrb[0].mxu0
      %2959 = vmatprep.mubr.f32.mxu0 0.0
      %v2960 = vand.u32 %v452, 4294901760
      %v2961 = vsub.f32 %v452, %v2960
      %v2962 = vand.u32 %v2961, 4294901760
      %v2963 = vsub.f32 %v2961, %v2962
      %v2964 = vand.u32 %v2963, 4294901760
      %2965 = vmatmul.mubr.f32.gmra.mrb[0].mxu0 %v2964
      %v2966 = vpop.f32.mrb[0].mxu0
      %v2967 = vadd.f32 0.0, %v2966
      %v2968 = vpop.f32.mrb[0].mxu0
      %2969 = vdwg.mxu0
      %2970 = vmatprep.subr.mxu0 0.0
      %v2971 = vand.u32 %v2581, 4294901760
      %v2972 = vsub.f32 %v2581, %v2971
      %v2973 = vand.u32 %v2972, 4294901760
      %v2974 = vsub.f32 %v2972, %v2973
      %v2975 = vand.u32 %v2974, 4294901760
      %2976 = vmatpush1.msra.mxu0 %v2975
      %2977 = vmatprep.subr.mxu0 0.0
      %v2978 = vand.u32 %v2582, 4294901760
      %v2979 = vsub.f32 %v2582, %v2978
      %v2980 = vand.u32 %v2979, 4294901760
      %v2981 = vsub.f32 %v2979, %v2980
      %v2982 = vand.u32 %v2981, 4294901760
      %2983 = vmatpush1.msra.mxu0 %v2982
      %2984 = vmatprep.subr.mxu0 0.0
      %2985 = vmatpush1.msra.mxu0 0.0
      %2986 = vmatprep.subr.mxu0 0.0
      %2987 = vmatpush1.msra.mxu0 0.0
      %2988 = vmatprep.subr.mxu0 0.0
      %2989 = vmatpush1.msra.mxu0 0.0
      %2990 = vmatprep.subr.mxu0 0.0
      %2991 = vmatpush1.msra.mxu0 0.0
      %2992 = vmatprep.subr.mxu0 0.0
      %2993 = vmatpush1.msra.mxu0 0.0
      %2994 = vmatprep.subr.mxu0 0.0
      %2995 = vmatpush1.msra.mxu0 0.0
      %2996 = vmatprep.subr.mxu0 0.0
      %2997 = vmatpush1.msra.mxu0 0.0
      %2998 = vmatprep.subr.mxu0 0.0
      %2999 = vmatpush1.msra.mxu0 0.0
      %3000 = vmatprep.subr.mxu0 0.0
      %3001 = vmatpush1.msra.mxu0 0.0
      %3002 = vmatprep.subr.mxu0 0.0
      %3003 = vmatpush1.msra.mxu0 0.0
      %3004 = vmatprep.subr.mxu0 0.0
      %3005 = vmatpush1.msra.mxu0 0.0
      %3006 = vmatprep.subr.mxu0 0.0
      %3007 = vmatpush1.msra.mxu0 0.0
      %3008 = vmatprep.subr.mxu0 0.0
      %3009 = vmatpush1.msra.mxu0 0.0
      %3010 = vmatprep.subr.mxu0 0.0
      %3011 = vmatpush1.msra.mxu0 0.0
      %3012 = vmatprep.subr.mxu0 0.0
      %3013 = vmatpush1.msra.mxu0 0.0
      %3014 = vmatprep.subr.mxu0 0.0
      %3015 = vmatpush1.msra.mxu0 0.0
      %3016 = vmatprep.subr.mxu0 0.0
      %3017 = vmatpush1.msra.mxu0 0.0
      %3018 = vmatprep.subr.mxu0 0.0
      %3019 = vmatpush1.msra.mxu0 0.0
      %3020 = vmatprep.subr.mxu0 0.0
      %3021 = vmatpush1.msra.mxu0 0.0
      %3022 = vmatprep.subr.mxu0 0.0
      %3023 = vmatpush1.msra.mxu0 0.0
      %3024 = vmatprep.subr.mxu0 0.0
      %3025 = vmatpush1.msra.mxu0 0.0
      %3026 = vmatprep.subr.mxu0 0.0
      %3027 = vmatpush1.msra.mxu0 0.0
      %3028 = vmatprep.subr.mxu0 0.0
      %3029 = vmatpush1.msra.mxu0 0.0
      %3030 = vmatprep.subr.mxu0 0.0
      %3031 = vmatpush1.msra.mxu0 0.0
      %3032 = vmatprep.subr.mxu0 0.0
      %3033 = vmatpush1.msra.mxu0 0.0
      %3034 = vmatprep.subr.mxu0 0.0
      %3035 = vmatpush1.msra.mxu0 0.0
      %3036 = vmatprep.subr.mxu0 0.0
      %3037 = vmatpush1.msra.mxu0 0.0
      %3038 = vmatprep.subr.mxu0 0.0
      %3039 = vmatpush1.msra.mxu0 0.0
      %3040 = vmatprep.subr.mxu0 0.0
      %3041 = vmatpush1.msra.mxu0 0.0
      %3042 = vmatprep.subr.mxu0 0.0
      %3043 = vmatpush1.msra.mxu0 0.0
      %3044 = vmatprep.mubr.f32.mxu0 0.0
      %v3045 = vand.u32 %v359, 4294901760
      %3046 = vmatmul.mubr.f32.gmra.mrb[0].mxu0 %v3045
      %v3047 = vpop.f32.mrb[0].mxu0
      %v3048 = vadd.f32 %v2657, %v3047
      %v3049 = vpop.f32.mrb[0].mxu0
      %3050 = vmatprep.mubr.f32.mxu0 0.0
      %v3051 = vand.u32 %v362, 4294901760
      %3052 = vmatmul.mubr.f32.gmra.mrb[0].mxu0 %v3051
      %v3053 = vpop.f32.mrb[0].mxu0
      %v3054 = vadd.f32 %v2667, %v3053
      %v3055 = vpop.f32.mrb[0].mxu0
      %3056 = vmatprep.mubr.f32.mxu0 0.0
      %v3057 = vand.u32 %v365, 4294901760
      %3058 = vmatmul.mubr.f32.gmra.mrb[0].mxu0 %v3057
      %v3059 = vpop.f32.mrb[0].mxu0
      %v3060 = vadd.f32 %v2677, %v3059
      %v3061 = vpop.f32.mrb[0].mxu0
      %3062 = vmatprep.mubr.f32.mxu0 0.0
      %v3063 = vand.u32 %v368, 4294901760
      %3064 = vmatmul.mubr.f32.gmra.mrb[0].mxu0 %v3063
      %v3065 = vpop.f32.mrb[0].mxu0
      %v3066 = vadd.f32 %v2687, %v3065
      %v3067 = vpop.f32.mrb[0].mxu0
      %3068 = vmatprep.mubr.f32.mxu0 0.0
      %v3069 = vand.u32 %v371, 4294901760
      %3070 = vmatmul.mubr.f32.gmra.mrb[0].mxu0 %v3069
      %v3071 = vpop.f32.mrb[0].mxu0
      %v3072 = vadd.f32 %v2697, %v3071
      %v3073 = vpop.f32.mrb[0].mxu0
      %3074 = vmatprep.mubr.f32.mxu0 0.0
      %v3075 = vand.u32 %v374, 4294901760
      %3076 = vmatmul.mubr.f32.gmra.mrb[0].mxu0 %v3075
      %v3077 = vpop.f32.mrb[0].mxu0
      %v3078 = vadd.f32 %v2707, %v3077
      %v3079 = vpop.f32.mrb[0].mxu0
      %3080 = vmatprep.mubr.f32.mxu0 0.0
      %v3081 = vand.u32 %v377, 4294901760
      %3082 = vmatmul.mubr.f32.gmra.mrb[0].mxu0 %v3081
      %v3083 = vpop.f32.mrb[0].mxu0
      %v3084 = vadd.f32 %v2717, %v3083
      %v3085 = vpop.f32.mrb[0].mxu0
      %3086 = vmatprep.mubr.f32.mxu0 0.0
      %v3087 = vand.u32 %v380, 4294901760
      %3088 = vmatmul.mubr.f32.gmra.mrb[0].mxu0 %v3087
      %v3089 = vpop.f32.mrb[0].mxu0
      %v3090 = vadd.f32 %v2727, %v3089
      %v3091 = vpop.f32.mrb[0].mxu0
      %3092 = vmatprep.mubr.f32.mxu0 0.0
      %v3093 = vand.u32 %v383, 4294901760
      %3094 = vmatmul.mubr.f32.gmra.mrb[0].mxu0 %v3093
      %v3095 = vpop.f32.mrb[0].mxu0
      %v3096 = vadd.f32 %v2737, %v3095
      %v3097 = vpop.f32.mrb[0].mxu0
      %3098 = vmatprep.mubr.f32.mxu0 0.0
      %v3099 = vand.u32 %v386, 4294901760
      %3100 = vmatmul.mubr.f32.gmra.mrb[0].mxu0 %v3099
      %v3101 = vpop.f32.mrb[0].mxu0
      %v3102 = vadd.f32 %v2747, %v3101
      %v3103 = vpop.f32.mrb[0].mxu0
      %3104 = vmatprep.mubr.f32.mxu0 0.0
      %v3105 = vand.u32 %v389, 4294901760
      %3106 = vmatmul.mubr.f32.gmra.mrb[0].mxu0 %v3105
      %v3107 = vpop.f32.mrb[0].mxu0
      %v3108 = vadd.f32 %v2757, %v3107
      %v3109 = vpop.f32.mrb[0].mxu0
      %3110 = vmatprep.mubr.f32.mxu0 0.0
      %v3111 = vand.u32 %v392, 4294901760
      %3112 = vmatmul.mubr.f32.gmra.mrb[0].mxu0 %v3111
      %v3113 = vpop.f32.mrb[0].mxu0
      %v3114 = vadd.f32 %v2767, %v3113
      %v3115 = vpop.f32.mrb[0].mxu0
      %3116 = vmatprep.mubr.f32.mxu0 0.0
      %v3117 = vand.u32 %v395, 4294901760
      %3118 = vmatmul.mubr.f32.gmra.mrb[0].mxu0 %v3117
      %v3119 = vpop.f32.mrb[0].mxu0
      %v3120 = vadd.f32 %v2777, %v3119
      %v3121 = vpop.f32.mrb[0].mxu0
      %3122 = vmatprep.mubr.f32.mxu0 0.0
      %v3123 = vand.u32 %v398, 4294901760
      %3124 = vmatmul.mubr.f32.gmra.mrb[0].mxu0 %v3123
      %v3125 = vpop.f32.mrb[0].mxu0
      %v3126 = vadd.f32 %v2787, %v3125
      %v3127 = vpop.f32.mrb[0].mxu0
      %3128 = vmatprep.mubr.f32.mxu0 0.0
      %v3129 = vand.u32 %v401, 4294901760
      %3130 = vmatmul.mubr.f32.gmra.mrb[0].mxu0 %v3129
      %v3131 = vpop.f32.mrb[0].mxu0
      %v3132 = vadd.f32 %v2797, %v3131
      %v3133 = vpop.f32.mrb[0].mxu0
      %3134 = vmatprep.mubr.f32.mxu0 0.0
      %v3135 = vand.u32 %v404, 4294901760
      %3136 = vmatmul.mubr.f32.gmra.mrb[0].mxu0 %v3135
      %v3137 = vpop.f32.mrb[0].mxu0
      %v3138 = vadd.f32 %v2807, %v3137
      %v3139 = vpop.f32.mrb[0].mxu0
      %3140 = vmatprep.mubr.f32.mxu0 0.0
      %v3141 = vand.u32 %v407, 4294901760
      %3142 = vmatmul.mubr.f32.gmra.mrb[0].mxu0 %v3141
      %v3143 = vpop.f32.mrb[0].mxu0
      %v3144 = vadd.f32 %v2817, %v3143
      %v3145 = vpop.f32.mrb[0].mxu0
      %3146 = vmatprep.mubr.f32.mxu0 0.0
      %v3147 = vand.u32 %v410, 4294901760
      %3148 = vmatmul.mubr.f32.gmra.mrb[0].mxu0 %v3147
      %v3149 = vpop.f32.mrb[0].mxu0
      %v3150 = vadd.f32 %v2827, %v3149
      %v3151 = vpop.f32.mrb[0].mxu0
      %3152 = vmatprep.mubr.f32.mxu0 0.0
      %v3153 = vand.u32 %v413, 4294901760
      %3154 = vmatmul.mubr.f32.gmra.mrb[0].mxu0 %v3153
      %v3155 = vpop.f32.mrb[0].mxu0
      %v3156 = vadd.f32 %v2837, %v3155
      %v3157 = vpop.f32.mrb[0].mxu0
      %3158 = vmatprep.mubr.f32.mxu0 0.0
      %v3159 = vand.u32 %v416, 4294901760
      %3160 = vmatmul.mubr.f32.gmra.mrb[0].mxu0 %v3159
      %v3161 = vpop.f32.mrb[0].mxu0
      %v3162 = vadd.f32 %v2847, %v3161
      %v3163 = vpop.f32.mrb[0].mxu0
      %3164 = vmatprep.mubr.f32.mxu0 0.0
      %v3165 = vand.u32 %v419, 4294901760
      %3166 = vmatmul.mubr.f32.gmra.mrb[0].mxu0 %v3165
      %v3167 = vpop.f32.mrb[0].mxu0
      %v3168 = vadd.f32 %v2857, %v3167
      %v3169 = vpop.f32.mrb[0].mxu0
      %3170 = vmatprep.mubr.f32.mxu0 0.0
      %v3171 = vand.u32 %v422, 4294901760
      %3172 = vmatmul.mubr.f32.gmra.mrb[0].mxu0 %v3171
      %v3173 = vpop.f32.mrb[0].mxu0
      %v3174 = vadd.f32 %v2867, %v3173
      %v3175 = vpop.f32.mrb[0].mxu0
      %3176 = vmatprep.mubr.f32.mxu0 0.0
      %v3177 = vand.u32 %v425, 4294901760
      %3178 = vmatmul.mubr.f32.gmra.mrb[0].mxu0 %v3177
      %v3179 = vpop.f32.mrb[0].mxu0
      %v3180 = vadd.f32 %v2877, %v3179
      %v3181 = vpop.f32.mrb[0].mxu0
      %3182 = vmatprep.mubr.f32.mxu0 0.0
      %v3183 = vand.u32 %v428, 4294901760
      %3184 = vmatmul.mubr.f32.gmra.mrb[0].mxu0 %v3183
      %v3185 = vpop.f32.mrb[0].mxu0
      %v3186 = vadd.f32 %v2887, %v3185
      %v3187 = vpop.f32.mrb[0].mxu0
      %3188 = vmatprep.mubr.f32.mxu0 0.0
      %v3189 = vand.u32 %v431, 4294901760
      %3190 = vmatmul.mubr.f32.gmra.mrb[0].mxu0 %v3189
      %v3191 = vpop.f32.mrb[0].mxu0
      %v3192 = vadd.f32 %v2897, %v3191
      %v3193 = vpop.f32.mrb[0].mxu0
      %3194 = vmatprep.mubr.f32.mxu0 0.0
      %v3195 = vand.u32 %v434, 4294901760
      %3196 = vmatmul.mubr.f32.gmra.mrb[0].mxu0 %v3195
      %v3197 = vpop.f32.mrb[0].mxu0
      %v3198 = vadd.f32 %v2907, %v3197
      %v3199 = vpop.f32.mrb[0].mxu0
      %3200 = vmatprep.mubr.f32.mxu0 0.0
      %v3201 = vand.u32 %v437, 4294901760
      %3202 = vmatmul.mubr.f32.gmra.mrb[0].mxu0 %v3201
      %v3203 = vpop.f32.mrb[0].mxu0
      %v3204 = vadd.f32 %v2917, %v3203
      %v3205 = vpop.f32.mrb[0].mxu0
      %3206 = vmatprep.mubr.f32.mxu0 0.0
      %v3207 = vand.u32 %v440, 4294901760
      %3208 = vmatmul.mubr.f32.gmra.mrb[0].mxu0 %v3207
      %v3209 = vpop.f32.mrb[0].mxu0
      %v3210 = vadd.f32 %v2927, %v3209
      %v3211 = vpop.f32.mrb[0].mxu0
      %3212 = vmatprep.mubr.f32.mxu0 0.0
      %v3213 = vand.u32 %v443, 4294901760
      %3214 = vmatmul.mubr.f32.gmra.mrb[0].mxu0 %v3213
      %v3215 = vpop.f32.mrb[0].mxu0
      %v3216 = vadd.f32 %v2937, %v3215
      %v3217 = vpop.f32.mrb[0].mxu0
      %3218 = vmatprep.mubr.f32.mxu0 0.0
      %v3219 = vand.u32 %v446, 4294901760
      %3220 = vmatmul.mubr.f32.gmra.mrb[0].mxu0 %v3219
      %v3221 = vpop.f32.mrb[0].mxu0
      %v3222 = vadd.f32 %v2947, %v3221
      %v3223 = vpop.f32.mrb[0].mxu0
      %3224 = vmatprep.mubr.f32.mxu0 0.0
      %v3225 = vand.u32 %v449, 4294901760
      %3226 = vmatmul.mubr.f32.gmra.mrb[0].mxu0 %v3225
      %v3227 = vpop.f32.mrb[0].mxu0
      %v3228 = vadd.f32 %v2957, %v3227
      %v3229 = vpop.f32.mrb[0].mxu0
      %3230 = vmatprep.mubr.f32.mxu0 0.0
      %v3231 = vand.u32 %v452, 4294901760
      %3232 = vmatmul.mubr.f32.gmra.mrb[0].mxu0 %v3231
      %v3233 = vpop.f32.mrb[0].mxu0
      %v3234 = vadd.f32 %v2967, %v3233
      %v3235 = vpop.f32.mrb[0].mxu0
      %3236 = vdwg.mxu0
      %3237 = vmatprep.subr.mxu0 0.0
      %v3238 = vand.u32 %v2581, 4294901760
      %v3239 = vsub.f32 %v2581, %v3238
      %3240 = vmatpush1.msra.mxu0 %v3239
      %3241 = vmatprep.subr.mxu0 0.0
      %v3242 = vand.u32 %v2582, 4294901760
      %v3243 = vsub.f32 %v2582, %v3242
      %3244 = vmatpush1.msra.mxu0 %v3243
      %3245 = vmatprep.subr.mxu0 0.0
      %3246 = vmatpush1.msra.mxu0 0.0
      %3247 = vmatprep.subr.mxu0 0.0
      %3248 = vmatpush1.msra.mxu0 0.0
      %3249 = vmatprep.subr.mxu0 0.0
      %3250 = vmatpush1.msra.mxu0 0.0
      %3251 = vmatprep.subr.mxu0 0.0
      %3252 = vmatpush1.msra.mxu0 0.0
      %3253 = vmatprep.subr.mxu0 0.0
      %3254 = vmatpush1.msra.mxu0 0.0
      %3255 = vmatprep.subr.mxu0 0.0
      %3256 = vmatpush1.msra.mxu0 0.0
      %3257 = vmatprep.subr.mxu0 0.0
      %3258 = vmatpush1.msra.mxu0 0.0
      %3259 = vmatprep.subr.mxu0 0.0
      %3260 = vmatpush1.msra.mxu0 0.0
      %3261 = vmatprep.subr.mxu0 0.0
      %3262 = vmatpush1.msra.mxu0 0.0
      %3263 = vmatprep.subr.mxu0 0.0
      %3264 = vmatpush1.msra.mxu0 0.0
      %3265 = vmatprep.subr.mxu0 0.0
      %3266 = vmatpush1.msra.mxu0 0.0
      %3267 = vmatprep.subr.mxu0 0.0
      %3268 = vmatpush1.msra.mxu0 0.0
      %3269 = vmatprep.subr.mxu0 0.0
      %3270 = vmatpush1.msra.mxu0 0.0
      %3271 = vmatprep.subr.mxu0 0.0
      %3272 = vmatpush1.msra.mxu0 0.0
      %3273 = vmatprep.subr.mxu0 0.0
      %3274 = vmatpush1.msra.mxu0 0.0
      %3275 = vmatprep.subr.mxu0 0.0
      %3276 = vmatpush1.msra.mxu0 0.0
      %3277 = vmatprep.subr.mxu0 0.0
      %3278 = vmatpush1.msra.mxu0 0.0
      %3279 = vmatprep.subr.mxu0 0.0
      %3280 = vmatpush1.msra.mxu0 0.0
      %3281 = vmatprep.subr.mxu0 0.0
      %3282 = vmatpush1.msra.mxu0 0.0
      %3283 = vmatprep.subr.mxu0 0.0
      %3284 = vmatpush1.msra.mxu0 0.0
      %3285 = vmatprep.subr.mxu0 0.0
      %3286 = vmatpush1.msra.mxu0 0.0
      %3287 = vmatprep.subr.mxu0 0.0
      %3288 = vmatpush1.msra.mxu0 0.0
      %3289 = vmatprep.subr.mxu0 0.0
      %3290 = vmatpush1.msra.mxu0 0.0
      %3291 = vmatprep.subr.mxu0 0.0
      %3292 = vmatpush1.msra.mxu0 0.0
      %3293 = vmatprep.subr.mxu0 0.0
      %3294 = vmatpush1.msra.mxu0 0.0
      %3295 = vmatprep.subr.mxu0 0.0
      %3296 = vmatpush1.msra.mxu0 0.0
      %3297 = vmatprep.subr.mxu0 0.0
      %3298 = vmatpush1.msra.mxu0 0.0
      %3299 = vmatprep.subr.mxu0 0.0
      %3300 = vmatpush1.msra.mxu0 0.0
      %3301 = vmatprep.subr.mxu0 0.0
      %3302 = vmatpush1.msra.mxu0 0.0
      %3303 = vmatprep.subr.mxu0 0.0
      %3304 = vmatpush1.msra.mxu0 0.0
      %3305 = vmatprep.mubr.f32.mxu0 0.0
      %v3306 = vand.u32 %v359, 4294901760
      %v3307 = vsub.f32 %v359, %v3306
      %3308 = vmatmul.mubr.f32.gmra.mrb[0].mxu0 %v3307
      %v3309 = vpop.f32.mrb[0].mxu0
      %v3310 = vadd.f32 %v3048, %v3309
      %v3311 = vpop.f32.mrb[0].mxu0
      %3312 = vmatprep.mubr.f32.mxu0 0.0
      %v3313 = vand.u32 %v362, 4294901760
      %v3314 = vsub.f32 %v362, %v3313
      %3315 = vmatmul.mubr.f32.gmra.mrb[0].mxu0 %v3314
      %v3316 = vpop.f32.mrb[0].mxu0
      %v3317 = vadd.f32 %v3054, %v3316
      %v3318 = vpop.f32.mrb[0].mxu0
      %3319 = vmatprep.mubr.f32.mxu0 0.0
      %v3320 = vand.u32 %v365, 4294901760
      %v3321 = vsub.f32 %v365, %v3320
      %3322 = vmatmul.mubr.f32.gmra.mrb[0].mxu0 %v3321
      %v3323 = vpop.f32.mrb[0].mxu0
      %v3324 = vadd.f32 %v3060, %v3323
      %v3325 = vpop.f32.mrb[0].mxu0
      %3326 = vmatprep.mubr.f32.mxu0 0.0
      %v3327 = vand.u32 %v368, 4294901760
      %v3328 = vsub.f32 %v368, %v3327
      %3329 = vmatmul.mubr.f32.gmra.mrb[0].mxu0 %v3328
      %v3330 = vpop.f32.mrb[0].mxu0
      %v3331 = vadd.f32 %v3066, %v3330
      %v3332 = vpop.f32.mrb[0].mxu0
      %3333 = vmatprep.mubr.f32.mxu0 0.0
      %v3334 = vand.u32 %v371, 4294901760
      %v3335 = vsub.f32 %v371, %v3334
      %3336 = vmatmul.mubr.f32.gmra.mrb[0].mxu0 %v3335
      %v3337 = vpop.f32.mrb[0].mxu0
      %v3338 = vadd.f32 %v3072, %v3337
      %v3339 = vpop.f32.mrb[0].mxu0
      %3340 = vmatprep.mubr.f32.mxu0 0.0
      %v3341 = vand.u32 %v374, 4294901760
      %v3342 = vsub.f32 %v374, %v3341
      %3343 = vmatmul.mubr.f32.gmra.mrb[0].mxu0 %v3342
      %v3344 = vpop.f32.mrb[0].mxu0
      %v3345 = vadd.f32 %v3078, %v3344
      %v3346 = vpop.f32.mrb[0].mxu0
      %3347 = vmatprep.mubr.f32.mxu0 0.0
      %v3348 = vand.u32 %v377, 4294901760
      %v3349 = vsub.f32 %v377, %v3348
      %3350 = vmatmul.mubr.f32.gmra.mrb[0].mxu0 %v3349
      %v3351 = vpop.f32.mrb[0].mxu0
      %v3352 = vadd.f32 %v3084, %v3351
      %v3353 = vpop.f32.mrb[0].mxu0
      %3354 = vmatprep.mubr.f32.mxu0 0.0
      %v3355 = vand.u32 %v380, 4294901760
      %v3356 = vsub.f32 %v380, %v3355
      %3357 = vmatmul.mubr.f32.gmra.mrb[0].mxu0 %v3356
      %v3358 = vpop.f32.mrb[0].mxu0
      %v3359 = vadd.f32 %v3090, %v3358
      %v3360 = vpop.f32.mrb[0].mxu0
      %3361 = vmatprep.mubr.f32.mxu0 0.0
      %v3362 = vand.u32 %v383, 4294901760
      %v3363 = vsub.f32 %v383, %v3362
      %3364 = vmatmul.mubr.f32.gmra.mrb[0].mxu0 %v3363
      %v3365 = vpop.f32.mrb[0].mxu0
      %v3366 = vadd.f32 %v3096, %v3365
      %v3367 = vpop.f32.mrb[0].mxu0
      %3368 = vmatprep.mubr.f32.mxu0 0.0
      %v3369 = vand.u32 %v386, 4294901760
      %v3370 = vsub.f32 %v386, %v3369
      %3371 = vmatmul.mubr.f32.gmra.mrb[0].mxu0 %v3370
      %v3372 = vpop.f32.mrb[0].mxu0
      %v3373 = vadd.f32 %v3102, %v3372
      %v3374 = vpop.f32.mrb[0].mxu0
      %3375 = vmatprep.mubr.f32.mxu0 0.0
      %v3376 = vand.u32 %v389, 4294901760
      %v3377 = vsub.f32 %v389, %v3376
      %3378 = vmatmul.mubr.f32.gmra.mrb[0].mxu0 %v3377
      %v3379 = vpop.f32.mrb[0].mxu0
      %v3380 = vadd.f32 %v3108, %v3379
      %v3381 = vpop.f32.mrb[0].mxu0
      %3382 = vmatprep.mubr.f32.mxu0 0.0
      %v3383 = vand.u32 %v392, 4294901760
      %v3384 = vsub.f32 %v392, %v3383
      %3385 = vmatmul.mubr.f32.gmra.mrb[0].mxu0 %v3384
      %v3386 = vpop.f32.mrb[0].mxu0
      %v3387 = vadd.f32 %v3114, %v3386
      %v3388 = vpop.f32.mrb[0].mxu0
      %3389 = vmatprep.mubr.f32.mxu0 0.0
      %v3390 = vand.u32 %v395, 4294901760
      %v3391 = vsub.f32 %v395, %v3390
      %3392 = vmatmul.mubr.f32.gmra.mrb[0].mxu0 %v3391
      %v3393 = vpop.f32.mrb[0].mxu0
      %v3394 = vadd.f32 %v3120, %v3393
      %v3395 = vpop.f32.mrb[0].mxu0
      %3396 = vmatprep.mubr.f32.mxu0 0.0
      %v3397 = vand.u32 %v398, 4294901760
      %v3398 = vsub.f32 %v398, %v3397
      %3399 = vmatmul.mubr.f32.gmra.mrb[0].mxu0 %v3398
      %v3400 = vpop.f32.mrb[0].mxu0
      %v3401 = vadd.f32 %v3126, %v3400
      %v3402 = vpop.f32.mrb[0].mxu0
      %3403 = vmatprep.mubr.f32.mxu0 0.0
      %v3404 = vand.u32 %v401, 4294901760
      %v3405 = vsub.f32 %v401, %v3404
      %3406 = vmatmul.mubr.f32.gmra.mrb[0].mxu0 %v3405
      %v3407 = vpop.f32.mrb[0].mxu0
      %v3408 = vadd.f32 %v3132, %v3407
      %v3409 = vpop.f32.mrb[0].mxu0
      %3410 = vmatprep.mubr.f32.mxu0 0.0
      %v3411 = vand.u32 %v404, 4294901760
      %v3412 = vsub.f32 %v404, %v3411
      %3413 = vmatmul.mubr.f32.gmra.mrb[0].mxu0 %v3412
      %v3414 = vpop.f32.mrb[0].mxu0
      %v3415 = vadd.f32 %v3138, %v3414
      %v3416 = vpop.f32.mrb[0].mxu0
      %3417 = vmatprep.mubr.f32.mxu0 0.0
      %v3418 = vand.u32 %v407, 4294901760
      %v3419 = vsub.f32 %v407, %v3418
      %3420 = vmatmul.mubr.f32.gmra.mrb[0].mxu0 %v3419
      %v3421 = vpop.f32.mrb[0].mxu0
      %v3422 = vadd.f32 %v3144, %v3421
      %v3423 = vpop.f32.mrb[0].mxu0
      %3424 = vmatprep.mubr.f32.mxu0 0.0
      %v3425 = vand.u32 %v410, 4294901760
      %v3426 = vsub.f32 %v410, %v3425
      %3427 = vmatmul.mubr.f32.gmra.mrb[0].mxu0 %v3426
      %v3428 = vpop.f32.mrb[0].mxu0
      %v3429 = vadd.f32 %v3150, %v3428
      %v3430 = vpop.f32.mrb[0].mxu0
      %3431 = vmatprep.mubr.f32.mxu0 0.0
      %v3432 = vand.u32 %v413, 4294901760
      %v3433 = vsub.f32 %v413, %v3432
      %3434 = vmatmul.mubr.f32.gmra.mrb[0].mxu0 %v3433
      %v3435 = vpop.f32.mrb[0].mxu0
      %v3436 = vadd.f32 %v3156, %v3435
      %v3437 = vpop.f32.mrb[0].mxu0
      %3438 = vmatprep.mubr.f32.mxu0 0.0
      %v3439 = vand.u32 %v416, 4294901760
      %v3440 = vsub.f32 %v416, %v3439
      %3441 = vmatmul.mubr.f32.gmra.mrb[0].mxu0 %v3440
      %v3442 = vpop.f32.mrb[0].mxu0
      %v3443 = vadd.f32 %v3162, %v3442
      %v3444 = vpop.f32.mrb[0].mxu0
      %3445 = vmatprep.mubr.f32.mxu0 0.0
      %v3446 = vand.u32 %v419, 4294901760
      %v3447 = vsub.f32 %v419, %v3446
      %3448 = vmatmul.mubr.f32.gmra.mrb[0].mxu0 %v3447
      %v3449 = vpop.f32.mrb[0].mxu0
      %v3450 = vadd.f32 %v3168, %v3449
      %v3451 = vpop.f32.mrb[0].mxu0
      %3452 = vmatprep.mubr.f32.mxu0 0.0
      %v3453 = vand.u32 %v422, 4294901760
      %v3454 = vsub.f32 %v422, %v3453
      %3455 = vmatmul.mubr.f32.gmra.mrb[0].mxu0 %v3454
      %v3456 = vpop.f32.mrb[0].mxu0
      %v3457 = vadd.f32 %v3174, %v3456
      %v3458 = vpop.f32.mrb[0].mxu0
      %3459 = vmatprep.mubr.f32.mxu0 0.0
      %v3460 = vand.u32 %v425, 4294901760
      %v3461 = vsub.f32 %v425, %v3460
      %3462 = vmatmul.mubr.f32.gmra.mrb[0].mxu0 %v3461
      %v3463 = vpop.f32.mrb[0].mxu0
      %v3464 = vadd.f32 %v3180, %v3463
      %v3465 = vpop.f32.mrb[0].mxu0
      %3466 = vmatprep.mubr.f32.mxu0 0.0
      %v3467 = vand.u32 %v428, 4294901760
      %v3468 = vsub.f32 %v428, %v3467
      %3469 = vmatmul.mubr.f32.gmra.mrb[0].mxu0 %v3468
      %v3470 = vpop.f32.mrb[0].mxu0
      %v3471 = vadd.f32 %v3186, %v3470
      %v3472 = vpop.f32.mrb[0].mxu0
      %3473 = vmatprep.mubr.f32.mxu0 0.0
      %v3474 = vand.u32 %v431, 4294901760
      %v3475 = vsub.f32 %v431, %v3474
      %3476 = vmatmul.mubr.f32.gmra.mrb[0].mxu0 %v3475
      %v3477 = vpop.f32.mrb[0].mxu0
      %v3478 = vadd.f32 %v3192, %v3477
      %v3479 = vpop.f32.mrb[0].mxu0
      %3480 = vmatprep.mubr.f32.mxu0 0.0
      %v3481 = vand.u32 %v434, 4294901760
      %v3482 = vsub.f32 %v434, %v3481
      %3483 = vmatmul.mubr.f32.gmra.mrb[0].mxu0 %v3482
      %v3484 = vpop.f32.mrb[0].mxu0
      %v3485 = vadd.f32 %v3198, %v3484
      %v3486 = vpop.f32.mrb[0].mxu0
      %3487 = vmatprep.mubr.f32.mxu0 0.0
      %v3488 = vand.u32 %v437, 4294901760
      %v3489 = vsub.f32 %v437, %v3488
      %3490 = vmatmul.mubr.f32.gmra.mrb[0].mxu0 %v3489
      %v3491 = vpop.f32.mrb[0].mxu0
      %v3492 = vadd.f32 %v3204, %v3491
      %v3493 = vpop.f32.mrb[0].mxu0
      %3494 = vmatprep.mubr.f32.mxu0 0.0
      %v3495 = vand.u32 %v440, 4294901760
      %v3496 = vsub.f32 %v440, %v3495
      %3497 = vmatmul.mubr.f32.gmra.mrb[0].mxu0 %v3496
      %v3498 = vpop.f32.mrb[0].mxu0
      %v3499 = vadd.f32 %v3210, %v3498
      %v3500 = vpop.f32.mrb[0].mxu0
      %3501 = vmatprep.mubr.f32.mxu0 0.0
      %v3502 = vand.u32 %v443, 4294901760
      %v3503 = vsub.f32 %v443, %v3502
      %3504 = vmatmul.mubr.f32.gmra.mrb[0].mxu0 %v3503
      %v3505 = vpop.f32.mrb[0].mxu0
      %v3506 = vadd.f32 %v3216, %v3505
      %v3507 = vpop.f32.mrb[0].mxu0
      %3508 = vmatprep.mubr.f32.mxu0 0.0
      %v3509 = vand.u32 %v446, 4294901760
      %v3510 = vsub.f32 %v446, %v3509
      %3511 = vmatmul.mubr.f32.gmra.mrb[0].mxu0 %v3510
      %v3512 = vpop.f32.mrb[0].mxu0
      %v3513 = vadd.f32 %v3222, %v3512
      %v3514 = vpop.f32.mrb[0].mxu0
      %3515 = vmatprep.mubr.f32.mxu0 0.0
      %v3516 = vand.u32 %v449, 4294901760
      %v3517 = vsub.f32 %v449, %v3516
      %3518 = vmatmul.mubr.f32.gmra.mrb[0].mxu0 %v3517
      %v3519 = vpop.f32.mrb[0].mxu0
      %v3520 = vadd.f32 %v3228, %v3519
      %v3521 = vpop.f32.mrb[0].mxu0
      %3522 = vmatprep.mubr.f32.mxu0 0.0
      %v3523 = vand.u32 %v452, 4294901760
      %v3524 = vsub.f32 %v452, %v3523
      %3525 = vmatmul.mubr.f32.gmra.mrb[0].mxu0 %v3524
      %v3526 = vpop.f32.mrb[0].mxu0
      %v3527 = vadd.f32 %v3234, %v3526
      %v3528 = vpop.f32.mrb[0].mxu0
      %3529 = vdwg.mxu0
      %3530 = vmatprep.subr.mxu0 0.0
      %v3531 = vand.u32 %v2581, 4294901760
      %3532 = vmatpush1.msra.mxu0 %v3531
      %3533 = vmatprep.subr.mxu0 0.0
      %v3534 = vand.u32 %v2582, 4294901760
      %3535 = vmatpush1.msra.mxu0 %v3534
      %3536 = vmatprep.subr.mxu0 0.0
      %3537 = vmatpush1.msra.mxu0 0.0
      %3538 = vmatprep.subr.mxu0 0.0
      %3539 = vmatpush1.msra.mxu0 0.0
      %3540 = vmatprep.subr.mxu0 0.0
      %3541 = vmatpush1.msra.mxu0 0.0
      %3542 = vmatprep.subr.mxu0 0.0
      %3543 = vmatpush1.msra.mxu0 0.0
      %3544 = vmatprep.subr.mxu0 0.0
      %3545 = vmatpush1.msra.mxu0 0.0
      %3546 = vmatprep.subr.mxu0 0.0
      %3547 = vmatpush1.msra.mxu0 0.0
      %3548 = vmatprep.subr.mxu0 0.0
      %3549 = vmatpush1.msra.mxu0 0.0
      %3550 = vmatprep.subr.mxu0 0.0
      %3551 = vmatpush1.msra.mxu0 0.0
      %3552 = vmatprep.subr.mxu0 0.0
      %3553 = vmatpush1.msra.mxu0 0.0
      %3554 = vmatprep.subr.mxu0 0.0
      %3555 = vmatpush1.msra.mxu0 0.0
      %3556 = vmatprep.subr.mxu0 0.0
      %3557 = vmatpush1.msra.mxu0 0.0
      %3558 = vmatprep.subr.mxu0 0.0
      %3559 = vmatpush1.msra.mxu0 0.0
      %3560 = vmatprep.subr.mxu0 0.0
      %3561 = vmatpush1.msra.mxu0 0.0
      %3562 = vmatprep.subr.mxu0 0.0
      %3563 = vmatpush1.msra.mxu0 0.0
      %3564 = vmatprep.subr.mxu0 0.0
      %3565 = vmatpush1.msra.mxu0 0.0
      %3566 = vmatprep.subr.mxu0 0.0
      %3567 = vmatpush1.msra.mxu0 0.0
      %3568 = vmatprep.subr.mxu0 0.0
      %3569 = vmatpush1.msra.mxu0 0.0
      %3570 = vmatprep.subr.mxu0 0.0
      %3571 = vmatpush1.msra.mxu0 0.0
      %3572 = vmatprep.subr.mxu0 0.0
      %3573 = vmatpush1.msra.mxu0 0.0
      %3574 = vmatprep.subr.mxu0 0.0
      %3575 = vmatpush1.msra.mxu0 0.0
      %3576 = vmatprep.subr.mxu0 0.0
      %3577 = vmatpush1.msra.mxu0 0.0
      %3578 = vmatprep.subr.mxu0 0.0
      %3579 = vmatpush1.msra.mxu0 0.0
      %3580 = vmatprep.subr.mxu0 0.0
      %3581 = vmatpush1.msra.mxu0 0.0
      %3582 = vmatprep.subr.mxu0 0.0
      %3583 = vmatpush1.msra.mxu0 0.0
      %3584 = vmatprep.subr.mxu0 0.0
      %3585 = vmatpush1.msra.mxu0 0.0
      %3586 = vmatprep.subr.mxu0 0.0
      %3587 = vmatpush1.msra.mxu0 0.0
      %3588 = vmatprep.subr.mxu0 0.0
      %3589 = vmatpush1.msra.mxu0 0.0
      %3590 = vmatprep.subr.mxu0 0.0
      %3591 = vmatpush1.msra.mxu0 0.0
      %3592 = vmatprep.subr.mxu0 0.0
      %3593 = vmatpush1.msra.mxu0 0.0
      %3594 = vmatprep.subr.mxu0 0.0
      %3595 = vmatpush1.msra.mxu0 0.0
      %3596 = vmatprep.mubr.f32.mxu0 0.0
      %v3597 = vand.u32 %v359, 4294901760
      %v3598 = vsub.f32 %v359, %v3597
      %v3599 = vand.u32 %v3598, 4294901760
      %3600 = vmatmul.mubr.f32.gmra.mrb[0].mxu0 %v3599
      %v3601 = vpop.f32.mrb[0].mxu0
      %v3602 = vadd.f32 %v3310, %v3601
      %v3603 = vpop.f32.mrb[0].mxu0
      %3604 = vmatprep.mubr.f32.mxu0 0.0
      %v3605 = vand.u32 %v362, 4294901760
      %v3606 = vsub.f32 %v362, %v3605
      %v3607 = vand.u32 %v3606, 4294901760
      %3608 = vmatmul.mubr.f32.gmra.mrb[0].mxu0 %v3607
      %v3609 = vpop.f32.mrb[0].mxu0
      %v3610 = vadd.f32 %v3317, %v3609
      %v3611 = vpop.f32.mrb[0].mxu0
      %3612 = vmatprep.mubr.f32.mxu0 0.0
      %v3613 = vand.u32 %v365, 4294901760
      %v3614 = vsub.f32 %v365, %v3613
      %v3615 = vand.u32 %v3614, 4294901760
      %3616 = vmatmul.mubr.f32.gmra.mrb[0].mxu0 %v3615
      %v3617 = vpop.f32.mrb[0].mxu0
      %v3618 = vadd.f32 %v3324, %v3617
      %v3619 = vpop.f32.mrb[0].mxu0
      %3620 = vmatprep.mubr.f32.mxu0 0.0
      %v3621 = vand.u32 %v368, 4294901760
      %v3622 = vsub.f32 %v368, %v3621
      %v3623 = vand.u32 %v3622, 4294901760
      %3624 = vmatmul.mubr.f32.gmra.mrb[0].mxu0 %v3623
      %v3625 = vpop.f32.mrb[0].mxu0
      %v3626 = vadd.f32 %v3331, %v3625
      %v3627 = vpop.f32.mrb[0].mxu0
      %3628 = vmatprep.mubr.f32.mxu0 0.0
      %v3629 = vand.u32 %v371, 4294901760
      %v3630 = vsub.f32 %v371, %v3629
      %v3631 = vand.u32 %v3630, 4294901760
      %3632 = vmatmul.mubr.f32.gmra.mrb[0].mxu0 %v3631
      %v3633 = vpop.f32.mrb[0].mxu0
      %v3634 = vadd.f32 %v3338, %v3633
      %v3635 = vpop.f32.mrb[0].mxu0
      %3636 = vmatprep.mubr.f32.mxu0 0.0
      %v3637 = vand.u32 %v374, 4294901760
      %v3638 = vsub.f32 %v374, %v3637
      %v3639 = vand.u32 %v3638, 4294901760
      %3640 = vmatmul.mubr.f32.gmra.mrb[0].mxu0 %v3639
      %v3641 = vpop.f32.mrb[0].mxu0
      %v3642 = vadd.f32 %v3345, %v3641
      %v3643 = vpop.f32.mrb[0].mxu0
      %3644 = vmatprep.mubr.f32.mxu0 0.0
      %v3645 = vand.u32 %v377, 4294901760
      %v3646 = vsub.f32 %v377, %v3645
      %v3647 = vand.u32 %v3646, 4294901760
      %3648 = vmatmul.mubr.f32.gmra.mrb[0].mxu0 %v3647
      %v3649 = vpop.f32.mrb[0].mxu0
      %v3650 = vadd.f32 %v3352, %v3649
      %v3651 = vpop.f32.mrb[0].mxu0
      %3652 = vmatprep.mubr.f32.mxu0 0.0
      %v3653 = vand.u32 %v380, 4294901760
      %v3654 = vsub.f32 %v380, %v3653
      %v3655 = vand.u32 %v3654, 4294901760
      %3656 = vmatmul.mubr.f32.gmra.mrb[0].mxu0 %v3655
      %v3657 = vpop.f32.mrb[0].mxu0
      %v3658 = vadd.f32 %v3359, %v3657
      %v3659 = vpop.f32.mrb[0].mxu0
      %3660 = vmatprep.mubr.f32.mxu0 0.0
      %v3661 = vand.u32 %v383, 4294901760
      %v3662 = vsub.f32 %v383, %v3661
      %v3663 = vand.u32 %v3662, 4294901760
      %3664 = vmatmul.mubr.f32.gmra.mrb[0].mxu0 %v3663
      %v3665 = vpop.f32.mrb[0].mxu0
      %v3666 = vadd.f32 %v3366, %v3665
      %v3667 = vpop.f32.mrb[0].mxu0
      %3668 = vmatprep.mubr.f32.mxu0 0.0
      %v3669 = vand.u32 %v386, 4294901760
      %v3670 = vsub.f32 %v386, %v3669
      %v3671 = vand.u32 %v3670, 4294901760
      %3672 = vmatmul.mubr.f32.gmra.mrb[0].mxu0 %v3671
      %v3673 = vpop.f32.mrb[0].mxu0
      %v3674 = vadd.f32 %v3373, %v3673
      %v3675 = vpop.f32.mrb[0].mxu0
      %3676 = vmatprep.mubr.f32.mxu0 0.0
      %v3677 = vand.u32 %v389, 4294901760
      %v3678 = vsub.f32 %v389, %v3677
      %v3679 = vand.u32 %v3678, 4294901760
      %3680 = vmatmul.mubr.f32.gmra.mrb[0].mxu0 %v3679
      %v3681 = vpop.f32.mrb[0].mxu0
      %v3682 = vadd.f32 %v3380, %v3681
      %v3683 = vpop.f32.mrb[0].mxu0
      %3684 = vmatprep.mubr.f32.mxu0 0.0
      %v3685 = vand.u32 %v392, 4294901760
      %v3686 = vsub.f32 %v392, %v3685
      %v3687 = vand.u32 %v3686, 4294901760
      %3688 = vmatmul.mubr.f32.gmra.mrb[0].mxu0 %v3687
      %v3689 = vpop.f32.mrb[0].mxu0
      %v3690 = vadd.f32 %v3387, %v3689
      %v3691 = vpop.f32.mrb[0].mxu0
      %3692 = vmatprep.mubr.f32.mxu0 0.0
      %v3693 = vand.u32 %v395, 4294901760
      %v3694 = vsub.f32 %v395, %v3693
      %v3695 = vand.u32 %v3694, 4294901760
      %3696 = vmatmul.mubr.f32.gmra.mrb[0].mxu0 %v3695
      %v3697 = vpop.f32.mrb[0].mxu0
      %v3698 = vadd.f32 %v3394, %v3697
      %v3699 = vpop.f32.mrb[0].mxu0
      %3700 = vmatprep.mubr.f32.mxu0 0.0
      %v3701 = vand.u32 %v398, 4294901760
      %v3702 = vsub.f32 %v398, %v3701
      %v3703 = vand.u32 %v3702, 4294901760
      %3704 = vmatmul.mubr.f32.gmra.mrb[0].mxu0 %v3703
      %v3705 = vpop.f32.mrb[0].mxu0
      %v3706 = vadd.f32 %v3401, %v3705
      %v3707 = vpop.f32.mrb[0].mxu0
      %3708 = vmatprep.mubr.f32.mxu0 0.0
      %v3709 = vand.u32 %v401, 4294901760
      %v3710 = vsub.f32 %v401, %v3709
      %v3711 = vand.u32 %v3710, 4294901760
      %3712 = vmatmul.mubr.f32.gmra.mrb[0].mxu0 %v3711
      %v3713 = vpop.f32.mrb[0].mxu0
      %v3714 = vadd.f32 %v3408, %v3713
      %v3715 = vpop.f32.mrb[0].mxu0
      %3716 = vmatprep.mubr.f32.mxu0 0.0
      %v3717 = vand.u32 %v404, 4294901760
      %v3718 = vsub.f32 %v404, %v3717
      %v3719 = vand.u32 %v3718, 4294901760
      %3720 = vmatmul.mubr.f32.gmra.mrb[0].mxu0 %v3719
      %v3721 = vpop.f32.mrb[0].mxu0
      %v3722 = vadd.f32 %v3415, %v3721
      %v3723 = vpop.f32.mrb[0].mxu0
      %3724 = vmatprep.mubr.f32.mxu0 0.0
      %v3725 = vand.u32 %v407, 4294901760
      %v3726 = vsub.f32 %v407, %v3725
      %v3727 = vand.u32 %v3726, 4294901760
      %3728 = vmatmul.mubr.f32.gmra.mrb[0].mxu0 %v3727
      %v3729 = vpop.f32.mrb[0].mxu0
      %v3730 = vadd.f32 %v3422, %v3729
      %v3731 = vpop.f32.mrb[0].mxu0
      %3732 = vmatprep.mubr.f32.mxu0 0.0
      %v3733 = vand.u32 %v410, 4294901760
      %v3734 = vsub.f32 %v410, %v3733
      %v3735 = vand.u32 %v3734, 4294901760
      %3736 = vmatmul.mubr.f32.gmra.mrb[0].mxu0 %v3735
      %v3737 = vpop.f32.mrb[0].mxu0
      %v3738 = vadd.f32 %v3429, %v3737
      %v3739 = vpop.f32.mrb[0].mxu0
      %3740 = vmatprep.mubr.f32.mxu0 0.0
      %v3741 = vand.u32 %v413, 4294901760
      %v3742 = vsub.f32 %v413, %v3741
      %v3743 = vand.u32 %v3742, 4294901760
      %3744 = vmatmul.mubr.f32.gmra.mrb[0].mxu0 %v3743
      %v3745 = vpop.f32.mrb[0].mxu0
      %v3746 = vadd.f32 %v3436, %v3745
      %v3747 = vpop.f32.mrb[0].mxu0
      %3748 = vmatprep.mubr.f32.mxu0 0.0
      %v3749 = vand.u32 %v416, 4294901760
      %v3750 = vsub.f32 %v416, %v3749
      %v3751 = vand.u32 %v3750, 4294901760
      %3752 = vmatmul.mubr.f32.gmra.mrb[0].mxu0 %v3751
      %v3753 = vpop.f32.mrb[0].mxu0
      %v3754 = vadd.f32 %v3443, %v3753
      %v3755 = vpop.f32.mrb[0].mxu0
      %3756 = vmatprep.mubr.f32.mxu0 0.0
      %v3757 = vand.u32 %v419, 4294901760
      %v3758 = vsub.f32 %v419, %v3757
      %v3759 = vand.u32 %v3758, 4294901760
      %3760 = vmatmul.mubr.f32.gmra.mrb[0].mxu0 %v3759
      %v3761 = vpop.f32.mrb[0].mxu0
      %v3762 = vadd.f32 %v3450, %v3761
      %v3763 = vpop.f32.mrb[0].mxu0
      %3764 = vmatprep.mubr.f32.mxu0 0.0
      %v3765 = vand.u32 %v422, 4294901760
      %v3766 = vsub.f32 %v422, %v3765
      %v3767 = vand.u32 %v3766, 4294901760
      %3768 = vmatmul.mubr.f32.gmra.mrb[0].mxu0 %v3767
      %v3769 = vpop.f32.mrb[0].mxu0
      %v3770 = vadd.f32 %v3457, %v3769
      %v3771 = vpop.f32.mrb[0].mxu0
      %3772 = vmatprep.mubr.f32.mxu0 0.0
      %v3773 = vand.u32 %v425, 4294901760
      %v3774 = vsub.f32 %v425, %v3773
      %v3775 = vand.u32 %v3774, 4294901760
      %3776 = vmatmul.mubr.f32.gmra.mrb[0].mxu0 %v3775
      %v3777 = vpop.f32.mrb[0].mxu0
      %v3778 = vadd.f32 %v3464, %v3777
      %v3779 = vpop.f32.mrb[0].mxu0
      %3780 = vmatprep.mubr.f32.mxu0 0.0
      %v3781 = vand.u32 %v428, 4294901760
      %v3782 = vsub.f32 %v428, %v3781
      %v3783 = vand.u32 %v3782, 4294901760
      %3784 = vmatmul.mubr.f32.gmra.mrb[0].mxu0 %v3783
      %v3785 = vpop.f32.mrb[0].mxu0
      %v3786 = vadd.f32 %v3471, %v3785
      %v3787 = vpop.f32.mrb[0].mxu0
      %3788 = vmatprep.mubr.f32.mxu0 0.0
      %v3789 = vand.u32 %v431, 4294901760
      %v3790 = vsub.f32 %v431, %v3789
      %v3791 = vand.u32 %v3790, 4294901760
      %3792 = vmatmul.mubr.f32.gmra.mrb[0].mxu0 %v3791
      %v3793 = vpop.f32.mrb[0].mxu0
      %v3794 = vadd.f32 %v3478, %v3793
      %v3795 = vpop.f32.mrb[0].mxu0
      %3796 = vmatprep.mubr.f32.mxu0 0.0
      %v3797 = vand.u32 %v434, 4294901760
      %v3798 = vsub.f32 %v434, %v3797
      %v3799 = vand.u32 %v3798, 4294901760
      %3800 = vmatmul.mubr.f32.gmra.mrb[0].mxu0 %v3799
      %v3801 = vpop.f32.mrb[0].mxu0
      %v3802 = vadd.f32 %v3485, %v3801
      %v3803 = vpop.f32.mrb[0].mxu0
      %3804 = vmatprep.mubr.f32.mxu0 0.0
      %v3805 = vand.u32 %v437, 4294901760
      %v3806 = vsub.f32 %v437, %v3805
      %v3807 = vand.u32 %v3806, 4294901760
      %3808 = vmatmul.mubr.f32.gmra.mrb[0].mxu0 %v3807
      %v3809 = vpop.f32.mrb[0].mxu0
      %v3810 = vadd.f32 %v3492, %v3809
      %v3811 = vpop.f32.mrb[0].mxu0
      %3812 = vmatprep.mubr.f32.mxu0 0.0
      %v3813 = vand.u32 %v440, 4294901760
      %v3814 = vsub.f32 %v440, %v3813
      %v3815 = vand.u32 %v3814, 4294901760
      %3816 = vmatmul.mubr.f32.gmra.mrb[0].mxu0 %v3815
      %v3817 = vpop.f32.mrb[0].mxu0
      %v3818 = vadd.f32 %v3499, %v3817
      %v3819 = vpop.f32.mrb[0].mxu0
      %3820 = vmatprep.mubr.f32.mxu0 0.0
      %v3821 = vand.u32 %v443, 4294901760
      %v3822 = vsub.f32 %v443, %v3821
      %v3823 = vand.u32 %v3822, 4294901760
      %3824 = vmatmul.mubr.f32.gmra.mrb[0].mxu0 %v3823
      %v3825 = vpop.f32.mrb[0].mxu0
      %v3826 = vadd.f32 %v3506, %v3825
      %v3827 = vpop.f32.mrb[0].mxu0
      %3828 = vmatprep.mubr.f32.mxu0 0.0
      %v3829 = vand.u32 %v446, 4294901760
      %v3830 = vsub.f32 %v446, %v3829
      %v3831 = vand.u32 %v3830, 4294901760
      %3832 = vmatmul.mubr.f32.gmra.mrb[0].mxu0 %v3831
      %v3833 = vpop.f32.mrb[0].mxu0
      %v3834 = vadd.f32 %v3513, %v3833
      %v3835 = vpop.f32.mrb[0].mxu0
      %3836 = vmatprep.mubr.f32.mxu0 0.0
      %v3837 = vand.u32 %v449, 4294901760
      %v3838 = vsub.f32 %v449, %v3837
      %v3839 = vand.u32 %v3838, 4294901760
      %3840 = vmatmul.mubr.f32.gmra.mrb[0].mxu0 %v3839
      %v3841 = vpop.f32.mrb[0].mxu0
      %v3842 = vadd.f32 %v3520, %v3841
      %v3843 = vpop.f32.mrb[0].mxu0
      %3844 = vmatprep.mubr.f32.mxu0 0.0
      %v3845 = vand.u32 %v452, 4294901760
      %v3846 = vsub.f32 %v452, %v3845
      %v3847 = vand.u32 %v3846, 4294901760
      %3848 = vmatmul.mubr.f32.gmra.mrb[0].mxu0 %v3847
      %v3849 = vpop.f32.mrb[0].mxu0
      %v3850 = vadd.f32 %v3527, %v3849
      %v3851 = vpop.f32.mrb[0].mxu0
      %3852 = vdwg.mxu0
      %3853 = vmatprep.subr.mxu0 0.0
      %v3854 = vand.u32 %v2581, 4294901760
      %v3855 = vsub.f32 %v2581, %v3854
      %v3856 = vand.u32 %v3855, 4294901760
      %3857 = vmatpush1.msra.mxu0 %v3856
      %3858 = vmatprep.subr.mxu0 0.0
      %v3859 = vand.u32 %v2582, 4294901760
      %v3860 = vsub.f32 %v2582, %v3859
      %v3861 = vand.u32 %v3860, 4294901760
      %3862 = vmatpush1.msra.mxu0 %v3861
      %3863 = vmatprep.subr.mxu0 0.0
      %3864 = vmatpush1.msra.mxu0 0.0
      %3865 = vmatprep.subr.mxu0 0.0
      %3866 = vmatpush1.msra.mxu0 0.0
      %3867 = vmatprep.subr.mxu0 0.0
      %3868 = vmatpush1.msra.mxu0 0.0
      %3869 = vmatprep.subr.mxu0 0.0
      %3870 = vmatpush1.msra.mxu0 0.0
      %3871 = vmatprep.subr.mxu0 0.0
      %3872 = vmatpush1.msra.mxu0 0.0
      %3873 = vmatprep.subr.mxu0 0.0
      %3874 = vmatpush1.msra.mxu0 0.0
      %3875 = vmatprep.subr.mxu0 0.0
      %3876 = vmatpush1.msra.mxu0 0.0
      %3877 = vmatprep.subr.mxu0 0.0
      %3878 = vmatpush1.msra.mxu0 0.0
      %3879 = vmatprep.subr.mxu0 0.0
      %3880 = vmatpush1.msra.mxu0 0.0
      %3881 = vmatprep.subr.mxu0 0.0
      %3882 = vmatpush1.msra.mxu0 0.0
      %3883 = vmatprep.subr.mxu0 0.0
      %3884 = vmatpush1.msra.mxu0 0.0
      %3885 = vmatprep.subr.mxu0 0.0
      %3886 = vmatpush1.msra.mxu0 0.0
      %3887 = vmatprep.subr.mxu0 0.0
      %3888 = vmatpush1.msra.mxu0 0.0
      %3889 = vmatprep.subr.mxu0 0.0
      %3890 = vmatpush1.msra.mxu0 0.0
      %3891 = vmatprep.subr.mxu0 0.0
      %3892 = vmatpush1.msra.mxu0 0.0
      %3893 = vmatprep.subr.mxu0 0.0
      %3894 = vmatpush1.msra.mxu0 0.0
      %3895 = vmatprep.subr.mxu0 0.0
      %3896 = vmatpush1.msra.mxu0 0.0
      %3897 = vmatprep.subr.mxu0 0.0
      %3898 = vmatpush1.msra.mxu0 0.0
      %3899 = vmatprep.subr.mxu0 0.0
      %3900 = vmatpush1.msra.mxu0 0.0
      %3901 = vmatprep.subr.mxu0 0.0
      %3902 = vmatpush1.msra.mxu0 0.0
      %3903 = vmatprep.subr.mxu0 0.0
      %3904 = vmatpush1.msra.mxu0 0.0
      %3905 = vmatprep.subr.mxu0 0.0
      %3906 = vmatpush1.msra.mxu0 0.0
      %3907 = vmatprep.subr.mxu0 0.0
      %3908 = vmatpush1.msra.mxu0 0.0
      %3909 = vmatprep.subr.mxu0 0.0
      %3910 = vmatpush1.msra.mxu0 0.0
      %3911 = vmatprep.subr.mxu0 0.0
      %3912 = vmatpush1.msra.mxu0 0.0
      %3913 = vmatprep.subr.mxu0 0.0
      %3914 = vmatpush1.msra.mxu0 0.0
      %3915 = vmatprep.subr.mxu0 0.0
      %3916 = vmatpush1.msra.mxu0 0.0
      %3917 = vmatprep.subr.mxu0 0.0
      %3918 = vmatpush1.msra.mxu0 0.0
      %3919 = vmatprep.subr.mxu0 0.0
      %3920 = vmatpush1.msra.mxu0 0.0
      %3921 = vmatprep.subr.mxu0 0.0
      %3922 = vmatpush1.msra.mxu0 0.0
      %3923 = vmatprep.mubr.f32.mxu0 0.0
      %v3924 = vand.u32 %v359, 4294901760
      %3925 = vmatmul.mubr.f32.gmra.mrb[0].mxu0 %v3924
      %v3926 = vpop.f32.mrb[0].mxu0
      %v3927 = vadd.f32 %v3602, %v3926
      %v3928 = vpop.f32.mrb[0].mxu0
      %3929 = vmatprep.mubr.f32.mxu0 0.0
      %v3930 = vand.u32 %v362, 4294901760
      %3931 = vmatmul.mubr.f32.gmra.mrb[0].mxu0 %v3930
      %v3932 = vpop.f32.mrb[0].mxu0
      %v3933 = vadd.f32 %v3610, %v3932
      %v3934 = vpop.f32.mrb[0].mxu0
      %3935 = vmatprep.mubr.f32.mxu0 0.0
      %v3936 = vand.u32 %v365, 4294901760
      %3937 = vmatmul.mubr.f32.gmra.mrb[0].mxu0 %v3936
      %v3938 = vpop.f32.mrb[0].mxu0
      %v3939 = vadd.f32 %v3618, %v3938
      %v3940 = vpop.f32.mrb[0].mxu0
      %3941 = vmatprep.mubr.f32.mxu0 0.0
      %v3942 = vand.u32 %v368, 4294901760
      %3943 = vmatmul.mubr.f32.gmra.mrb[0].mxu0 %v3942
      %v3944 = vpop.f32.mrb[0].mxu0
      %v3945 = vadd.f32 %v3626, %v3944
      %v3946 = vpop.f32.mrb[0].mxu0
      %3947 = vmatprep.mubr.f32.mxu0 0.0
      %v3948 = vand.u32 %v371, 4294901760
      %3949 = vmatmul.mubr.f32.gmra.mrb[0].mxu0 %v3948
      %v3950 = vpop.f32.mrb[0].mxu0
      %v3951 = vadd.f32 %v3634, %v3950
      %v3952 = vpop.f32.mrb[0].mxu0
      %3953 = vmatprep.mubr.f32.mxu0 0.0
      %v3954 = vand.u32 %v374, 4294901760
      %3955 = vmatmul.mubr.f32.gmra.mrb[0].mxu0 %v3954
      %v3956 = vpop.f32.mrb[0].mxu0
      %v3957 = vadd.f32 %v3642, %v3956
      %v3958 = vpop.f32.mrb[0].mxu0
      %3959 = vmatprep.mubr.f32.mxu0 0.0
      %v3960 = vand.u32 %v377, 4294901760
      %3961 = vmatmul.mubr.f32.gmra.mrb[0].mxu0 %v3960
      %v3962 = vpop.f32.mrb[0].mxu0
      %v3963 = vadd.f32 %v3650, %v3962
      %v3964 = vpop.f32.mrb[0].mxu0
      %3965 = vmatprep.mubr.f32.mxu0 0.0
      %v3966 = vand.u32 %v380, 4294901760
      %3967 = vmatmul.mubr.f32.gmra.mrb[0].mxu0 %v3966
      %v3968 = vpop.f32.mrb[0].mxu0
      %v3969 = vadd.f32 %v3658, %v3968
      %v3970 = vpop.f32.mrb[0].mxu0
      %3971 = vmatprep.mubr.f32.mxu0 0.0
      %v3972 = vand.u32 %v383, 4294901760
      %3973 = vmatmul.mubr.f32.gmra.mrb[0].mxu0 %v3972
      %v3974 = vpop.f32.mrb[0].mxu0
      %v3975 = vadd.f32 %v3666, %v3974
      %v3976 = vpop.f32.mrb[0].mxu0
      %3977 = vmatprep.mubr.f32.mxu0 0.0
      %v3978 = vand.u32 %v386, 4294901760
      %3979 = vmatmul.mubr.f32.gmra.mrb[0].mxu0 %v3978
      %v3980 = vpop.f32.mrb[0].mxu0
      %v3981 = vadd.f32 %v3674, %v3980
      %v3982 = vpop.f32.mrb[0].mxu0
      %3983 = vmatprep.mubr.f32.mxu0 0.0
      %v3984 = vand.u32 %v389, 4294901760
      %3985 = vmatmul.mubr.f32.gmra.mrb[0].mxu0 %v3984
      %v3986 = vpop.f32.mrb[0].mxu0
      %v3987 = vadd.f32 %v3682, %v3986
      %v3988 = vpop.f32.mrb[0].mxu0
      %3989 = vmatprep.mubr.f32.mxu0 0.0
      %v3990 = vand.u32 %v392, 4294901760
      %3991 = vmatmul.mubr.f32.gmra.mrb[0].mxu0 %v3990
      %v3992 = vpop.f32.mrb[0].mxu0
      %v3993 = vadd.f32 %v3690, %v3992
      %v3994 = vpop.f32.mrb[0].mxu0
      %3995 = vmatprep.mubr.f32.mxu0 0.0
      %v3996 = vand.u32 %v395, 4294901760
      %3997 = vmatmul.mubr.f32.gmra.mrb[0].mxu0 %v3996
      %v3998 = vpop.f32.mrb[0].mxu0
      %v3999 = vadd.f32 %v3698, %v3998
      %v4000 = vpop.f32.mrb[0].mxu0
      %4001 = vmatprep.mubr.f32.mxu0 0.0
      %v4002 = vand.u32 %v398, 4294901760
      %4003 = vmatmul.mubr.f32.gmra.mrb[0].mxu0 %v4002
      %v4004 = vpop.f32.mrb[0].mxu0
      %v4005 = vadd.f32 %v3706, %v4004
      %v4006 = vpop.f32.mrb[0].mxu0
      %4007 = vmatprep.mubr.f32.mxu0 0.0
      %v4008 = vand.u32 %v401, 4294901760
      %4009 = vmatmul.mubr.f32.gmra.mrb[0].mxu0 %v4008
      %v4010 = vpop.f32.mrb[0].mxu0
      %v4011 = vadd.f32 %v3714, %v4010
      %v4012 = vpop.f32.mrb[0].mxu0
      %4013 = vmatprep.mubr.f32.mxu0 0.0
      %v4014 = vand.u32 %v404, 4294901760
      %4015 = vmatmul.mubr.f32.gmra.mrb[0].mxu0 %v4014
      %v4016 = vpop.f32.mrb[0].mxu0
      %v4017 = vadd.f32 %v3722, %v4016
      %v4018 = vpop.f32.mrb[0].mxu0
      %4019 = vmatprep.mubr.f32.mxu0 0.0
      %v4020 = vand.u32 %v407, 4294901760
      %4021 = vmatmul.mubr.f32.gmra.mrb[0].mxu0 %v4020
      %v4022 = vpop.f32.mrb[0].mxu0
      %v4023 = vadd.f32 %v3730, %v4022
      %v4024 = vpop.f32.mrb[0].mxu0
      %4025 = vmatprep.mubr.f32.mxu0 0.0
      %v4026 = vand.u32 %v410, 4294901760
      %4027 = vmatmul.mubr.f32.gmra.mrb[0].mxu0 %v4026
      %v4028 = vpop.f32.mrb[0].mxu0
      %v4029 = vadd.f32 %v3738, %v4028
      %v4030 = vpop.f32.mrb[0].mxu0
      %4031 = vmatprep.mubr.f32.mxu0 0.0
      %v4032 = vand.u32 %v413, 4294901760
      %4033 = vmatmul.mubr.f32.gmra.mrb[0].mxu0 %v4032
      %v4034 = vpop.f32.mrb[0].mxu0
      %v4035 = vadd.f32 %v3746, %v4034
      %v4036 = vpop.f32.mrb[0].mxu0
      %4037 = vmatprep.mubr.f32.mxu0 0.0
      %v4038 = vand.u32 %v416, 4294901760
      %4039 = vmatmul.mubr.f32.gmra.mrb[0].mxu0 %v4038
      %v4040 = vpop.f32.mrb[0].mxu0
      %v4041 = vadd.f32 %v3754, %v4040
      %v4042 = vpop.f32.mrb[0].mxu0
      %4043 = vmatprep.mubr.f32.mxu0 0.0
      %v4044 = vand.u32 %v419, 4294901760
      %4045 = vmatmul.mubr.f32.gmra.mrb[0].mxu0 %v4044
      %v4046 = vpop.f32.mrb[0].mxu0
      %v4047 = vadd.f32 %v3762, %v4046
      %v4048 = vpop.f32.mrb[0].mxu0
      %4049 = vmatprep.mubr.f32.mxu0 0.0
      %v4050 = vand.u32 %v422, 4294901760
      %4051 = vmatmul.mubr.f32.gmra.mrb[0].mxu0 %v4050
      %v4052 = vpop.f32.mrb[0].mxu0
      %v4053 = vadd.f32 %v3770, %v4052
      %v4054 = vpop.f32.mrb[0].mxu0
      %4055 = vmatprep.mubr.f32.mxu0 0.0
      %v4056 = vand.u32 %v425, 4294901760
      %4057 = vmatmul.mubr.f32.gmra.mrb[0].mxu0 %v4056
      %v4058 = vpop.f32.mrb[0].mxu0
      %v4059 = vadd.f32 %v3778, %v4058
      %v4060 = vpop.f32.mrb[0].mxu0
      %4061 = vmatprep.mubr.f32.mxu0 0.0
      %v4062 = vand.u32 %v428, 4294901760
      %4063 = vmatmul.mubr.f32.gmra.mrb[0].mxu0 %v4062
      %v4064 = vpop.f32.mrb[0].mxu0
      %v4065 = vadd.f32 %v3786, %v4064
      %v4066 = vpop.f32.mrb[0].mxu0
      %4067 = vmatprep.mubr.f32.mxu0 0.0
      %v4068 = vand.u32 %v431, 4294901760
      %4069 = vmatmul.mubr.f32.gmra.mrb[0].mxu0 %v4068
      %v4070 = vpop.f32.mrb[0].mxu0
      %v4071 = vadd.f32 %v3794, %v4070
      %v4072 = vpop.f32.mrb[0].mxu0
      %4073 = vmatprep.mubr.f32.mxu0 0.0
      %v4074 = vand.u32 %v434, 4294901760
      %4075 = vmatmul.mubr.f32.gmra.mrb[0].mxu0 %v4074
      %v4076 = vpop.f32.mrb[0].mxu0
      %v4077 = vadd.f32 %v3802, %v4076
      %v4078 = vpop.f32.mrb[0].mxu0
      %4079 = vmatprep.mubr.f32.mxu0 0.0
      %v4080 = vand.u32 %v437, 4294901760
      %4081 = vmatmul.mubr.f32.gmra.mrb[0].mxu0 %v4080
      %v4082 = vpop.f32.mrb[0].mxu0
      %v4083 = vadd.f32 %v3810, %v4082
      %v4084 = vpop.f32.mrb[0].mxu0
      %4085 = vmatprep.mubr.f32.mxu0 0.0
      %v4086 = vand.u32 %v440, 4294901760
      %4087 = vmatmul.mubr.f32.gmra.mrb[0].mxu0 %v4086
      %v4088 = vpop.f32.mrb[0].mxu0
      %v4089 = vadd.f32 %v3818, %v4088
      %v4090 = vpop.f32.mrb[0].mxu0
      %4091 = vmatprep.mubr.f32.mxu0 0.0
      %v4092 = vand.u32 %v443, 4294901760
      %4093 = vmatmul.mubr.f32.gmra.mrb[0].mxu0 %v4092
      %v4094 = vpop.f32.mrb[0].mxu0
      %v4095 = vadd.f32 %v3826, %v4094
      %v4096 = vpop.f32.mrb[0].mxu0
      %4097 = vmatprep.mubr.f32.mxu0 0.0
      %v4098 = vand.u32 %v446, 4294901760
      %4099 = vmatmul.mubr.f32.gmra.mrb[0].mxu0 %v4098
      %v4100 = vpop.f32.mrb[0].mxu0
      %v4101 = vadd.f32 %v3834, %v4100
      %v4102 = vpop.f32.mrb[0].mxu0
      %4103 = vmatprep.mubr.f32.mxu0 0.0
      %v4104 = vand.u32 %v449, 4294901760
      %4105 = vmatmul.mubr.f32.gmra.mrb[0].mxu0 %v4104
      %v4106 = vpop.f32.mrb[0].mxu0
      %v4107 = vadd.f32 %v3842, %v4106
      %v4108 = vpop.f32.mrb[0].mxu0
      %4109 = vmatprep.mubr.f32.mxu0 0.0
      %v4110 = vand.u32 %v452, 4294901760
      %4111 = vmatmul.mubr.f32.gmra.mrb[0].mxu0 %v4110
      %v4112 = vpop.f32.mrb[0].mxu0
      %v4113 = vadd.f32 %v3850, %v4112
      %v4114 = vpop.f32.mrb[0].mxu0
      %4115 = vdwg.mxu0
      %4116 = vmatprep.subr.mxu0 0.0
      %v4117 = vand.u32 %v2581, 4294901760
      %4118 = vmatpush1.msra.mxu0 %v4117
      %4119 = vmatprep.subr.mxu0 0.0
      %v4120 = vand.u32 %v2582, 4294901760
      %4121 = vmatpush1.msra.mxu0 %v4120
      %4122 = vmatprep.subr.mxu0 0.0
      %4123 = vmatpush1.msra.mxu0 0.0
      %4124 = vmatprep.subr.mxu0 0.0
      %4125 = vmatpush1.msra.mxu0 0.0
      %4126 = vmatprep.subr.mxu0 0.0
      %4127 = vmatpush1.msra.mxu0 0.0
      %4128 = vmatprep.subr.mxu0 0.0
      %4129 = vmatpush1.msra.mxu0 0.0
      %4130 = vmatprep.subr.mxu0 0.0
      %4131 = vmatpush1.msra.mxu0 0.0
      %4132 = vmatprep.subr.mxu0 0.0
      %4133 = vmatpush1.msra.mxu0 0.0
      %4134 = vmatprep.subr.mxu0 0.0
      %4135 = vmatpush1.msra.mxu0 0.0
      %4136 = vmatprep.subr.mxu0 0.0
      %4137 = vmatpush1.msra.mxu0 0.0
      %4138 = vmatprep.subr.mxu0 0.0
      %4139 = vmatpush1.msra.mxu0 0.0
      %4140 = vmatprep.subr.mxu0 0.0
      %4141 = vmatpush1.msra.mxu0 0.0
      %4142 = vmatprep.subr.mxu0 0.0
      %4143 = vmatpush1.msra.mxu0 0.0
      %4144 = vmatprep.subr.mxu0 0.0
      %4145 = vmatpush1.msra.mxu0 0.0
      %4146 = vmatprep.subr.mxu0 0.0
      %4147 = vmatpush1.msra.mxu0 0.0
      %4148 = vmatprep.subr.mxu0 0.0
      %4149 = vmatpush1.msra.mxu0 0.0
      %4150 = vmatprep.subr.mxu0 0.0
      %4151 = vmatpush1.msra.mxu0 0.0
      %4152 = vmatprep.subr.mxu0 0.0
      %4153 = vmatpush1.msra.mxu0 0.0
      %4154 = vmatprep.subr.mxu0 0.0
      %4155 = vmatpush1.msra.mxu0 0.0
      %4156 = vmatprep.subr.mxu0 0.0
      %4157 = vmatpush1.msra.mxu0 0.0
      %4158 = vmatprep.subr.mxu0 0.0
      %4159 = vmatpush1.msra.mxu0 0.0
      %4160 = vmatprep.subr.mxu0 0.0
      %4161 = vmatpush1.msra.mxu0 0.0
      %4162 = vmatprep.subr.mxu0 0.0
      %4163 = vmatpush1.msra.mxu0 0.0
      %4164 = vmatprep.subr.mxu0 0.0
      %4165 = vmatpush1.msra.mxu0 0.0
      %4166 = vmatprep.subr.mxu0 0.0
      %4167 = vmatpush1.msra.mxu0 0.0
      %4168 = vmatprep.subr.mxu0 0.0
      %4169 = vmatpush1.msra.mxu0 0.0
      %4170 = vmatprep.subr.mxu0 0.0
      %4171 = vmatpush1.msra.mxu0 0.0
      %4172 = vmatprep.subr.mxu0 0.0
      %4173 = vmatpush1.msra.mxu0 0.0
      %4174 = vmatprep.subr.mxu0 0.0
      %4175 = vmatpush1.msra.mxu0 0.0
      %4176 = vmatprep.subr.mxu0 0.0
      %4177 = vmatpush1.msra.mxu0 0.0
      %4178 = vmatprep.subr.mxu0 0.0
      %4179 = vmatpush1.msra.mxu0 0.0
      %4180 = vmatprep.subr.mxu0 0.0
      %4181 = vmatpush1.msra.mxu0 0.0
      %4182 = vmatprep.mubr.f32.mxu0 0.0
      %v4183 = vand.u32 %v359, 4294901760
      %4184 = vmatmul.mubr.f32.gmra.mrb[0].mxu0 %v4183
      %v4185 = vpop.f32.mrb[0].mxu0
      %v4186 = vadd.f32 %v3927, %v4185
      %v4187 = vpop.f32.mrb[0].mxu0
      %4188 = vmatprep.mubr.f32.mxu0 0.0
      %v4189 = vand.u32 %v362, 4294901760
      %4190 = vmatmul.mubr.f32.gmra.mrb[0].mxu0 %v4189
      %v4191 = vpop.f32.mrb[0].mxu0
      %v4192 = vadd.f32 %v3933, %v4191
      %v4193 = vpop.f32.mrb[0].mxu0
      %4194 = vmatprep.mubr.f32.mxu0 0.0
      %v4195 = vand.u32 %v365, 4294901760
      %4196 = vmatmul.mubr.f32.gmra.mrb[0].mxu0 %v4195
      %v4197 = vpop.f32.mrb[0].mxu0
      %v4198 = vadd.f32 %v3939, %v4197
      %v4199 = vpop.f32.mrb[0].mxu0
      %4200 = vmatprep.mubr.f32.mxu0 0.0
      %v4201 = vand.u32 %v368, 4294901760
      %4202 = vmatmul.mubr.f32.gmra.mrb[0].mxu0 %v4201
      %v4203 = vpop.f32.mrb[0].mxu0
      %v4204 = vadd.f32 %v3945, %v4203
      %v4205 = vpop.f32.mrb[0].mxu0
      %4206 = vmatprep.mubr.f32.mxu0 0.0
      %v4207 = vand.u32 %v371, 4294901760
      %4208 = vmatmul.mubr.f32.gmra.mrb[0].mxu0 %v4207
      %v4209 = vpop.f32.mrb[0].mxu0
      %v4210 = vadd.f32 %v3951, %v4209
      %v4211 = vpop.f32.mrb[0].mxu0
      %4212 = vmatprep.mubr.f32.mxu0 0.0
      %v4213 = vand.u32 %v374, 4294901760
      %4214 = vmatmul.mubr.f32.gmra.mrb[0].mxu0 %v4213
      %v4215 = vpop.f32.mrb[0].mxu0
      %v4216 = vadd.f32 %v3957, %v4215
      %v4217 = vpop.f32.mrb[0].mxu0
      %4218 = vmatprep.mubr.f32.mxu0 0.0
      %v4219 = vand.u32 %v377, 4294901760
      %4220 = vmatmul.mubr.f32.gmra.mrb[0].mxu0 %v4219
      %v4221 = vpop.f32.mrb[0].mxu0
      %v4222 = vadd.f32 %v3963, %v4221
      %v4223 = vpop.f32.mrb[0].mxu0
      %4224 = vmatprep.mubr.f32.mxu0 0.0
      %v4225 = vand.u32 %v380, 4294901760
      %4226 = vmatmul.mubr.f32.gmra.mrb[0].mxu0 %v4225
      %v4227 = vpop.f32.mrb[0].mxu0
      %v4228 = vadd.f32 %v3969, %v4227
      %v4229 = vpop.f32.mrb[0].mxu0
      %4230 = vmatprep.mubr.f32.mxu0 0.0
      %v4231 = vand.u32 %v383, 4294901760
      %4232 = vmatmul.mubr.f32.gmra.mrb[0].mxu0 %v4231
      %v4233 = vpop.f32.mrb[0].mxu0
      %v4234 = vadd.f32 %v3975, %v4233
      %v4235 = vpop.f32.mrb[0].mxu0
      %4236 = vmatprep.mubr.f32.mxu0 0.0
      %v4237 = vand.u32 %v386, 4294901760
      %4238 = vmatmul.mubr.f32.gmra.mrb[0].mxu0 %v4237
      %v4239 = vpop.f32.mrb[0].mxu0
      %v4240 = vadd.f32 %v3981, %v4239
      %v4241 = vpop.f32.mrb[0].mxu0
      %4242 = vmatprep.mubr.f32.mxu0 0.0
      %v4243 = vand.u32 %v389, 4294901760
      %4244 = vmatmul.mubr.f32.gmra.mrb[0].mxu0 %v4243
      %v4245 = vpop.f32.mrb[0].mxu0
      %v4246 = vadd.f32 %v3987, %v4245
      %v4247 = vpop.f32.mrb[0].mxu0
      %4248 = vmatprep.mubr.f32.mxu0 0.0
      %v4249 = vand.u32 %v392, 4294901760
      %4250 = vmatmul.mubr.f32.gmra.mrb[0].mxu0 %v4249
      %v4251 = vpop.f32.mrb[0].mxu0
      %v4252 = vadd.f32 %v3993, %v4251
      %v4253 = vpop.f32.mrb[0].mxu0
      %4254 = vmatprep.mubr.f32.mxu0 0.0
      %v4255 = vand.u32 %v395, 4294901760
      %4256 = vmatmul.mubr.f32.gmra.mrb[0].mxu0 %v4255
      %v4257 = vpop.f32.mrb[0].mxu0
      %v4258 = vadd.f32 %v3999, %v4257
      %v4259 = vpop.f32.mrb[0].mxu0
      %4260 = vmatprep.mubr.f32.mxu0 0.0
      %v4261 = vand.u32 %v398, 4294901760
      %4262 = vmatmul.mubr.f32.gmra.mrb[0].mxu0 %v4261
      %v4263 = vpop.f32.mrb[0].mxu0
      %v4264 = vadd.f32 %v4005, %v4263
      %v4265 = vpop.f32.mrb[0].mxu0
      %4266 = vmatprep.mubr.f32.mxu0 0.0
      %v4267 = vand.u32 %v401, 4294901760
      %4268 = vmatmul.mubr.f32.gmra.mrb[0].mxu0 %v4267
      %v4269 = vpop.f32.mrb[0].mxu0
      %v4270 = vadd.f32 %v4011, %v4269
      %v4271 = vpop.f32.mrb[0].mxu0
      %4272 = vmatprep.mubr.f32.mxu0 0.0
      %v4273 = vand.u32 %v404, 4294901760
      %4274 = vmatmul.mubr.f32.gmra.mrb[0].mxu0 %v4273
      %v4275 = vpop.f32.mrb[0].mxu0
      %v4276 = vadd.f32 %v4017, %v4275
      %v4277 = vpop.f32.mrb[0].mxu0
      %4278 = vmatprep.mubr.f32.mxu0 0.0
      %v4279 = vand.u32 %v407, 4294901760
      %4280 = vmatmul.mubr.f32.gmra.mrb[0].mxu0 %v4279
      %v4281 = vpop.f32.mrb[0].mxu0
      %v4282 = vadd.f32 %v4023, %v4281
      %v4283 = vpop.f32.mrb[0].mxu0
      %4284 = vmatprep.mubr.f32.mxu0 0.0
      %v4285 = vand.u32 %v410, 4294901760
      %4286 = vmatmul.mubr.f32.gmra.mrb[0].mxu0 %v4285
      %v4287 = vpop.f32.mrb[0].mxu0
      %v4288 = vadd.f32 %v4029, %v4287
      %v4289 = vpop.f32.mrb[0].mxu0
      %4290 = vmatprep.mubr.f32.mxu0 0.0
      %v4291 = vand.u32 %v413, 4294901760
      %4292 = vmatmul.mubr.f32.gmra.mrb[0].mxu0 %v4291
      %v4293 = vpop.f32.mrb[0].mxu0
      %v4294 = vadd.f32 %v4035, %v4293
      %v4295 = vpop.f32.mrb[0].mxu0
      %4296 = vmatprep.mubr.f32.mxu0 0.0
      %v4297 = vand.u32 %v416, 4294901760
      %4298 = vmatmul.mubr.f32.gmra.mrb[0].mxu0 %v4297
      %v4299 = vpop.f32.mrb[0].mxu0
      %v4300 = vadd.f32 %v4041, %v4299
      %v4301 = vpop.f32.mrb[0].mxu0
      %4302 = vmatprep.mubr.f32.mxu0 0.0
      %v4303 = vand.u32 %v419, 4294901760
      %4304 = vmatmul.mubr.f32.gmra.mrb[0].mxu0 %v4303
      %v4305 = vpop.f32.mrb[0].mxu0
      %v4306 = vadd.f32 %v4047, %v4305
      %v4307 = vpop.f32.mrb[0].mxu0
      %4308 = vmatprep.mubr.f32.mxu0 0.0
      %v4309 = vand.u32 %v422, 4294901760
      %4310 = vmatmul.mubr.f32.gmra.mrb[0].mxu0 %v4309
      %v4311 = vpop.f32.mrb[0].mxu0
      %v4312 = vadd.f32 %v4053, %v4311
      %v4313 = vpop.f32.mrb[0].mxu0
      %4314 = vmatprep.mubr.f32.mxu0 0.0
      %v4315 = vand.u32 %v425, 4294901760
      %4316 = vmatmul.mubr.f32.gmra.mrb[0].mxu0 %v4315
      %v4317 = vpop.f32.mrb[0].mxu0
      %v4318 = vadd.f32 %v4059, %v4317
      %v4319 = vpop.f32.mrb[0].mxu0
      %4320 = vmatprep.mubr.f32.mxu0 0.0
      %v4321 = vand.u32 %v428, 4294901760
      %4322 = vmatmul.mubr.f32.gmra.mrb[0].mxu0 %v4321
      %v4323 = vpop.f32.mrb[0].mxu0
      %v4324 = vadd.f32 %v4065, %v4323
      %v4325 = vpop.f32.mrb[0].mxu0
      %4326 = vmatprep.mubr.f32.mxu0 0.0
      %v4327 = vand.u32 %v431, 4294901760
      %4328 = vmatmul.mubr.f32.gmra.mrb[0].mxu0 %v4327
      %v4329 = vpop.f32.mrb[0].mxu0
      %v4330 = vadd.f32 %v4071, %v4329
      %v4331 = vpop.f32.mrb[0].mxu0
      %4332 = vmatprep.mubr.f32.mxu0 0.0
      %v4333 = vand.u32 %v434, 4294901760
      %4334 = vmatmul.mubr.f32.gmra.mrb[0].mxu0 %v4333
      %v4335 = vpop.f32.mrb[0].mxu0
      %v4336 = vadd.f32 %v4077, %v4335
      %v4337 = vpop.f32.mrb[0].mxu0
      %4338 = vmatprep.mubr.f32.mxu0 0.0
      %v4339 = vand.u32 %v437, 4294901760
      %4340 = vmatmul.mubr.f32.gmra.mrb[0].mxu0 %v4339
      %v4341 = vpop.f32.mrb[0].mxu0
      %v4342 = vadd.f32 %v4083, %v4341
      %v4343 = vpop.f32.mrb[0].mxu0
      %4344 = vmatprep.mubr.f32.mxu0 0.0
      %v4345 = vand.u32 %v440, 4294901760
      %4346 = vmatmul.mubr.f32.gmra.mrb[0].mxu0 %v4345
      %v4347 = vpop.f32.mrb[0].mxu0
      %v4348 = vadd.f32 %v4089, %v4347
      %v4349 = vpop.f32.mrb[0].mxu0
      %4350 = vmatprep.mubr.f32.mxu0 0.0
      %v4351 = vand.u32 %v443, 4294901760
      %4352 = vmatmul.mubr.f32.gmra.mrb[0].mxu0 %v4351
      %v4353 = vpop.f32.mrb[0].mxu0
      %v4354 = vadd.f32 %v4095, %v4353
      %v4355 = vpop.f32.mrb[0].mxu0
      %4356 = vmatprep.mubr.f32.mxu0 0.0
      %v4357 = vand.u32 %v446, 4294901760
      %4358 = vmatmul.mubr.f32.gmra.mrb[0].mxu0 %v4357
      %v4359 = vpop.f32.mrb[0].mxu0
      %v4360 = vadd.f32 %v4101, %v4359
      %v4361 = vpop.f32.mrb[0].mxu0
      %4362 = vmatprep.mubr.f32.mxu0 0.0
      %v4363 = vand.u32 %v449, 4294901760
      %4364 = vmatmul.mubr.f32.gmra.mrb[0].mxu0 %v4363
      %v4365 = vpop.f32.mrb[0].mxu0
      %v4366 = vadd.f32 %v4107, %v4365
      %v4367 = vpop.f32.mrb[0].mxu0
      %4368 = vmatprep.mubr.f32.mxu0 0.0
      %v4369 = vand.u32 %v452, 4294901760
      %4370 = vmatmul.mubr.f32.gmra.mrb[0].mxu0 %v4369
      %v4371 = vpop.f32.mrb[0].mxu0
      %v4372 = vadd.f32 %v4113, %v4371
      %v4373 = vpop.f32.mrb[0].mxu0
      %4374 = vdwg.mxu0
      %v4375 = vld [vmem:[%s5] sm:$0x1]
      %v4377 = vlaneseq
      %v4378 = vshrl.u32 %v4377, 7
      %v4379 = vsub.s32 0, %v4378
      %v4380 = vrot.slane %v4375, %v4379
      %v4382 = vmul.f32 %v4186, %v4380
      %v4383 = vmul.f32 %v4192, %v4380
      %v4384 = vmul.f32 %v4198, %v4380
      %v4385 = vmul.f32 %v4204, %v4380
      %v4386 = vmul.f32 %v4210, %v4380
      %v4387 = vmul.f32 %v4216, %v4380
      %v4388 = vmul.f32 %v4222, %v4380
      %v4389 = vmul.f32 %v4228, %v4380
      %v4390 = vmul.f32 %v4234, %v4380
      %v4391 = vmul.f32 %v4240, %v4380
      %v4392 = vmul.f32 %v4246, %v4380
      %v4393 = vmul.f32 %v4252, %v4380
      %v4394 = vmul.f32 %v4258, %v4380
      %v4395 = vmul.f32 %v4264, %v4380
      %v4396 = vmul.f32 %v4270, %v4380
      %v4397 = vmul.f32 %v4276, %v4380
      %v4398 = vmul.f32 %v4282, %v4380
      %v4399 = vmul.f32 %v4288, %v4380
      %v4400 = vmul.f32 %v4294, %v4380
      %v4401 = vmul.f32 %v4300, %v4380
      %v4402 = vmul.f32 %v4306, %v4380
      %v4403 = vmul.f32 %v4312, %v4380
      %v4404 = vmul.f32 %v4318, %v4380
      %v4405 = vmul.f32 %v4324, %v4380
      %v4406 = vmul.f32 %v4330, %v4380
      %v4407 = vmul.f32 %v4336, %v4380
      %v4408 = vmul.f32 %v4342, %v4380
      %v4409 = vmul.f32 %v4348, %v4380
      %v4410 = vmul.f32 %v4354, %v4380
      %v4411 = vmul.f32 %v4360, %v4380
      %v4412 = vmul.f32 %v4366, %v4380
      %v4413 = vmul.f32 %v4372, %v4380
      %v4414 = vld [vmem:[%s6] sm:$0x1]
      %v4416 = vlaneseq
      %v4417 = vshrl.u32 %v4416, 7
      %v4418 = vsub.s32 0, %v4417
      %v4419 = vrot.slane %v4414, %v4418
      %v4421 = vadd.f32 %v4382, %v4419
      %v4422 = vadd.f32 %v4383, %v4419
      %v4423 = vadd.f32 %v4384, %v4419
      %v4424 = vadd.f32 %v4385, %v4419
      %v4425 = vadd.f32 %v4386, %v4419
      %v4426 = vadd.f32 %v4387, %v4419
      %v4427 = vadd.f32 %v4388, %v4419
      %v4428 = vadd.f32 %v4389, %v4419
      %v4429 = vadd.f32 %v4390, %v4419
      %v4430 = vadd.f32 %v4391, %v4419
      %v4431 = vadd.f32 %v4392, %v4419
      %v4432 = vadd.f32 %v4393, %v4419
      %v4433 = vadd.f32 %v4394, %v4419
      %v4434 = vadd.f32 %v4395, %v4419
      %v4435 = vadd.f32 %v4396, %v4419
      %v4436 = vadd.f32 %v4397, %v4419
      %v4437 = vadd.f32 %v4398, %v4419
      %v4438 = vadd.f32 %v4399, %v4419
      %v4439 = vadd.f32 %v4400, %v4419
      %v4440 = vadd.f32 %v4401, %v4419
      %v4441 = vadd.f32 %v4402, %v4419
      %v4442 = vadd.f32 %v4403, %v4419
      %v4443 = vadd.f32 %v4404, %v4419
      %v4444 = vadd.f32 %v4405, %v4419
      %v4445 = vadd.f32 %v4406, %v4419
      %v4446 = vadd.f32 %v4407, %v4419
      %v4447 = vadd.f32 %v4408, %v4419
      %v4448 = vadd.f32 %v4409, %v4419
      %v4449 = vadd.f32 %v4410, %v4419
      %v4450 = vadd.f32 %v4411, %v4419
      %v4451 = vadd.f32 %v4412, %v4419
      %v4452 = vadd.f32 %v4413, %v4419
      %v4453 = vxor.u32 %v4421, 2147483648
      %v4454 = vxor.u32 %v4422, 2147483648
      %v4455 = vxor.u32 %v4423, 2147483648
      %v4456 = vxor.u32 %v4424, 2147483648
      %v4457 = vxor.u32 %v4425, 2147483648
      %v4458 = vxor.u32 %v4426, 2147483648
      %v4459 = vxor.u32 %v4427, 2147483648
      %v4460 = vxor.u32 %v4428, 2147483648
      %v4461 = vxor.u32 %v4429, 2147483648
      %v4462 = vxor.u32 %v4430, 2147483648
      %v4463 = vxor.u32 %v4431, 2147483648
      %v4464 = vxor.u32 %v4432, 2147483648
      %v4465 = vxor.u32 %v4433, 2147483648
      %v4466 = vxor.u32 %v4434, 2147483648
      %v4467 = vxor.u32 %v4435, 2147483648
      %v4468 = vxor.u32 %v4436, 2147483648
      %v4469 = vxor.u32 %v4437, 2147483648
      %v4470 = vxor.u32 %v4438, 2147483648
      %v4471 = vxor.u32 %v4439, 2147483648
      %v4472 = vxor.u32 %v4440, 2147483648
      %v4473 = vxor.u32 %v4441, 2147483648
      %v4474 = vxor.u32 %v4442, 2147483648
      %v4475 = vxor.u32 %v4443, 2147483648
      %v4476 = vxor.u32 %v4444, 2147483648
      %v4477 = vxor.u32 %v4445, 2147483648
      %v4478 = vxor.u32 %v4446, 2147483648
      %v4479 = vxor.u32 %v4447, 2147483648
      %v4480 = vxor.u32 %v4448, 2147483648
      %v4481 = vxor.u32 %v4449, 2147483648
      %v4482 = vxor.u32 %v4450, 2147483648
      %v4483 = vxor.u32 %v4451, 2147483648
      %v4484 = vxor.u32 %v4452, 2147483648
      %v4485 = vmul.f32 %v4453, 1.442695
      %v4486 = vpow.pop %v4485
      %v4487 = vmul.f32 %v4454, 1.442695
      %v4488 = vpow.pop %v4487
      %v4489 = vmul.f32 %v4455, 1.442695
      %v4490 = vpow.pop %v4489
      %v4491 = vmul.f32 %v4456, 1.442695
      %v4492 = vpow.pop %v4491
      %v4493 = vmul.f32 %v4457, 1.442695
      %v4494 = vpow.pop %v4493
      %v4495 = vmul.f32 %v4458, 1.442695
      %v4496 = vpow.pop %v4495
      %v4497 = vmul.f32 %v4459, 1.442695
      %v4498 = vpow.pop %v4497
      %v4499 = vmul.f32 %v4460, 1.442695
      %v4500 = vpow.pop %v4499
      %v4501 = vmul.f32 %v4461, 1.442695
      %v4502 = vpow.pop %v4501
      %v4503 = vmul.f32 %v4462, 1.442695
      %v4504 = vpow.pop %v4503
      %v4505 = vmul.f32 %v4463, 1.442695
      %v4506 = vpow.pop %v4505
      %v4507 = vmul.f32 %v4464, 1.442695
      %v4508 = vpow.pop %v4507
      %v4509 = vmul.f32 %v4465, 1.442695
      %v4510 = vpow.pop %v4509
      %v4511 = vmul.f32 %v4466, 1.442695
      %v4512 = vpow.pop %v4511
      %v4513 = vmul.f32 %v4467, 1.442695
      %v4514 = vpow.pop %v4513
      %v4515 = vmul.f32 %v4468, 1.442695
      %v4516 = vpow.pop %v4515
      %v4517 = vmul.f32 %v4469, 1.442695
      %v4518 = vpow.pop %v4517
      %v4519 = vmul.f32 %v4470, 1.442695
      %v4520 = vpow.pop %v4519
      %v4521 = vmul.f32 %v4471, 1.442695
      %v4522 = vpow.pop %v4521
      %v4523 = vmul.f32 %v4472, 1.442695
      %v4524 = vpow.pop %v4523
      %v4525 = vmul.f32 %v4473, 1.442695
      %v4526 = vpow.pop %v4525
      %v4527 = vmul.f32 %v4474, 1.442695
      %v4528 = vpow.pop %v4527
      %v4529 = vmul.f32 %v4475, 1.442695
      %v4530 = vpow.pop %v4529
      %v4531 = vmul.f32 %v4476, 1.442695
      %v4532 = vpow.pop %v4531
      %v4533 = vmul.f32 %v4477, 1.442695
      %v4534 = vpow.pop %v4533
      %v4535 = vmul.f32 %v4478, 1.442695
      %v4536 = vpow.pop %v4535
      %v4537 = vmul.f32 %v4479, 1.442695
      %v4538 = vpow.pop %v4537
      %v4539 = vmul.f32 %v4480, 1.442695
      %v4540 = vpow.pop %v4539
      %v4541 = vmul.f32 %v4481, 1.442695
      %v4542 = vpow.pop %v4541
      %v4543 = vmul.f32 %v4482, 1.442695
      %v4544 = vpow.pop %v4543
      %v4545 = vmul.f32 %v4483, 1.442695
      %v4546 = vpow.pop %v4545
      %v4547 = vmul.f32 %v4484, 1.442695
      %v4548 = vpow.pop %v4547
      %v4549 = vadd.f32 %v4486, 1.0
      %v4550 = vadd.f32 %v4488, 1.0
      %v4551 = vadd.f32 %v4490, 1.0
      %v4552 = vadd.f32 %v4492, 1.0
      %v4553 = vadd.f32 %v4494, 1.0
      %v4554 = vadd.f32 %v4496, 1.0
      %v4555 = vadd.f32 %v4498, 1.0
      %v4556 = vadd.f32 %v4500, 1.0
      %v4557 = vadd.f32 %v4502, 1.0
      %v4558 = vadd.f32 %v4504, 1.0
      %v4559 = vadd.f32 %v4506, 1.0
      %v4560 = vadd.f32 %v4508, 1.0
      %v4561 = vadd.f32 %v4510, 1.0
      %v4562 = vadd.f32 %v4512, 1.0
      %v4563 = vadd.f32 %v4514, 1.0
      %v4564 = vadd.f32 %v4516, 1.0
      %v4565 = vadd.f32 %v4518, 1.0
      %v4566 = vadd.f32 %v4520, 1.0
      %v4567 = vadd.f32 %v4522, 1.0
      %v4568 = vadd.f32 %v4524, 1.0
      %v4569 = vadd.f32 %v4526, 1.0
      %v4570 = vadd.f32 %v4528, 1.0
      %v4571 = vadd.f32 %v4530, 1.0
      %v4572 = vadd.f32 %v4532, 1.0
      %v4573 = vadd.f32 %v4534, 1.0
      %v4574 = vadd.f32 %v4536, 1.0
      %v4575 = vadd.f32 %v4538, 1.0
      %v4576 = vadd.f32 %v4540, 1.0
      %v4577 = vadd.f32 %v4542, 1.0
      %v4578 = vadd.f32 %v4544, 1.0
      %v4579 = vadd.f32 %v4546, 1.0
      %v4580 = vadd.f32 %v4548, 1.0
      %v4581 = vrcp.pop %v4549
      %v4582 = vmul.f32 1.0, %v4581
      %v4583 = vrcp.pop %v4550
      %v4584 = vmul.f32 1.0, %v4583
      %v4585 = vrcp.pop %v4551
      %v4586 = vmul.f32 1.0, %v4585
      %v4587 = vrcp.pop %v4552
      %v4588 = vmul.f32 1.0, %v4587
      %v4589 = vrcp.pop %v4553
      %v4590 = vmul.f32 1.0, %v4589
      %v4591 = vrcp.pop %v4554
      %v4592 = vmul.f32 1.0, %v4591
      %v4593 = vrcp.pop %v4555
      %v4594 = vmul.f32 1.0, %v4593
      %v4595 = vrcp.pop %v4556
      %v4596 = vmul.f32 1.0, %v4595
      %v4597 = vrcp.pop %v4557
      %v4598 = vmul.f32 1.0, %v4597
      %v4599 = vrcp.pop %v4558
      %v4600 = vmul.f32 1.0, %v4599
      %v4601 = vrcp.pop %v4559
      %v4602 = vmul.f32 1.0, %v4601
      %v4603 = vrcp.pop %v4560
      %v4604 = vmul.f32 1.0, %v4603
      %v4605 = vrcp.pop %v4561
      %v4606 = vmul.f32 1.0, %v4605
      %v4607 = vrcp.pop %v4562
      %v4608 = vmul.f32 1.0, %v4607
      %v4609 = vrcp.pop %v4563
      %v4610 = vmul.f32 1.0, %v4609
      %v4611 = vrcp.pop %v4564
      %v4612 = vmul.f32 1.0, %v4611
      %v4613 = vrcp.pop %v4565
      %v4614 = vmul.f32 1.0, %v4613
      %v4615 = vrcp.pop %v4566
      %v4616 = vmul.f32 1.0, %v4615
      %v4617 = vrcp.pop %v4567
      %v4618 = vmul.f32 1.0, %v4617
      %v4619 = vrcp.pop %v4568
      %v4620 = vmul.f32 1.0, %v4619
      %v4621 = vrcp.pop %v4569
      %v4622 = vmul.f32 1.0, %v4621
      %v4623 = vrcp.pop %v4570
      %v4624 = vmul.f32 1.0, %v4623
      %v4625 = vrcp.pop %v4571
      %v4626 = vmul.f32 1.0, %v4625
      %v4627 = vrcp.pop %v4572
      %v4628 = vmul.f32 1.0, %v4627
      %v4629 = vrcp.pop %v4573
      %v4630 = vmul.f32 1.0, %v4629
      %v4631 = vrcp.pop %v4574
      %v4632 = vmul.f32 1.0, %v4631
      %v4633 = vrcp.pop %v4575
      %v4634 = vmul.f32 1.0, %v4633
      %v4635 = vrcp.pop %v4576
      %v4636 = vmul.f32 1.0, %v4635
      %v4637 = vrcp.pop %v4577
      %v4638 = vmul.f32 1.0, %v4637
      %v4639 = vrcp.pop %v4578
      %v4640 = vmul.f32 1.0, %v4639
      %v4641 = vrcp.pop %v4579
      %v4642 = vmul.f32 1.0, %v4641
      %v4643 = vrcp.pop %v4580
      %v4644 = vmul.f32 1.0, %v4643
      %v4645 = vmul.f32 %v4421, %v4582
      %v4646 = vmul.f32 %v4422, %v4584
      %v4647 = vmul.f32 %v4423, %v4586
      %v4648 = vmul.f32 %v4424, %v4588
      %v4649 = vmul.f32 %v4425, %v4590
      %v4650 = vmul.f32 %v4426, %v4592
      %v4651 = vmul.f32 %v4427, %v4594
      %v4652 = vmul.f32 %v4428, %v4596
      %v4653 = vmul.f32 %v4429, %v4598
      %v4654 = vmul.f32 %v4430, %v4600
      %v4655 = vmul.f32 %v4431, %v4602
      %v4656 = vmul.f32 %v4432, %v4604
      %v4657 = vmul.f32 %v4433, %v4606
      %v4658 = vmul.f32 %v4434, %v4608
      %v4659 = vmul.f32 %v4435, %v4610
      %v4660 = vmul.f32 %v4436, %v4612
      %v4661 = vmul.f32 %v4437, %v4614
      %v4662 = vmul.f32 %v4438, %v4616
      %v4663 = vmul.f32 %v4439, %v4618
      %v4664 = vmul.f32 %v4440, %v4620
      %v4665 = vmul.f32 %v4441, %v4622
      %v4666 = vmul.f32 %v4442, %v4624
      %v4667 = vmul.f32 %v4443, %v4626
      %v4668 = vmul.f32 %v4444, %v4628
      %v4669 = vmul.f32 %v4445, %v4630
      %v4670 = vmul.f32 %v4446, %v4632
      %v4671 = vmul.f32 %v4447, %v4634
      %v4672 = vmul.f32 %v4448, %v4636
      %v4673 = vmul.f32 %v4449, %v4638
      %v4674 = vmul.f32 %v4450, %v4640
      %v4675 = vmul.f32 %v4451, %v4642
      %v4676 = vmul.f32 %v4452, %v4644
      %4677 = vst.msk [vmem:[%s321] sm:$0xff] %vm2548, %v4645
      %4678 = vst.msk [vmem:[%s321 + $0x8] sm:$0xff] %vm2548, %v4646
      %4679 = vst.msk [vmem:[%s321 + $0x10] sm:$0xff] %vm2548, %v4647
      %4680 = vst.msk [vmem:[%s321 + $0x18] sm:$0xff] %vm2548, %v4648
      %4681 = vst.msk [vmem:[%s321 + $0x20] sm:$0xff] %vm2548, %v4649
      %4682 = vst.msk [vmem:[%s321 + $0x28] sm:$0xff] %vm2548, %v4650
      %4683 = vst.msk [vmem:[%s321 + $0x30] sm:$0xff] %vm2548, %v4651
      %4684 = vst.msk [vmem:[%s321 + $0x38] sm:$0xff] %vm2548, %v4652
      %4685 = vst.msk [vmem:[%s321 + $0x40] sm:$0xff] %vm2548, %v4653
      %4686 = vst.msk [vmem:[%s321 + $0x48] sm:$0xff] %vm2548, %v4654
      %4687 = vst.msk [vmem:[%s321 + $0x50] sm:$0xff] %vm2548, %v4655
      %4688 = vst.msk [vmem:[%s321 + $0x58] sm:$0xff] %vm2548, %v4656
      %4689 = vst.msk [vmem:[%s321 + $0x60] sm:$0xff] %vm2548, %v4657
      %4690 = vst.msk [vmem:[%s321 + $0x68] sm:$0xff] %vm2548, %v4658
      %4691 = vst.msk [vmem:[%s321 + $0x70] sm:$0xff] %vm2548, %v4659
      %4692 = vst.msk [vmem:[%s321 + $0x78] sm:$0xff] %vm2548, %v4660
      %4693 = vst.msk [vmem:[%s321 + $0x80] sm:$0xff] %vm2548, %v4661
      %4694 = vst.msk [vmem:[%s321 + $0x88] sm:$0xff] %vm2548, %v4662
      %4695 = vst.msk [vmem:[%s321 + $0x90] sm:$0xff] %vm2548, %v4663
      %4696 = vst.msk [vmem:[%s321 + $0x98] sm:$0xff] %vm2548, %v4664
      %4697 = vst.msk [vmem:[%s321 + $0xa0] sm:$0xff] %vm2548, %v4665
      %4698 = vst.msk [vmem:[%s321 + $0xa8] sm:$0xff] %vm2548, %v4666
      %4699 = vst.msk [vmem:[%s321 + $0xb0] sm:$0xff] %vm2548, %v4667
      %4700 = vst.msk [vmem:[%s321 + $0xb8] sm:$0xff] %vm2548, %v4668
      %4701 = vst.msk [vmem:[%s321 + $0xc0] sm:$0xff] %vm2548, %v4669
      %4702 = vst.msk [vmem:[%s321 + $0xc8] sm:$0xff] %vm2548, %v4670
      %4703 = vst.msk [vmem:[%s321 + $0xd0] sm:$0xff] %vm2548, %v4671
      %4704 = vst.msk [vmem:[%s321 + $0xd8] sm:$0xff] %vm2548, %v4672
      %4705 = vst.msk [vmem:[%s321 + $0xe0] sm:$0xff] %vm2548, %v4673
      %4706 = vst.msk [vmem:[%s321 + $0xe8] sm:$0xff] %vm2548, %v4674
      %4707 = vst.msk [vmem:[%s321 + $0xf0] sm:$0xff] %vm2548, %v4675
      %4708 = vst.msk [vmem:[%s321 + $0xf8] sm:$0xff] %vm2548, %v4676
      %s4709 = smul.u32 32, %s20
      %p4710 = scmp.lt.s32.totalorder %s4709, 63
      %s4711 = scalar_select %p4710, %s4709, 63
      %s4712 = smul.addr %s4711, 8
      %s4713 = scalar_lea.vmem %s7, %s4712
      %s4714 = smul.u32 32, %s20
      %p4715 = scmp.lt.s32.totalorder %s4714, 63
      %s4716 = scalar_select %p4715, %s4714, 63
      %s4717 = smul.addr %s4716, 8
      %s4718 = scalar_lea.vmem %s8, %s4717
      // Predicated region
      $region49: #{tpu_custom_call.1} parent=47 // pred_check
        %p4719 = pneg %p190
      $region50: #{tpu_custom_call.1} parent=47 // pred_check_branch
        %4721 = sbr.rel (%p4719) target = $region52
      $region51: #{tpu_custom_call.1} parent=47 // pred_region
        %s4722 = smul.u32 32, %s20
      $region52: #{tpu_custom_call.1} parent=47 // pred_fallthru
        _
      // Predicated region
      $region53: #{tpu_custom_call.1} parent=47 // pred_check
        %p4723 = pneg %p216
      $region54: #{tpu_custom_call.1} parent=47 // pred_check_branch
        %4725 = sbr.rel (%p4723) target = $region56
      $region55: #{tpu_custom_call.1} parent=47 // pred_region
        %s4726 = smul.u32 32, %s20
      $region56: #{tpu_custom_call.1} parent=47 // pred_fallthru
        _
    $region48: #{tpu_custom_call.1} parent=5 // pred_fallthru
      _
    %p4727 = scmp.le.s32.totalorder 2, %s15
    // Predicated region
    $region57: #{tpu_custom_call.1} parent=5 // pred_check
      %p4728 = pneg %p4727
    $region58: #{tpu_custom_call.1} parent=5 // pred_check_branch
      %4730 = sbr.rel (%p4728) target = $region60
    $region59: #{tpu_custom_call.1} parent=5 // pred_region
      %s4731 = ssub.s32 %s15, 2
      // Predicated region
      $region61: #{tpu_custom_call.1} parent=59 // pred_check
        %p4732 = pneg %p196
      $region62: #{tpu_custom_call.1} parent=59 // pred_check_branch
        %4734 = sbr.rel (%p4732) target = $region64
      $region63: #{tpu_custom_call.1} parent=59 // pred_region
        %s4735 = smul.u32 32, %s21
        %p4736 = scmp.lt.s32.totalorder %s4735, 63
        %s4737 = scalar_select %p4736, %s4735, 63
        %s4738 = smul.addr %s4737, 8
        %s4739 = scalar_lea.vmem %s7, %s4738
      $region64: #{tpu_custom_call.1} parent=59 // pred_fallthru
        _
      // Predicated region
      $region65: #{tpu_custom_call.1} parent=59 // pred_check
        %p4740 = pneg %p222
      $region66: #{tpu_custom_call.1} parent=59 // pred_check_branch
        %4742 = sbr.rel (%p4740) target = $region68
      $region67: #{tpu_custom_call.1} parent=59 // pred_region
        %s4743 = smul.u32 32, %s21
        %p4744 = scmp.lt.s32.totalorder %s4743, 63
        %s4745 = scalar_select %p4744, %s4743, 63
        %s4746 = smul.addr %s4745, 8
        %s4747 = scalar_lea.vmem %s8, %s4746
      $region68: #{tpu_custom_call.1} parent=59 // pred_fallthru
        _
    $region60: #{tpu_custom_call.1} parent=5 // pred_fallthru
      _
  $region6: #{tpu_custom_call.1} parent=0 // loop_footer
    %s19 = sadd.s32 1, %s15
  $region7: #{tpu_custom_call.1} parent=0 // loop_footer_branch
    %14 = sbr.rel target = $region3
  $region8: #{tpu_custom_call.1} parent=0 // loop_exit
    _

</llo_original>
